<compile_context>
chip_gen: v7x
topology: tpu7x:2x2x1
jax: 0.10.0
libtpu: 0.0.40
codegen_flags: <defaults>
</compile_context>

<pallas_src>
import jax
import jax.numpy as jnp
import numpy as np
from jax import lax
from jax.experimental import pallas as pl
from jax.experimental.pallas import tpu as pltpu


def _round_up(x, m):
    return ((x + m - 1) // m) * m


def _pick_tile_n(cout_p):
    # Largest lane-aligned tile that evenly divides the padded Cout.
    for t in (512, 384, 256, 128):
        if cout_p % t == 0:
            return t
    return 128  # unreachable: cout_p is a multiple of 128


def _pick_b_blk(B, H, W, Cin_p, itemsize, budget_bytes=8 << 20):
    # Pack as much of the batch as possible into the MXU M dimension.  With the
    # whole batch in one block the fused weight is streamed from HBM exactly
    # once; only split the batch if the padded activation block gets large.
    per_b = (H + 2) * (W + 2) * Cin_p * itemsize
    if B * per_b <= budget_bytes:
        return B
    for bb in range(B - 1, 0, -1):
        if B % bb == 0 and bb * per_b <= budget_bytes and (bb * H * W) % 8 == 0:
            return bb
    return B


def _make_fused_conv_kernel(B_blk, H, W, Cin_p):
    M = B_blk * H * W

    def kernel(x_ref, w_ref, out_ref, acc_ref):
        # x_ref:   (B_blk, H+2, W+2, Cin_p)  halo+lane padded activations (bf16)
        # w_ref:   (Cin_p, TILE_N)           weight slab for tap k (bf16)
        # out_ref: (B_blk*H*W, TILE_N)       fused key||value output tile
        # acc_ref: (B_blk*H*W, TILE_N) f32   accumulator scratch
        k = pl.program_id(2)

        @pl.when(k == 0)
        def _():
            acc_ref[...] = jnp.zeros_like(acc_ref)

        # One 3x3 tap per K grid step.  Static 9-way dispatch: every branch
        # uses compile-time spatial shifts (robust lowering); only the branch
        # matching this step's tap executes.
        for tap in range(9):
            dy, dx = tap // 3, tap % 3

            @pl.when(k == tap)
            def _(dy=dy, dx=dx):
                win = x_ref[:, dy:dy + H, dx:dx + W, :]        # (B_blk, H, W, Cin_p)
                lhs = win.reshape(M, Cin_p)                    # batch packed into M
                acc_ref[...] += jnp.dot(lhs, w_ref[...],
                                        preferred_element_type=jnp.float32)

        @pl.when(k == pl.num_programs(2) - 1)
        def _():
            out_ref[...] = acc_ref[...].astype(out_ref.dtype)

    return kernel


def att_module_double(conv_out, w_key_oihw, w_val_oihw, *,
                      compute_dtype=jnp.bfloat16, tile_n=None):
    """Mirrors AttModule_Double.forward. conv_out: list of NCHW tensors."""
    conv5 = conv_out[-1]                                  # (B, Cin, H, W) NCHW
    out_dtype = conv5.dtype
    B, Cin, H, W = conv5.shape
    Ck = w_key_oihw.shape[0]                              # Cin // 4
    Cv = w_val_oihw.shape[0]                              # Cin
    Ct = Ck + Cv

    itm = jnp.dtype(compute_dtype).itemsize
    Cin_p = _round_up(Cin, 128)                           # lane-align contraction
    Cout_p = _round_up(Ct, 128)                           # lane-dense output slab
    if tile_n is None:
        tile_n = _pick_tile_n(Cout_p)
    assert Cout_p % tile_n == 0

    B_blk = _pick_b_blk(B, H, W, Cin_p, itm)
    if B % B_blk != 0:
        B_blk = B
    nb = B // B_blk
    M_blk = B_blk * H * W
    nn = Cout_p // tile_n
    nk = 9                                                # one 3x3 tap per K step

    # --- activation prep: NCHW -> NHWC, cast, halo + channel pad ------------
    x = jnp.transpose(conv5, (0, 2, 3, 1)).astype(compute_dtype)
    x = jnp.pad(x, ((0, 0), (1, 1), (1, 1), (0, Cin_p - Cin)))

    # --- weight prep: OIHW -> HWIO, fuse key||value on Cout, pad, ----------
    # --- K rows ordered (tap, cin) so block index k selects one tap slab ----
    wk = jnp.transpose(w_key_oihw, (2, 3, 1, 0))          # (3,3,Cin,Ck)
    wv = jnp.transpose(w_val_oihw, (2, 3, 1, 0))          # (3,3,Cin,Cv)
    w = jnp.concatenate([wk, wv], axis=-1)                # (3,3,Cin,Ct)
    w = jnp.pad(w, ((0, 0), (0, 0), (0, Cin_p - Cin), (0, Cout_p - Ct)))
    w2d = w.reshape(9 * Cin_p, Cout_p).astype(compute_dtype)

    kernel = _make_fused_conv_kernel(B_blk, H, W, Cin_p)

    # Advisory cost estimate for XLA scheduling.
    flops = int(2 * B * H * W * 9 * Cin * Ct)
    bytes_accessed = int(w2d.size * itm + x.size * itm + B * H * W * Cout_p * itm)

    # VMEM footprint of the tiled kernel (double-buffered inputs/outputs +
    # f32 accumulator); cap the limit at 48 MiB so it is safe on v7x (64 MiB/TC).
    vmem_est = (2 * B_blk * (H + 2) * (W + 2) * Cin_p * itm
                + 2 * Cin_p * tile_n * itm
                + 2 * M_blk * tile_n * itm
                + M_blk * tile_n * 4)
    vmem_limit = int(min(max(2 * vmem_est, 32 << 20), 48 << 20))

    out2d = pl.pallas_call(
        kernel,
        out_shape=jax.ShapeDtypeStruct((B * H * W, Cout_p), compute_dtype),
        grid_spec=pltpu.PrefetchScalarGridSpec(
            num_scalar_prefetch=0,
            grid=(nb, nn, nk),
            in_specs=[
                # Activation block: constant across (n, k) -> DMA'd once per
                # batch block and kept resident for the whole weight sweep.
                pl.BlockSpec((B_blk, H + 2, W + 2, Cin_p),
                             lambda b, n, k: (b, 0, 0, 0)),
                # Weight slab: one (Cin_p, TILE_N) tile per (tap, Cout-tile).
                pl.BlockSpec((Cin_p, tile_n), lambda b, n, k: (k, n)),
            ],
            out_specs=pl.BlockSpec((M_blk, tile_n), lambda b, n, k: (b, n)),
            scratch_shapes=[pltpu.VMEM((M_blk, tile_n), jnp.float32)],
        ),
        compiler_params=pltpu.CompilerParams(
            dimension_semantics=("parallel", "parallel", "arbitrary"),
            vmem_limit_bytes=vmem_limit,
        ),
        cost_estimate=pl.CostEstimate(flops=flops, transcendentals=0,
                                      bytes_accessed=bytes_accessed),
    )(x, w2d)

    # Split the fused slab back into key / value and return PyTorch NCHW layout.
    out = out2d.reshape(B, H, W, Cout_p)
    key = jnp.transpose(out[..., :Ck], (0, 3, 1, 2)).astype(out_dtype)
    val = jnp.transpose(out[..., Ck:Ct], (0, 3, 1, 2)).astype(out_dtype)
    return key, val


if __name__ == "__main__":
    # Small shapes consistent with the module (fc_dim divisible by 4).
    B, fc_dim, H, W = 2, 32, 8, 8

    k0 = jax.random.PRNGKey(0)
    k1, k2, k3 = jax.random.split(k0, 3)

    x = jax.random.normal(k1, (B, fc_dim, H, W), dtype=jnp.float32)                 # NCHW
    w_key = 0.05 * jax.random.normal(k2, (fc_dim // 4, fc_dim, 3, 3), jnp.float32)  # OIHW
    w_val = 0.05 * jax.random.normal(k3, (fc_dim, fc_dim, 3, 3), jnp.float32)       # OIHW

    conv_out = [x]  # module takes a list of feature maps and uses the last one

    key, val = att_module_double(conv_out, w_key, w_val)
    key, val = jax.block_until_ready((key, val))

    # Reference: XLA conv with the same bf16 operand precision, f32 accumulation
    # (same semantics as nn.Conv2d(k=3, s=1, p=1, bias=False)).
    x_nhwc_bf16 = jnp.transpose(x, (0, 2, 3, 1)).astype(jnp.bfloat16)

    def ref_conv(w_oihw):
        w_hwio = jnp.transpose(w_oihw, (2, 3, 1, 0)).astype(jnp.bfloat16)
        y = lax.conv_general_dilated(
            x_nhwc_bf16, w_hwio, (1, 1), "SAME",
            dimension_numbers=("NHWC", "HWIO", "NHWC"),
            preferred_element_type=jnp.float32)
        return jnp.transpose(y, (0, 3, 1, 2))

    ref_key = ref_conv(w_key)
    ref_val = ref_conv(w_val)

    assert key.shape == (B, fc_dim // 4, H, W)
    assert val.shape == (B, fc_dim, H, W)
    # Kernel stores its output in bf16 (halves writeback); allow bf16 rounding.
    np.testing.assert_allclose(np.asarray(key), np.asarray(ref_key), rtol=2e-2, atol=2e-2)
    np.testing.assert_allclose(np.asarray(val), np.asarray(ref_val), rtol=2e-2, atol=2e-2)

    print("KERNEL_OK")
</pallas_src>

<mosaic_0001>
module attributes {stable_mosaic.version = 11 : i64} {
  func.func @kernel(%arg0: i32, %arg1: i32, %arg2: i32, %arg3: memref<2x10x10x128xbf16, #tpu.memory_space<vmem>>, %arg4: memref<128x128xbf16, #tpu.memory_space<vmem>>, %arg5: memref<128x128xbf16, #tpu.memory_space<vmem>>, %arg6: memref<128x128xf32, #tpu.memory_space<vmem>>) attributes {dimension_semantics = [#tpu.dimension_semantics<parallel>, #tpu.dimension_semantics<parallel>, #tpu.dimension_semantics<arbitrary>], iteration_bounds = array<i64: 1, 1, 9>, scalar_prefetch = 0 : i64, scratch_operands = 1 : i64, tpu.core_type = #tpu.core_type<tc>, window_params = [{transform_indices = @transform_0, window_bounds = array<i64: 2, 10, 10, 128>}, {transform_indices = @transform_1, window_bounds = array<i64: 128, 128>}, {transform_indices = @transform_2, window_bounds = array<i64: 128, 128>}]} {
    %c0_i32 = arith.constant 0 : i32
    %0 = arith.cmpi eq, %arg2, %c0_i32 : i32
    %1 = arith.extui %0 : i1 to i32
    %c0_i32_0 = arith.constant 0 : i32
    %2 = arith.cmpi ne, %1, %c0_i32_0 : i32
    scf.if %2 {
      %cst = arith.constant 0.000000e+00 : f32
      %33 = vector.broadcast %cst : f32 to vector<128x128xf32>
      %c0 = arith.constant 0 : index
      %c0_13 = arith.constant 0 : index
      %34 = vector.load %arg6[%c0, %c0_13] : memref<128x128xf32, #tpu.memory_space<vmem>>, vector<128x128xf32>
      tpu.vector_store %arg6[%c0, %c0_13], %33 {strides = array<i32>} : memref<128x128xf32, #tpu.memory_space<vmem>>, vector<128x128xf32>,
    } else {
    }
    %c0_i32_1 = arith.constant 0 : i32
    %3 = arith.cmpi eq, %arg2, %c0_i32_1 : i32
    %4 = arith.extui %3 : i1 to i32
    %c0_i32_2 = arith.constant 0 : i32
    %5 = arith.cmpi ne, %4, %c0_i32_2 : i32
    scf.if %5 {
      %c0 = arith.constant 0 : index
      %c0_13 = arith.constant 0 : index
      %c0_14 = arith.constant 0 : index
      %c0_15 = arith.constant 0 : index
      %33 = vector.load %arg3[%c0, %c0_13, %c0_14, %c0_15] : memref<2x10x10x128xbf16, #tpu.memory_space<vmem>>, vector<2x8x8x128xbf16>
      %34 = vector.shape_cast %33 : vector<2x8x8x128xbf16> to vector<128x128xbf16>
      %c0_16 = arith.constant 0 : index
      %c0_17 = arith.constant 0 : index
      %35 = vector.load %arg6[%c0_16, %c0_17] : memref<128x128xf32, #tpu.memory_space<vmem>>, vector<128x128xf32>
      %c0_18 = arith.constant 0 : index
      %c0_19 = arith.constant 0 : index
      %36 = vector.load %arg4[%c0_18, %c0_19] : memref<128x128xbf16, #tpu.memory_space<vmem>>, vector<128x128xbf16>
      %cst = arith.constant dense<0.000000e+00> : vector<128x128xf32>
      %37 = tpu.matmul %34, %36, %cst {dimension_numbers = #tpu.dot_dimension_numbers<[1], [0], [0], [1], [0, 0, 1, 1], [], []>} : vector<128x128xbf16>, vector<128x128xbf16>, vector<128x128xf32> -> vector<128x128xf32>
      %38 = arith.addf %35, %37 : vector<128x128xf32>
      %c0_20 = arith.constant 0 : index
      %c0_21 = arith.constant 0 : index
      %39 = vector.load %arg6[%c0_20, %c0_21] : memref<128x128xf32, #tpu.memory_space<vmem>>, vector<128x128xf32>
      tpu.vector_store %arg6[%c0_20, %c0_21], %38 {strides = array<i32>} : memref<128x128xf32, #tpu.memory_space<vmem>>, vector<128x128xf32>,
    } else {
    }
    %c1_i32 = arith.constant 1 : i32
    %6 = arith.cmpi eq, %arg2, %c1_i32 : i32
    %7 = arith.extui %6 : i1 to i32
    %c0_i32_3 = arith.constant 0 : i32
    %8 = arith.cmpi ne, %7, %c0_i32_3 : i32
    scf.if %8 {
      %c0 = arith.constant 0 : index
      %c0_13 = arith.constant 0 : index
      %c1 = arith.constant 1 : index
      %c0_14 = arith.constant 0 : index
      %33 = vector.load %arg3[%c0, %c0_13, %c1, %c0_14] : memref<2x10x10x128xbf16, #tpu.memory_space<vmem>>, vector<2x8x8x128xbf16>
      %34 = vector.shape_cast %33 : vector<2x8x8x128xbf16> to vector<128x128xbf16>
      %c0_15 = arith.constant 0 : index
      %c0_16 = arith.constant 0 : index
      %35 = vector.load %arg6[%c0_15, %c0_16] : memref<128x128xf32, #tpu.memory_space<vmem>>, vector<128x128xf32>
      %c0_17 = arith.constant 0 : index
      %c0_18 = arith.constant 0 : index
      %36 = vector.load %arg4[%c0_17, %c0_18] : memref<128x128xbf16, #tpu.memory_space<vmem>>, vector<128x128xbf16>
      %cst = arith.constant dense<0.000000e+00> : vector<128x128xf32>
      %37 = tpu.matmul %34, %36, %cst {dimension_numbers = #tpu.dot_dimension_numbers<[1], [0], [0], [1], [0, 0, 1, 1], [], []>} : vector<128x128xbf16>, vector<128x128xbf16>, vector<128x128xf32> -> vector<128x128xf32>
      %38 = arith.addf %35, %37 : vector<128x128xf32>
      %c0_19 = arith.constant 0 : index
      %c0_20 = arith.constant 0 : index
      %39 = vector.load %arg6[%c0_19, %c0_20] : memref<128x128xf32, #tpu.memory_space<vmem>>, vector<128x128xf32>
      tpu.vector_store %arg6[%c0_19, %c0_20], %38 {strides = array<i32>} : memref<128x128xf32, #tpu.memory_space<vmem>>, vector<128x128xf32>,
    } else {
    }
    %c2_i32 = arith.constant 2 : i32
    %9 = arith.cmpi eq, %arg2, %c2_i32 : i32
    %10 = arith.extui %9 : i1 to i32
    %c0_i32_4 = arith.constant 0 : i32
    %11 = arith.cmpi ne, %10, %c0_i32_4 : i32
    scf.if %11 {
      %c0 = arith.constant 0 : index
      %c0_13 = arith.constant 0 : index
      %c2 = arith.constant 2 : index
      %c0_14 = arith.constant 0 : index
      %33 = vector.load %arg3[%c0, %c0_13, %c2, %c0_14] : memref<2x10x10x128xbf16, #tpu.memory_space<vmem>>, vector<2x8x8x128xbf16>
      %34 = vector.shape_cast %33 : vector<2x8x8x128xbf16> to vector<128x128xbf16>
      %c0_15 = arith.constant 0 : index
      %c0_16 = arith.constant 0 : index
      %35 = vector.load %arg6[%c0_15, %c0_16] : memref<128x128xf32, #tpu.memory_space<vmem>>, vector<128x128xf32>
      %c0_17 = arith.constant 0 : index
      %c0_18 = arith.constant 0 : index
      %36 = vector.load %arg4[%c0_17, %c0_18] : memref<128x128xbf16, #tpu.memory_space<vmem>>, vector<128x128xbf16>
      %cst = arith.constant dense<0.000000e+00> : vector<128x128xf32>
      %37 = tpu.matmul %34, %36, %cst {dimension_numbers = #tpu.dot_dimension_numbers<[1], [0], [0], [1], [0, 0, 1, 1], [], []>} : vector<128x128xbf16>, vector<128x128xbf16>, vector<128x128xf32> -> vector<128x128xf32>
      %38 = arith.addf %35, %37 : vector<128x128xf32>
      %c0_19 = arith.constant 0 : index
      %c0_20 = arith.constant 0 : index
      %39 = vector.load %arg6[%c0_19, %c0_20] : memref<128x128xf32, #tpu.memory_space<vmem>>, vector<128x128xf32>
      tpu.vector_store %arg6[%c0_19, %c0_20], %38 {strides = array<i32>} : memref<128x128xf32, #tpu.memory_space<vmem>>, vector<128x128xf32>,
    } else {
    }
    %c3_i32 = arith.constant 3 : i32
    %12 = arith.cmpi eq, %arg2, %c3_i32 : i32
    %13 = arith.extui %12 : i1 to i32
    %c0_i32_5 = arith.constant 0 : i32
    %14 = arith.cmpi ne, %13, %c0_i32_5 : i32
    scf.if %14 {
      %c0 = arith.constant 0 : index
      %c1 = arith.constant 1 : index
      %c0_13 = arith.constant 0 : index
      %c0_14 = arith.constant 0 : index
      %33 = vector.load %arg3[%c0, %c1, %c0_13, %c0_14] : memref<2x10x10x128xbf16, #tpu.memory_space<vmem>>, vector<2x8x8x128xbf16>
      %34 = vector.shape_cast %33 : vector<2x8x8x128xbf16> to vector<128x128xbf16>
      %c0_15 = arith.constant 0 : index
      %c0_16 = arith.constant 0 : index
      %35 = vector.load %arg6[%c0_15, %c0_16] : memref<128x128xf32, #tpu.memory_space<vmem>>, vector<128x128xf32>
      %c0_17 = arith.constant 0 : index
      %c0_18 = arith.constant 0 : index
      %36 = vector.load %arg4[%c0_17, %c0_18] : memref<128x128xbf16, #tpu.memory_space<vmem>>, vector<128x128xbf16>
      %cst = arith.constant dense<0.000000e+00> : vector<128x128xf32>
      %37 = tpu.matmul %34, %36, %cst {dimension_numbers = #tpu.dot_dimension_numbers<[1], [0], [0], [1], [0, 0, 1, 1], [], []>} : vector<128x128xbf16>, vector<128x128xbf16>, vector<128x128xf32> -> vector<128x128xf32>
      %38 = arith.addf %35, %37 : vector<128x128xf32>
      %c0_19 = arith.constant 0 : index
      %c0_20 = arith.constant 0 : index
      %39 = vector.load %arg6[%c0_19, %c0_20] : memref<128x128xf32, #tpu.memory_space<vmem>>, vector<128x128xf32>
      tpu.vector_store %arg6[%c0_19, %c0_20], %38 {strides = array<i32>} : memref<128x128xf32, #tpu.memory_space<vmem>>, vector<128x128xf32>,
    } else {
    }
    %c4_i32 = arith.constant 4 : i32
    %15 = arith.cmpi eq, %arg2, %c4_i32 : i32
    %16 = arith.extui %15 : i1 to i32
    %c0_i32_6 = arith.constant 0 : i32
    %17 = arith.cmpi ne, %16, %c0_i32_6 : i32
    scf.if %17 {
      %c0 = arith.constant 0 : index
      %c1 = arith.constant 1 : index
      %c1_13 = arith.constant 1 : index
      %c0_14 = arith.constant 0 : index
      %33 = vector.load %arg3[%c0, %c1, %c1_13, %c0_14] : memref<2x10x10x128xbf16, #tpu.memory_space<vmem>>, vector<2x8x8x128xbf16>
      %34 = vector.shape_cast %33 : vector<2x8x8x128xbf16> to vector<128x128xbf16>
      %c0_15 = arith.constant 0 : index
      %c0_16 = arith.constant 0 : index
      %35 = vector.load %arg6[%c0_15, %c0_16] : memref<128x128xf32, #tpu.memory_space<vmem>>, vector<128x128xf32>
      %c0_17 = arith.constant 0 : index
      %c0_18 = arith.constant 0 : index
      %36 = vector.load %arg4[%c0_17, %c0_18] : memref<128x128xbf16, #tpu.memory_space<vmem>>, vector<128x128xbf16>
      %cst = arith.constant dense<0.000000e+00> : vector<128x128xf32>
      %37 = tpu.matmul %34, %36, %cst {dimension_numbers = #tpu.dot_dimension_numbers<[1], [0], [0], [1], [0, 0, 1, 1], [], []>} : vector<128x128xbf16>, vector<128x128xbf16>, vector<128x128xf32> -> vector<128x128xf32>
      %38 = arith.addf %35, %37 : vector<128x128xf32>
      %c0_19 = arith.constant 0 : index
      %c0_20 = arith.constant 0 : index
      %39 = vector.load %arg6[%c0_19, %c0_20] : memref<128x128xf32, #tpu.memory_space<vmem>>, vector<128x128xf32>
      tpu.vector_store %arg6[%c0_19, %c0_20], %38 {strides = array<i32>} : memref<128x128xf32, #tpu.memory_space<vmem>>, vector<128x128xf32>,
    } else {
    }
    %c5_i32 = arith.constant 5 : i32
    %18 = arith.cmpi eq, %arg2, %c5_i32 : i32
    %19 = arith.extui %18 : i1 to i32
    %c0_i32_7 = arith.constant 0 : i32
    %20 = arith.cmpi ne, %19, %c0_i32_7 : i32
    scf.if %20 {
      %c0 = arith.constant 0 : index
      %c1 = arith.constant 1 : index
      %c2 = arith.constant 2 : index
      %c0_13 = arith.constant 0 : index
      %33 = vector.load %arg3[%c0, %c1, %c2, %c0_13] : memref<2x10x10x128xbf16, #tpu.memory_space<vmem>>, vector<2x8x8x128xbf16>
      %34 = vector.shape_cast %33 : vector<2x8x8x128xbf16> to vector<128x128xbf16>
      %c0_14 = arith.constant 0 : index
      %c0_15 = arith.constant 0 : index
      %35 = vector.load %arg6[%c0_14, %c0_15] : memref<128x128xf32, #tpu.memory_space<vmem>>, vector<128x128xf32>
      %c0_16 = arith.constant 0 : index
      %c0_17 = arith.constant 0 : index
      %36 = vector.load %arg4[%c0_16, %c0_17] : memref<128x128xbf16, #tpu.memory_space<vmem>>, vector<128x128xbf16>
      %cst = arith.constant dense<0.000000e+00> : vector<128x128xf32>
      %37 = tpu.matmul %34, %36, %cst {dimension_numbers = #tpu.dot_dimension_numbers<[1], [0], [0], [1], [0, 0, 1, 1], [], []>} : vector<128x128xbf16>, vector<128x128xbf16>, vector<128x128xf32> -> vector<128x128xf32>
      %38 = arith.addf %35, %37 : vector<128x128xf32>
      %c0_18 = arith.constant 0 : index
      %c0_19 = arith.constant 0 : index
      %39 = vector.load %arg6[%c0_18, %c0_19] : memref<128x128xf32, #tpu.memory_space<vmem>>, vector<128x128xf32>
      tpu.vector_store %arg6[%c0_18, %c0_19], %38 {strides = array<i32>} : memref<128x128xf32, #tpu.memory_space<vmem>>, vector<128x128xf32>,
    } else {
    }
    %c6_i32 = arith.constant 6 : i32
    %21 = arith.cmpi eq, %arg2, %c6_i32 : i32
    %22 = arith.extui %21 : i1 to i32
    %c0_i32_8 = arith.constant 0 : i32
    %23 = arith.cmpi ne, %22, %c0_i32_8 : i32
    scf.if %23 {
      %c0 = arith.constant 0 : index
      %c2 = arith.constant 2 : index
      %c0_13 = arith.constant 0 : index
      %c0_14 = arith.constant 0 : index
      %33 = vector.load %arg3[%c0, %c2, %c0_13, %c0_14] : memref<2x10x10x128xbf16, #tpu.memory_space<vmem>>, vector<2x8x8x128xbf16>
      %34 = vector.shape_cast %33 : vector<2x8x8x128xbf16> to vector<128x128xbf16>
      %c0_15 = arith.constant 0 : index
      %c0_16 = arith.constant 0 : index
      %35 = vector.load %arg6[%c0_15, %c0_16] : memref<128x128xf32, #tpu.memory_space<vmem>>, vector<128x128xf32>
      %c0_17 = arith.constant 0 : index
      %c0_18 = arith.constant 0 : index
      %36 = vector.load %arg4[%c0_17, %c0_18] : memref<128x128xbf16, #tpu.memory_space<vmem>>, vector<128x128xbf16>
      %cst = arith.constant dense<0.000000e+00> : vector<128x128xf32>
      %37 = tpu.matmul %34, %36, %cst {dimension_numbers = #tpu.dot_dimension_numbers<[1], [0], [0], [1], [0, 0, 1, 1], [], []>} : vector<128x128xbf16>, vector<128x128xbf16>, vector<128x128xf32> -> vector<128x128xf32>
      %38 = arith.addf %35, %37 : vector<128x128xf32>
      %c0_19 = arith.constant 0 : index
      %c0_20 = arith.constant 0 : index
      %39 = vector.load %arg6[%c0_19, %c0_20] : memref<128x128xf32, #tpu.memory_space<vmem>>, vector<128x128xf32>
      tpu.vector_store %arg6[%c0_19, %c0_20], %38 {strides = array<i32>} : memref<128x128xf32, #tpu.memory_space<vmem>>, vector<128x128xf32>,
    } else {
    }
    %c7_i32 = arith.constant 7 : i32
    %24 = arith.cmpi eq, %arg2, %c7_i32 : i32
    %25 = arith.extui %24 : i1 to i32
    %c0_i32_9 = arith.constant 0 : i32
    %26 = arith.cmpi ne, %25, %c0_i32_9 : i32
    scf.if %26 {
      %c0 = arith.constant 0 : index
      %c2 = arith.constant 2 : index
      %c1 = arith.constant 1 : index
      %c0_13 = arith.constant 0 : index
      %33 = vector.load %arg3[%c0, %c2, %c1, %c0_13] : memref<2x10x10x128xbf16, #tpu.memory_space<vmem>>, vector<2x8x8x128xbf16>
      %34 = vector.shape_cast %33 : vector<2x8x8x128xbf16> to vector<128x128xbf16>
      %c0_14 = arith.constant 0 : index
      %c0_15 = arith.constant 0 : index
      %35 = vector.load %arg6[%c0_14, %c0_15] : memref<128x128xf32, #tpu.memory_space<vmem>>, vector<128x128xf32>
      %c0_16 = arith.constant 0 : index
      %c0_17 = arith.constant 0 : index
      %36 = vector.load %arg4[%c0_16, %c0_17] : memref<128x128xbf16, #tpu.memory_space<vmem>>, vector<128x128xbf16>
      %cst = arith.constant dense<0.000000e+00> : vector<128x128xf32>
      %37 = tpu.matmul %34, %36, %cst {dimension_numbers = #tpu.dot_dimension_numbers<[1], [0], [0], [1], [0, 0, 1, 1], [], []>} : vector<128x128xbf16>, vector<128x128xbf16>, vector<128x128xf32> -> vector<128x128xf32>
      %38 = arith.addf %35, %37 : vector<128x128xf32>
      %c0_18 = arith.constant 0 : index
      %c0_19 = arith.constant 0 : index
      %39 = vector.load %arg6[%c0_18, %c0_19] : memref<128x128xf32, #tpu.memory_space<vmem>>, vector<128x128xf32>
      tpu.vector_store %arg6[%c0_18, %c0_19], %38 {strides = array<i32>} : memref<128x128xf32, #tpu.memory_space<vmem>>, vector<128x128xf32>,
    } else {
    }
    %c8_i32 = arith.constant 8 : i32
    %27 = arith.cmpi eq, %arg2, %c8_i32 : i32
    %28 = arith.extui %27 : i1 to i32
    %c0_i32_10 = arith.constant 0 : i32
    %29 = arith.cmpi ne, %28, %c0_i32_10 : i32
    scf.if %29 {
      %c0 = arith.constant 0 : index
      %c2 = arith.constant 2 : index
      %c2_13 = arith.constant 2 : index
      %c0_14 = arith.constant 0 : index
      %33 = vector.load %arg3[%c0, %c2, %c2_13, %c0_14] : memref<2x10x10x128xbf16, #tpu.memory_space<vmem>>, vector<2x8x8x128xbf16>
      %34 = vector.shape_cast %33 : vector<2x8x8x128xbf16> to vector<128x128xbf16>
      %c0_15 = arith.constant 0 : index
      %c0_16 = arith.constant 0 : index
      %35 = vector.load %arg6[%c0_15, %c0_16] : memref<128x128xf32, #tpu.memory_space<vmem>>, vector<128x128xf32>
      %c0_17 = arith.constant 0 : index
      %c0_18 = arith.constant 0 : index
      %36 = vector.load %arg4[%c0_17, %c0_18] : memref<128x128xbf16, #tpu.memory_space<vmem>>, vector<128x128xbf16>
      %cst = arith.constant dense<0.000000e+00> : vector<128x128xf32>
      %37 = tpu.matmul %34, %36, %cst {dimension_numbers = #tpu.dot_dimension_numbers<[1], [0], [0], [1], [0, 0, 1, 1], [], []>} : vector<128x128xbf16>, vector<128x128xbf16>, vector<128x128xf32> -> vector<128x128xf32>
      %38 = arith.addf %35, %37 : vector<128x128xf32>
      %c0_19 = arith.constant 0 : index
      %c0_20 = arith.constant 0 : index
      %39 = vector.load %arg6[%c0_19, %c0_20] : memref<128x128xf32, #tpu.memory_space<vmem>>, vector<128x128xf32>
      tpu.vector_store %arg6[%c0_19, %c0_20], %38 {strides = array<i32>} : memref<128x128xf32, #tpu.memory_space<vmem>>, vector<128x128xf32>,
    } else {
    }
    %c8_i32_11 = arith.constant 8 : i32
    %30 = arith.cmpi eq, %arg2, %c8_i32_11 : i32
    %31 = arith.extui %30 : i1 to i32
    %c0_i32_12 = arith.constant 0 : i32
    %32 = arith.cmpi ne, %31, %c0_i32_12 : i32
    scf.if %32 {
      %c0 = arith.constant 0 : index
      %c0_13 = arith.constant 0 : index
      %33 = vector.load %arg6[%c0, %c0_13] : memref<128x128xf32, #tpu.memory_space<vmem>>, vector<128x128xf32>
      %34 = arith.truncf %33 : vector<128x128xf32> to vector<128x128xbf16>
      %c0_14 = arith.constant 0 : index
      %c0_15 = arith.constant 0 : index
      %35 = vector.load %arg5[%c0_14, %c0_15] : memref<128x128xbf16, #tpu.memory_space<vmem>>, vector<128x128xbf16>
      tpu.vector_store %arg5[%c0_14, %c0_15], %34 {strides = array<i32>} : memref<128x128xbf16, #tpu.memory_space<vmem>>, vector<128x128xbf16>,
    } else {
    }
    return
  }
  func.func @transform_0(%arg0: i32, %arg1: i32, %arg2: i32) -> (i32, i32, i32, i32) {
    %c0_i32 = arith.constant 0 : i32
    %c0_i32_0 = arith.constant 0 : i32
    %c0_i32_1 = arith.constant 0 : i32
    %c0_i32_2 = arith.constant 0 : i32
    return %arg0, %c0_i32, %c0_i32_0, %c0_i32_1 : i32, i32, i32, i32
  }
  func.func @transform_1(%arg0: i32, %arg1: i32, %arg2: i32) -> (i32, i32) {
    %c0_i32 = arith.constant 0 : i32
    return %arg2, %arg1 : i32, i32
  }
  func.func @transform_2(%arg0: i32, %arg1: i32, %arg2: i32) -> (i32, i32) {
    %c0_i32 = arith.constant 0 : i32
    return %arg0, %arg1 : i32, i32
  }
}

</mosaic_0001>

<llo_original>
// kernel: tpu_custom_call.1
$region0: #{tpu_custom_call.1}
  #allocation0 [shape = 'u32[]', space=smem, size = 0x4, offset = 0x4, fixed_abs, tag = 'smem constant byte address 0x4 - core index']
  #allocation1 [shape = 'u32[144,128]{1,0:T(1,128)}', space=vmem, size = 0x12000, scoped, tag = 'internal scratch']
  #allocation2 [shape = 'f32[128,128]{1,0:T(8,128)}', space=vmem, size = 0x10000, scoped, tag = 'scratch operand']
  %s0 = inlined_call_operand.vmem [shape: bf16[2,10,10,128], index: 0, kind: input, shape index: {}]
  %s1 = inlined_call_operand.hbm [shape: bf16[1152,128], index: 1, kind: input, shape index: {}]
  %s2 = inlined_call_operand.hbm [shape: bf16[128,128], index: 2, kind: output, shape index: {}]
  %s3 = sld [smem:[#allocation0]]
  $region81: #{tpu_custom_call.1} parent=0
    _
  %s5 = ssub.s32 1, %s3
  %s6 = scalar_select 0, %s5, %s3
  $region1: #{tpu_custom_call.1} parent=0
    #allocation3 [shape = 'u8[65536]{0}', space=vmem, size = 0x10000, scoped, tag = 'input window, operand 1']
    #allocation4 [shape = 's32[2]{0}', space=sflag, size = 0x8, scoped, tag = 'scoped memory for tpu_custom_call.1']
    #allocation5 [shape = 's32[2]{0}', space=sflag, size = 0x8, scoped, tag = 'scoped memory for tpu_custom_call.1']
    #allocation6 [shape = 'u8[32768]{0}', space=vmem, size = 0x8000, scoped, tag = 'output window, operand 0, single buffered']
    %7 = vsyncpa [#allocation4], 0
    %s8 = scalar_lea.sflag [#allocation4], 1
    %9 = vsyncpa %s8, 0
    %10 = vsyncpa [#allocation5], 0
    loop: start=0, step=1, limit=11
    $region2: #{tpu_custom_call.1} parent=1 // loop_pre_header
      _
    $region3: #{tpu_custom_call.1} parent=1 // loop_header
      %s12 = sphi 0, %s16
      %p13 = scmp.ge.s32.totalorder %s12, 11
      %s19 = sphi 0, %s38
      %s20 = sphi 0, %s34
      %s21 = sphi 0, %s30
      %s22 = sphi 0, %s19
      %s23 = sphi 0, %s20
      %s24 = sphi 0, %s21
      %s25 = sphi 0, %s22
      %s26 = sphi 0, %s23
      %s27 = sphi 0, %s24
      %s41 = sphi 0, %s43
      %s44 = sphi 0, %s41
      %s45 = sphi 0, %s44
      %s61 = sphi 0, %s45
      %s69 = sphi 0, %s71
      %s72 = sphi 0, %s69
      %s73 = sphi 0, %s72
      %s89 = sphi 0, %s73
      %s97 = sphi 0, %s99
      %s100 = sphi 0, %s97
      %s101 = sphi 0, %s100
      %s117 = sphi 0, %s101
    $region4: #{tpu_custom_call.1} parent=1 // loop_header_branch
      %15 = sbr.rel (%p13) target = $region8
    $region5: #{tpu_custom_call.1} parent=1 // loop_body
      %s17 = ssub.s32 %s12, 1
      %s18 = ssub.s32 %s12, 2
      %s28 = sadd.s32 1, %s21
      %p29 = scmp.ge.s32.totalorder %s28, 9
      %s30 = scalar_select %p29, 0, %s28
      %s31 = sadd.s32 1, %s20
      %s32 = scalar_select %p29, %s31, %s20
      %p33 = scmp.ge.s32.totalorder %s32, 1
      %s34 = scalar_select %p33, 0, %s32
      %s35 = sadd.s32 1, %s19
      %s36 = scalar_select %p33, %s35, %s19
      %p37 = scmp.ge.s32.totalorder %s36, 1
      %s38 = scalar_select %p37, 0, %s36
      %s39 = ssub.s32 %s19, %s38
      %p40 = scmp.eq.s32.totalorder %s39, 0
      %s42 = sadd.s32 %s41, 1
      %s43 = scalar_select %p40, %s41, %s42
      %p46 = pneg %p40
      %p47 = scmp.eq.s32.totalorder %s12, 8
      %p48 = por %p46, %p47
      %p49 = scmp.ne.s32.totalorder %s41, %s44
      %p50 = scmp.eq.s32.totalorder %s12, 0
      %p51 = por %p49, %p50
      %p52 = scmp.ne.s32.totalorder %s41, %s44
      %p53 = scmp.eq.s32.totalorder %s17, 8
      %p54 = por %p52, %p53
      %p55 = scmp.ne.s32.totalorder %s44, %s45
      %p56 = scmp.eq.s32.totalorder %s17, 0
      %p57 = por %p55, %p56
      %p58 = scmp.ne.s32.totalorder %s44, %s45
      %p59 = scmp.eq.s32.totalorder %s18, 8
      %p60 = por %p58, %p59
      %p62 = scmp.ne.s32.totalorder %s45, %s61
      %p63 = scmp.eq.s32.totalorder %s18, 0
      %p64 = por %p62, %p63
      %s65 = ssub.s32 %s21, %s30
      %s66 = ssub.s32 %s20, %s34
      %s67 = sor.u32 %s65, %s66
      %p68 = scmp.eq.s32.totalorder %s67, 0
      %s70 = sadd.s32 %s69, 1
      %s71 = scalar_select %p68, %s69, %s70
      %p74 = pneg %p68
      %p75 = scmp.eq.s32.totalorder %s12, 8
      %p76 = por %p74, %p75
      %p77 = scmp.ne.s32.totalorder %s69, %s72
      %p78 = scmp.eq.s32.totalorder %s12, 0
      %p79 = por %p77, %p78
      %p80 = scmp.ne.s32.totalorder %s69, %s72
      %p81 = scmp.eq.s32.totalorder %s17, 8
      %p82 = por %p80, %p81
      %p83 = scmp.ne.s32.totalorder %s72, %s73
      %p84 = scmp.eq.s32.totalorder %s17, 0
      %p85 = por %p83, %p84
      %p86 = scmp.ne.s32.totalorder %s72, %s73
      %p87 = scmp.eq.s32.totalorder %s18, 8
      %p88 = por %p86, %p87
      %p90 = scmp.ne.s32.totalorder %s73, %s89
      %p91 = scmp.eq.s32.totalorder %s18, 0
      %p92 = por %p90, %p91
      %s93 = ssub.s32 %s19, %s38
      %s94 = ssub.s32 %s20, %s34
      %s95 = sor.u32 %s93, %s94
      %p96 = scmp.eq.s32.totalorder %s95, 0
      %s98 = sadd.s32 %s97, 1
      %s99 = scalar_select %p96, %s97, %s98
      %p102 = pneg %p96
      %p103 = scmp.eq.s32.totalorder %s12, 8
      %p104 = por %p102, %p103
      %p105 = scmp.ne.s32.totalorder %s97, %s100
      %p106 = scmp.eq.s32.totalorder %s12, 0
      %p107 = por %p105, %p106
      %p108 = scmp.ne.s32.totalorder %s97, %s100
      %p109 = scmp.eq.s32.totalorder %s17, 8
      %p110 = por %p108, %p109
      %p111 = scmp.ne.s32.totalorder %s100, %s101
      %p112 = scmp.eq.s32.totalorder %s17, 0
      %p113 = por %p111, %p112
      %p114 = scmp.ne.s32.totalorder %s100, %s101
      %p115 = scmp.eq.s32.totalorder %s18, 8
      %p116 = por %p114, %p115
      %p118 = scmp.ne.s32.totalorder %s101, %s117
      %p119 = scmp.eq.s32.totalorder %s18, 0
      %p120 = por %p118, %p119
      %p121 = scmp.le.s32.totalorder 1, %s12
      %p122 = scmp.lt.s32.totalorder %s12, 10
      %p123 = pnand %p121, %p122
      %p124 = pneg %p123
      // Predicated region
      $region9: #{tpu_custom_call.1} parent=5 // pred_check
        _
      $region10: #{tpu_custom_call.1} parent=5 // pred_check_branch
        %126 = sbr.rel (%p123) target = $region12
      $region11: #{tpu_custom_call.1} parent=5 // pred_region
        %s127 = ssub.s32 %s12, 1
        // Predicated region
        $region13: #{tpu_custom_call.1} parent=11 // pred_check
          %p128 = pneg %p57
        $region14: #{tpu_custom_call.1} parent=11 // pred_check_branch
          %130 = sbr.rel (%p128) target = $region16
        $region15: #{tpu_custom_call.1} parent=11 // pred_region
          %s131 = smul.u32 2, %s22
          %p132 = scmp.lt.s32.totalorder %s131, 1
          %s133 = scalar_select %p132, %s131, 1
          %s134 = smul.addr %s133, 20
          %s135 = smul.addr %s134, 4
          %s136 = scalar_lea.vmem %s0, %s135
          %s137 = smul.u32 2, %s22
        $region16: #{tpu_custom_call.1} parent=11 // pred_fallthru
          _
      $region12: #{tpu_custom_call.1} parent=5 // pred_fallthru
        _
      %p138 = scmp.lt.s32.totalorder %s12, 9
      // Predicated region
      $region17: #{tpu_custom_call.1} parent=5 // pred_check
        %p139 = pneg %p138
      $region18: #{tpu_custom_call.1} parent=5 // pred_check_branch
        %141 = sbr.rel (%p139) target = $region20
      $region19: #{tpu_custom_call.1} parent=5 // pred_region
        // Predicated region
        $region21: #{tpu_custom_call.1} parent=19 // pred_check
          %p142 = pneg %p79
        $region22: #{tpu_custom_call.1} parent=19 // pred_check_branch
          %144 = sbr.rel (%p142) target = $region24
        $region23: #{tpu_custom_call.1} parent=19 // pred_region
          %s145 = sand.u32 %s69, 1
          %s146 = scalar_lea.sflag [#allocation4], %s145
          %s147 = sand.u32 %s69, 1
          %s148 = smul.addr %s147, 64
          %s149 = scalar_lea.vmem [#allocation3], %s148
          %s150 = smul.u32 16, %s21
          %s152 = ssub.s32 1024, 1024
          %153 = vsyncadd %s146, %s152
          %s154 = sadd.s32 %s20, %s150
          %s155 = smul.addr %s154, 64
          %s156 = scalar_lea.hbm %s1, %s155
          %s157 = sshll.u32 %s149, 4
          %s158 = int_to_ptr.vmem [resolvable:$true] %s157
          %163 = dma.hbm_to_vmem [thread:$0]  %s156, 1024, %s158, %s146, 64, 64, 4
        $region24: #{tpu_custom_call.1} parent=19 // pred_fallthru
          _
      $region20: #{tpu_custom_call.1} parent=5 // pred_fallthru
        _
      %p164 = scmp.le.s32.totalorder 1, %s12
      %p165 = scmp.lt.s32.totalorder %s12, 10
      %p166 = pnand %p164, %p165
      %p167 = pneg %p166
      // Predicated region
      $region25: #{tpu_custom_call.1} parent=5 // pred_check
        _
      $region26: #{tpu_custom_call.1} parent=5 // pred_check_branch
        %169 = sbr.rel (%p166) target = $region28
      $region27: #{tpu_custom_call.1} parent=5 // pred_region
        %s170 = ssub.s32 %s12, 1
        %s171 = sand.u32 %s72, 1
        %s172 = scalar_lea.sflag [#allocation4], %s171
        %s173 = sand.u32 %s72, 1
        %s174 = smul.addr %s173, 64
        %s175 = scalar_lea.vmem [#allocation3], %s174
        // Predicated region
        $region29: #{tpu_custom_call.1} parent=27 // pred_check
          %p176 = pneg %p85
        $region30: #{tpu_custom_call.1} parent=27 // pred_check_branch
          %178 = sbr.rel (%p176) target = $region32
        $region31: #{tpu_custom_call.1} parent=27 // pred_region
          %179 = dma.done %s172, 1024
        $region32: #{tpu_custom_call.1} parent=27 // pred_fallthru
          _
        %s180 = smul.u32 2, %s22
        %p181 = scmp.lt.s32.totalorder %s180, 1
        %s182 = scalar_select %p181, %s180, 1
        %s183 = smul.addr %s182, 20
        %s184 = smul.addr %s183, 4
        %s185 = scalar_lea.vmem %s0, %s184
        %p186 = pneg %p57
        %p187 = pneg %p54
        %s188 = sand.u32 %s72, 1
        %s189 = scalar_lea.sflag [#allocation4], %s188
        %s190 = sand.u32 %s72, 1
        %s191 = smul.addr %s190, 64
        %s192 = scalar_lea.vmem [#allocation3], %s191
        %p193 = pneg %p85
        %p194 = pneg %p82
        %p195 = pneg %p113
        %p196 = pneg %p110
        %s197 = smul.u32 2, %s22
        %p198 = scmp.lt.s32.totalorder %s197, 1
        %s199 = scalar_select %p198, %s197, 1
        %s200 = smul.addr %s199, 20
        %s201 = smul.addr %s200, 4
        %s202 = scalar_lea.vmem %s0, %s201
        %s203 = smul.u32 2, %s22
        %s204 = smul.u32 16, %s24
        %s205 = smul.u32 16, %s22
        %p207 = scmp.eq.s32.totalorder %s24, 0
        // Predicated region
        $region33: #{tpu_custom_call.1} parent=27 // pred_check
          %p208 = pneg %p207
        $region34: #{tpu_custom_call.1} parent=27 // pred_check_branch
          %210 = sbr.rel (%p208) target = $region36
        $region35: #{tpu_custom_call.1} parent=27 // pred_region
          %211 = vst [vmem:[#allocation2] sm:$0xff] 0.0
          %212 = vst [vmem:[#allocation2 + $0x8] sm:$0xff] 0.0
          %213 = vst [vmem:[#allocation2 + $0x10] sm:$0xff] 0.0
          %214 = vst [vmem:[#allocation2 + $0x18] sm:$0xff] 0.0
          %215 = vst [vmem:[#allocation2 + $0x20] sm:$0xff] 0.0
          %216 = vst [vmem:[#allocation2 + $0x28] sm:$0xff] 0.0
          %217 = vst [vmem:[#allocation2 + $0x30] sm:$0xff] 0.0
          %218 = vst [vmem:[#allocation2 + $0x38] sm:$0xff] 0.0
          %219 = vst [vmem:[#allocation2 + $0x40] sm:$0xff] 0.0
          %220 = vst [vmem:[#allocation2 + $0x48] sm:$0xff] 0.0
          %221 = vst [vmem:[#allocation2 + $0x50] sm:$0xff] 0.0
          %222 = vst [vmem:[#allocation2 + $0x58] sm:$0xff] 0.0
          %223 = vst [vmem:[#allocation2 + $0x60] sm:$0xff] 0.0
          %224 = vst [vmem:[#allocation2 + $0x68] sm:$0xff] 0.0
          %225 = vst [vmem:[#allocation2 + $0x70] sm:$0xff] 0.0
          %226 = vst [vmem:[#allocation2 + $0x78] sm:$0xff] 0.0
          %v227 = vld [vmem:[%s202] sm:$0xf]
          %v228 = vld [vmem:[%s202 + $0x8] sm:$0xf]
          %v229 = vld [vmem:[%s202 + $0x10] sm:$0xf]
          %v230 = vld [vmem:[%s202 + $0x18] sm:$0xf]
          %v231 = vld [vmem:[%s202 + $0x20] sm:$0xf]
          %v232 = vld [vmem:[%s202 + $0x28] sm:$0xf]
          %v233 = vld [vmem:[%s202 + $0x30] sm:$0xf]
          %v234 = vld [vmem:[%s202 + $0x38] sm:$0xf]
          %v235 = vld [vmem:[%s202 + $0x50] sm:$0xf]
          %v236 = vld [vmem:[%s202 + $0x58] sm:$0xf]
          %v237 = vld [vmem:[%s202 + $0x60] sm:$0xf]
          %v238 = vld [vmem:[%s202 + $0x68] sm:$0xf]
          %v239 = vld [vmem:[%s202 + $0x70] sm:$0xf]
          %v240 = vld [vmem:[%s202 + $0x78] sm:$0xf]
          %v241 = vld [vmem:[%s202 + $0x80] sm:$0xf]
          %v242 = vld [vmem:[%s202 + $0x88] sm:$0xf]
          %v243 = vld [vmem:[#allocation2] sm:$0xff]
          %v244 = vld [vmem:[#allocation2 + $0x8] sm:$0xff]
          %v245 = vld [vmem:[#allocation2 + $0x10] sm:$0xff]
          %v246 = vld [vmem:[#allocation2 + $0x18] sm:$0xff]
          %v247 = vld [vmem:[#allocation2 + $0x20] sm:$0xff]
          %v248 = vld [vmem:[#allocation2 + $0x28] sm:$0xff]
          %v249 = vld [vmem:[#allocation2 + $0x30] sm:$0xff]
          %v250 = vld [vmem:[#allocation2 + $0x38] sm:$0xff]
          %v251 = vld [vmem:[#allocation2 + $0x40] sm:$0xff]
          %v252 = vld [vmem:[#allocation2 + $0x48] sm:$0xff]
          %v253 = vld [vmem:[#allocation2 + $0x50] sm:$0xff]
          %v254 = vld [vmem:[#allocation2 + $0x58] sm:$0xff]
          %v255 = vld [vmem:[#allocation2 + $0x60] sm:$0xff]
          %v256 = vld [vmem:[#allocation2 + $0x68] sm:$0xff]
          %v257 = vld [vmem:[#allocation2 + $0x70] sm:$0xff]
          %v258 = vld [vmem:[#allocation2 + $0x78] sm:$0xff]
          %v259 = vld [vmem:[%s175] sm:$0xf]
          %v260 = vld [vmem:[%s175 + $0x4] sm:$0xf]
          %v261 = vld [vmem:[%s175 + $0x8] sm:$0xf]
          %v262 = vld [vmem:[%s175 + $0xc] sm:$0xf]
          %v263 = vld [vmem:[%s175 + $0x10] sm:$0xf]
          %v264 = vld [vmem:[%s175 + $0x14] sm:$0xf]
          %v265 = vld [vmem:[%s175 + $0x18] sm:$0xf]
          %v266 = vld [vmem:[%s175 + $0x1c] sm:$0xf]
          %v267 = vld [vmem:[%s175 + $0x20] sm:$0xf]
          %v268 = vld [vmem:[%s175 + $0x24] sm:$0xf]
          %v269 = vld [vmem:[%s175 + $0x28] sm:$0xf]
          %v270 = vld [vmem:[%s175 + $0x2c] sm:$0xf]
          %v271 = vld [vmem:[%s175 + $0x30] sm:$0xf]
          %v272 = vld [vmem:[%s175 + $0x34] sm:$0xf]
          %v273 = vld [vmem:[%s175 + $0x38] sm:$0xf]
          %v274 = vld [vmem:[%s175 + $0x3c] sm:$0xf]
          %v291 = vunpack.c.l.b16 %v227
          %v292 = vunpack.c.l.b16 %v228
          %v293 = vunpack.c.l.b16 %v229
          %v294 = vunpack.c.l.b16 %v230
          %v295 = vunpack.c.l.b16 %v231
          %v296 = vunpack.c.l.b16 %v232
          %v297 = vunpack.c.l.b16 %v233
          %v298 = vunpack.c.l.b16 %v234
          %v299 = vunpack.c.l.b16 %v235
          %v300 = vunpack.c.l.b16 %v236
          %v301 = vunpack.c.l.b16 %v237
          %v302 = vunpack.c.l.b16 %v238
          %v303 = vunpack.c.l.b16 %v239
          %v304 = vunpack.c.l.b16 %v240
          %v305 = vunpack.c.l.b16 %v241
          %v306 = vunpack.c.l.b16 %v242
          %v307 = vpack.c.b16 %v292, %v291
          %v308 = vpack.c.b16 %v294, %v293
          %v309 = vpack.c.b16 %v296, %v295
          %v310 = vpack.c.b16 %v298, %v297
          %v311 = vpack.c.b16 %v300, %v299
          %v312 = vpack.c.b16 %v302, %v301
          %v313 = vpack.c.b16 %v304, %v303
          %v314 = vpack.c.b16 %v306, %v305
          %v339 = vunpack.c.l.b16 %v259
          %v340 = vunpack.c.l.b16 %v260
          %v341 = vunpack.c.l.b16 %v261
          %v342 = vunpack.c.l.b16 %v262
          %v343 = vunpack.c.l.b16 %v263
          %v344 = vunpack.c.l.b16 %v264
          %v345 = vunpack.c.l.b16 %v265
          %v346 = vunpack.c.l.b16 %v266
          %v347 = vunpack.c.l.b16 %v267
          %v348 = vunpack.c.l.b16 %v268
          %v349 = vunpack.c.l.b16 %v269
          %v350 = vunpack.c.l.b16 %v270
          %v351 = vunpack.c.l.b16 %v271
          %v352 = vunpack.c.l.b16 %v272
          %v353 = vunpack.c.l.b16 %v273
          %v354 = vunpack.c.l.b16 %v274
          %v355 = vpack.c.b16 %v340, %v339
          %v356 = vpack.c.b16 %v342, %v341
          %v357 = vpack.c.b16 %v344, %v343
          %v358 = vpack.c.b16 %v346, %v345
          %v359 = vpack.c.b16 %v348, %v347
          %v360 = vpack.c.b16 %v350, %v349
          %v361 = vpack.c.b16 %v352, %v351
          %v362 = vpack.c.b16 %v354, %v353
          %371 = vmatprep.subr.bf16.mxu0 0
          %372 = vmatpush1.bf16.msra.mxu0 %v355
          %373 = vmatprep.subr.bf16.mxu0 0
          %374 = vmatpush1.bf16.msra.mxu0 %v356
          %375 = vmatprep.subr.bf16.mxu0 0
          %376 = vmatpush1.bf16.msra.mxu0 %v357
          %377 = vmatprep.subr.bf16.mxu0 0
          %378 = vmatpush1.bf16.msra.mxu0 %v358
          %379 = vmatprep.subr.bf16.mxu0 0
          %380 = vmatpush1.bf16.msra.mxu0 %v359
          %381 = vmatprep.subr.bf16.mxu0 0
          %382 = vmatpush1.bf16.msra.mxu0 %v360
          %383 = vmatprep.subr.bf16.mxu0 0
          %384 = vmatpush1.bf16.msra.mxu0 %v361
          %385 = vmatprep.subr.bf16.mxu0 0
          %386 = vmatpush1.bf16.msra.mxu0 %v362
          %387 = vmatprep.subr.bf16.mxu0 0
          %388 = vmatpush1.bf16.msra.mxu0 0
          %389 = vmatprep.subr.bf16.mxu0 0
          %390 = vmatpush1.bf16.msra.mxu0 0
          %391 = vmatprep.subr.bf16.mxu0 0
          %392 = vmatpush1.bf16.msra.mxu0 0
          %393 = vmatprep.subr.bf16.mxu0 0
          %394 = vmatpush1.bf16.msra.mxu0 0
          %395 = vmatprep.subr.bf16.mxu0 0
          %396 = vmatpush1.bf16.msra.mxu0 0
          %397 = vmatprep.subr.bf16.mxu0 0
          %398 = vmatpush1.bf16.msra.mxu0 0
          %399 = vmatprep.subr.bf16.mxu0 0
          %400 = vmatpush1.bf16.msra.mxu0 0
          %401 = vmatprep.subr.bf16.mxu0 0
          %402 = vmatpush1.bf16.msra.mxu0 0
          %403 = vmatprep.mubr.bf16.mxu0 0
          %404 = vmatmul.mubr.bf16.gmra.mrb[0].mxu0 %v307
          %v405 = vpop.f32.mrb[0].mxu0
          %v406 = vadd.f32 0.0, %v405
          %v407 = vpop.f32.mrb[0].mxu0
          %v408 = vpop.f32.mrb[0].mxu0
          %v409 = vadd.f32 0.0, %v408
          %v410 = vpop.f32.mrb[0].mxu0
          %411 = vmatprep.mubr.bf16.mxu0 0
          %412 = vmatmul.mubr.bf16.gmra.mrb[0].mxu0 %v308
          %v413 = vpop.f32.mrb[0].mxu0
          %v414 = vadd.f32 0.0, %v413
          %v415 = vpop.f32.mrb[0].mxu0
          %v416 = vpop.f32.mrb[0].mxu0
          %v417 = vadd.f32 0.0, %v416
          %v418 = vpop.f32.mrb[0].mxu0
          %419 = vmatprep.mubr.bf16.mxu0 0
          %420 = vmatmul.mubr.bf16.gmra.mrb[0].mxu0 %v309
          %v421 = vpop.f32.mrb[0].mxu0
          %v422 = vadd.f32 0.0, %v421
          %v423 = vpop.f32.mrb[0].mxu0
          %v424 = vpop.f32.mrb[0].mxu0
          %v425 = vadd.f32 0.0, %v424
          %v426 = vpop.f32.mrb[0].mxu0
          %427 = vmatprep.mubr.bf16.mxu0 0
          %428 = vmatmul.mubr.bf16.gmra.mrb[0].mxu0 %v310
          %v429 = vpop.f32.mrb[0].mxu0
          %v430 = vadd.f32 0.0, %v429
          %v431 = vpop.f32.mrb[0].mxu0
          %v432 = vpop.f32.mrb[0].mxu0
          %v433 = vadd.f32 0.0, %v432
          %v434 = vpop.f32.mrb[0].mxu0
          %435 = vmatprep.mubr.bf16.mxu0 0
          %436 = vmatmul.mubr.bf16.gmra.mrb[0].mxu0 %v311
          %v437 = vpop.f32.mrb[0].mxu0
          %v438 = vadd.f32 0.0, %v437
          %v439 = vpop.f32.mrb[0].mxu0
          %v440 = vpop.f32.mrb[0].mxu0
          %v441 = vadd.f32 0.0, %v440
          %v442 = vpop.f32.mrb[0].mxu0
          %443 = vmatprep.mubr.bf16.mxu0 0
          %444 = vmatmul.mubr.bf16.gmra.mrb[0].mxu0 %v312
          %v445 = vpop.f32.mrb[0].mxu0
          %v446 = vadd.f32 0.0, %v445
          %v447 = vpop.f32.mrb[0].mxu0
          %v448 = vpop.f32.mrb[0].mxu0
          %v449 = vadd.f32 0.0, %v448
          %v450 = vpop.f32.mrb[0].mxu0
          %451 = vmatprep.mubr.bf16.mxu0 0
          %452 = vmatmul.mubr.bf16.gmra.mrb[0].mxu0 %v313
          %v453 = vpop.f32.mrb[0].mxu0
          %v454 = vadd.f32 0.0, %v453
          %v455 = vpop.f32.mrb[0].mxu0
          %v456 = vpop.f32.mrb[0].mxu0
          %v457 = vadd.f32 0.0, %v456
          %v458 = vpop.f32.mrb[0].mxu0
          %459 = vmatprep.mubr.bf16.mxu0 0
          %460 = vmatmul.mubr.bf16.gmra.mrb[0].mxu0 %v314
          %v461 = vpop.f32.mrb[0].mxu0
          %v462 = vadd.f32 0.0, %v461
          %v463 = vpop.f32.mrb[0].mxu0
          %v464 = vpop.f32.mrb[0].mxu0
          %v465 = vadd.f32 0.0, %v464
          %v466 = vpop.f32.mrb[0].mxu0
          %467 = vdwg.mxu0
          %v468 = vadd.f32 %v243, %v406
          %v469 = vadd.f32 %v244, %v409
          %v470 = vadd.f32 %v245, %v414
          %v471 = vadd.f32 %v246, %v417
          %v472 = vadd.f32 %v247, %v422
          %v473 = vadd.f32 %v248, %v425
          %v474 = vadd.f32 %v249, %v430
          %v475 = vadd.f32 %v250, %v433
          %v476 = vadd.f32 %v251, %v438
          %v477 = vadd.f32 %v252, %v441
          %v478 = vadd.f32 %v253, %v446
          %v479 = vadd.f32 %v254, %v449
          %v480 = vadd.f32 %v255, %v454
          %v481 = vadd.f32 %v256, %v457
          %v482 = vadd.f32 %v257, %v462
          %v483 = vadd.f32 %v258, %v465
          %484 = vst [vmem:[#allocation2] sm:$0xff] %v468
          %485 = vst [vmem:[#allocation2 + $0x8] sm:$0xff] %v469
          %486 = vst [vmem:[#allocation2 + $0x10] sm:$0xff] %v470
          %487 = vst [vmem:[#allocation2 + $0x18] sm:$0xff] %v471
          %488 = vst [vmem:[#allocation2 + $0x20] sm:$0xff] %v472
          %489 = vst [vmem:[#allocation2 + $0x28] sm:$0xff] %v473
          %490 = vst [vmem:[#allocation2 + $0x30] sm:$0xff] %v474
          %491 = vst [vmem:[#allocation2 + $0x38] sm:$0xff] %v475
          %492 = vst [vmem:[#allocation2 + $0x40] sm:$0xff] %v476
          %493 = vst [vmem:[#allocation2 + $0x48] sm:$0xff] %v477
          %494 = vst [vmem:[#allocation2 + $0x50] sm:$0xff] %v478
          %495 = vst [vmem:[#allocation2 + $0x58] sm:$0xff] %v479
          %496 = vst [vmem:[#allocation2 + $0x60] sm:$0xff] %v480
          %497 = vst [vmem:[#allocation2 + $0x68] sm:$0xff] %v481
          %498 = vst [vmem:[#allocation2 + $0x70] sm:$0xff] %v482
          %499 = vst [vmem:[#allocation2 + $0x78] sm:$0xff] %v483
        $region36: #{tpu_custom_call.1} parent=27 // pred_fallthru
          _
        %p500 = scmp.eq.s32.totalorder %s24, 1
        // Predicated region
        $region37: #{tpu_custom_call.1} parent=27 // pred_check
          %p501 = pneg %p500
        $region38: #{tpu_custom_call.1} parent=27 // pred_check_branch
          %503 = sbr.rel (%p501) target = $region40
        $region39: #{tpu_custom_call.1} parent=27 // pred_region
          %v504 = vld [vmem:[%s202] sm:$0xf]
          %v505 = vld [vmem:[%s202 + $0x4] sm:$0x1]
          %v506 = vld [vmem:[%s202 + $0x8] sm:$0xf]
          %v507 = vld [vmem:[%s202 + $0xc] sm:$0x1]
          %v508 = vld [vmem:[%s202 + $0x10] sm:$0xf]
          %v509 = vld [vmem:[%s202 + $0x14] sm:$0x1]
          %v510 = vld [vmem:[%s202 + $0x18] sm:$0xf]
          %v511 = vld [vmem:[%s202 + $0x1c] sm:$0x1]
          %v512 = vld [vmem:[%s202 + $0x20] sm:$0xf]
          %v513 = vld [vmem:[%s202 + $0x24] sm:$0x1]
          %v514 = vld [vmem:[%s202 + $0x28] sm:$0xf]
          %v515 = vld [vmem:[%s202 + $0x2c] sm:$0x1]
          %v516 = vld [vmem:[%s202 + $0x30] sm:$0xf]
          %v517 = vld [vmem:[%s202 + $0x34] sm:$0x1]
          %v518 = vld [vmem:[%s202 + $0x38] sm:$0xf]
          %v519 = vld [vmem:[%s202 + $0x3c] sm:$0x1]
          %v520 = vld [vmem:[%s202 + $0x50] sm:$0xf]
          %v521 = vld [vmem:[%s202 + $0x54] sm:$0x1]
          %v522 = vld [vmem:[%s202 + $0x58] sm:$0xf]
          %v523 = vld [vmem:[%s202 + $0x5c] sm:$0x1]
          %v524 = vld [vmem:[%s202 + $0x60] sm:$0xf]
          %v525 = vld [vmem:[%s202 + $0x64] sm:$0x1]
          %v526 = vld [vmem:[%s202 + $0x68] sm:$0xf]
          %v527 = vld [vmem:[%s202 + $0x6c] sm:$0x1]
          %v528 = vld [vmem:[%s202 + $0x70] sm:$0xf]
          %v529 = vld [vmem:[%s202 + $0x74] sm:$0x1]
          %v530 = vld [vmem:[%s202 + $0x78] sm:$0xf]
          %v531 = vld [vmem:[%s202 + $0x7c] sm:$0x1]
          %v532 = vld [vmem:[%s202 + $0x80] sm:$0xf]
          %v533 = vld [vmem:[%s202 + $0x84] sm:$0x1]
          %v534 = vld [vmem:[%s202 + $0x88] sm:$0xf]
          %v535 = vld [vmem:[%s202 + $0x8c] sm:$0x1]
          %vm536 = vsmask.f32 3328
          %vm537 = vsmask.f32 7440
          %vm538 = vmor %vm536, %vm537
          %v540 = vshrl.u32 %v504, 16
          %v542 = vrot.slane %v540, 4
          %v543 = vshll.u32 %v504, 16
          %v545 = vrot.slane %v543, 5
          %v546 = vor.u32 %v542, %v545
          %v547 = vrot.slane %v546, 4
          %v549 = vshll.u32 %v505, 16
          %v551 = vrot.slane %v549, 5
          %v552 = vsel %vm538, %v547, %v551
          %v554 = vshrl.u32 %v506, 16
          %v556 = vrot.slane %v554, 4
          %v557 = vshll.u32 %v506, 16
          %v559 = vrot.slane %v557, 5
          %v560 = vor.u32 %v556, %v559
          %v561 = vrot.slane %v560, 4
          %v563 = vshll.u32 %v507, 16
          %v565 = vrot.slane %v563, 5
          %v566 = vsel %vm538, %v561, %v565
          %v568 = vshrl.u32 %v508, 16
          %v570 = vrot.slane %v568, 4
          %v571 = vshll.u32 %v508, 16
          %v573 = vrot.slane %v571, 5
          %v574 = vor.u32 %v570, %v573
          %v575 = vrot.slane %v574, 4
          %v577 = vshll.u32 %v509, 16
          %v579 = vrot.slane %v577, 5
          %v580 = vsel %vm538, %v575, %v579
          %v582 = vshrl.u32 %v510, 16
          %v584 = vrot.slane %v582, 4
          %v585 = vshll.u32 %v510, 16
          %v587 = vrot.slane %v585, 5
          %v588 = vor.u32 %v584, %v587
          %v589 = vrot.slane %v588, 4
          %v591 = vshll.u32 %v511, 16
          %v593 = vrot.slane %v591, 5
          %v594 = vsel %vm538, %v589, %v593
          %v596 = vshrl.u32 %v512, 16
          %v598 = vrot.slane %v596, 4
          %v599 = vshll.u32 %v512, 16
          %v601 = vrot.slane %v599, 5
          %v602 = vor.u32 %v598, %v601
          %v603 = vrot.slane %v602, 4
          %v605 = vshll.u32 %v513, 16
          %v607 = vrot.slane %v605, 5
          %v608 = vsel %vm538, %v603, %v607
          %v610 = vshrl.u32 %v514, 16
          %v612 = vrot.slane %v610, 4
          %v613 = vshll.u32 %v514, 16
          %v615 = vrot.slane %v613, 5
          %v616 = vor.u32 %v612, %v615
          %v617 = vrot.slane %v616, 4
          %v619 = vshll.u32 %v515, 16
          %v621 = vrot.slane %v619, 5
          %v622 = vsel %vm538, %v617, %v621
          %v624 = vshrl.u32 %v516, 16
          %v626 = vrot.slane %v624, 4
          %v627 = vshll.u32 %v516, 16
          %v629 = vrot.slane %v627, 5
          %v630 = vor.u32 %v626, %v629
          %v631 = vrot.slane %v630, 4
          %v633 = vshll.u32 %v517, 16
          %v635 = vrot.slane %v633, 5
          %v636 = vsel %vm538, %v631, %v635
          %v638 = vshrl.u32 %v518, 16
          %v640 = vrot.slane %v638, 4
          %v641 = vshll.u32 %v518, 16
          %v643 = vrot.slane %v641, 5
          %v644 = vor.u32 %v640, %v643
          %v645 = vrot.slane %v644, 4
          %v647 = vshll.u32 %v519, 16
          %v649 = vrot.slane %v647, 5
          %v650 = vsel %vm538, %v645, %v649
          %v652 = vshrl.u32 %v520, 16
          %v654 = vrot.slane %v652, 4
          %v655 = vshll.u32 %v520, 16
          %v657 = vrot.slane %v655, 5
          %v658 = vor.u32 %v654, %v657
          %v659 = vrot.slane %v658, 4
          %v661 = vshll.u32 %v521, 16
          %v663 = vrot.slane %v661, 5
          %v664 = vsel %vm538, %v659, %v663
          %v666 = vshrl.u32 %v522, 16
          %v668 = vrot.slane %v666, 4
          %v669 = vshll.u32 %v522, 16
          %v671 = vrot.slane %v669, 5
          %v672 = vor.u32 %v668, %v671
          %v673 = vrot.slane %v672, 4
          %v675 = vshll.u32 %v523, 16
          %v677 = vrot.slane %v675, 5
          %v678 = vsel %vm538, %v673, %v677
          %v680 = vshrl.u32 %v524, 16
          %v682 = vrot.slane %v680, 4
          %v683 = vshll.u32 %v524, 16
          %v685 = vrot.slane %v683, 5
          %v686 = vor.u32 %v682, %v685
          %v687 = vrot.slane %v686, 4
          %v689 = vshll.u32 %v525, 16
          %v691 = vrot.slane %v689, 5
          %v692 = vsel %vm538, %v687, %v691
          %v694 = vshrl.u32 %v526, 16
          %v696 = vrot.slane %v694, 4
          %v697 = vshll.u32 %v526, 16
          %v699 = vrot.slane %v697, 5
          %v700 = vor.u32 %v696, %v699
          %v701 = vrot.slane %v700, 4
          %v703 = vshll.u32 %v527, 16
          %v705 = vrot.slane %v703, 5
          %v706 = vsel %vm538, %v701, %v705
          %v708 = vshrl.u32 %v528, 16
          %v710 = vrot.slane %v708, 4
          %v711 = vshll.u32 %v528, 16
          %v713 = vrot.slane %v711, 5
          %v714 = vor.u32 %v710, %v713
          %v715 = vrot.slane %v714, 4
          %v717 = vshll.u32 %v529, 16
          %v719 = vrot.slane %v717, 5
          %v720 = vsel %vm538, %v715, %v719
          %v722 = vshrl.u32 %v530, 16
          %v724 = vrot.slane %v722, 4
          %v725 = vshll.u32 %v530, 16
          %v727 = vrot.slane %v725, 5
          %v728 = vor.u32 %v724, %v727
          %v729 = vrot.slane %v728, 4
          %v731 = vshll.u32 %v531, 16
          %v733 = vrot.slane %v731, 5
          %v734 = vsel %vm538, %v729, %v733
          %v736 = vshrl.u32 %v532, 16
          %v738 = vrot.slane %v736, 4
          %v739 = vshll.u32 %v532, 16
          %v741 = vrot.slane %v739, 5
          %v742 = vor.u32 %v738, %v741
          %v743 = vrot.slane %v742, 4
          %v745 = vshll.u32 %v533, 16
          %v747 = vrot.slane %v745, 5
          %v748 = vsel %vm538, %v743, %v747
          %v750 = vshrl.u32 %v534, 16
          %v752 = vrot.slane %v750, 4
          %v753 = vshll.u32 %v534, 16
          %v755 = vrot.slane %v753, 5
          %v756 = vor.u32 %v752, %v755
          %v757 = vrot.slane %v756, 4
          %v759 = vshll.u32 %v535, 16
          %v761 = vrot.slane %v759, 5
          %v762 = vsel %vm538, %v757, %v761
          %v763 = vld [vmem:[#allocation2] sm:$0xff]
          %v764 = vld [vmem:[#allocation2 + $0x8] sm:$0xff]
          %v765 = vld [vmem:[#allocation2 + $0x10] sm:$0xff]
          %v766 = vld [vmem:[#allocation2 + $0x18] sm:$0xff]
          %v767 = vld [vmem:[#allocation2 + $0x20] sm:$0xff]
          %v768 = vld [vmem:[#allocation2 + $0x28] sm:$0xff]
          %v769 = vld [vmem:[#allocation2 + $0x30] sm:$0xff]
          %v770 = vld [vmem:[#allocation2 + $0x38] sm:$0xff]
          %v771 = vld [vmem:[#allocation2 + $0x40] sm:$0xff]
          %v772 = vld [vmem:[#allocation2 + $0x48] sm:$0xff]
          %v773 = vld [vmem:[#allocation2 + $0x50] sm:$0xff]
          %v774 = vld [vmem:[#allocation2 + $0x58] sm:$0xff]
          %v775 = vld [vmem:[#allocation2 + $0x60] sm:$0xff]
          %v776 = vld [vmem:[#allocation2 + $0x68] sm:$0xff]
          %v777 = vld [vmem:[#allocation2 + $0x70] sm:$0xff]
          %v778 = vld [vmem:[#allocation2 + $0x78] sm:$0xff]
          %v779 = vld [vmem:[%s175] sm:$0xf]
          %v780 = vld [vmem:[%s175 + $0x4] sm:$0xf]
          %v781 = vld [vmem:[%s175 + $0x8] sm:$0xf]
          %v782 = vld [vmem:[%s175 + $0xc] sm:$0xf]
          %v783 = vld [vmem:[%s175 + $0x10] sm:$0xf]
          %v784 = vld [vmem:[%s175 + $0x14] sm:$0xf]
          %v785 = vld [vmem:[%s175 + $0x18] sm:$0xf]
          %v786 = vld [vmem:[%s175 + $0x1c] sm:$0xf]
          %v787 = vld [vmem:[%s175 + $0x20] sm:$0xf]
          %v788 = vld [vmem:[%s175 + $0x24] sm:$0xf]
          %v789 = vld [vmem:[%s175 + $0x28] sm:$0xf]
          %v790 = vld [vmem:[%s175 + $0x2c] sm:$0xf]
          %v791 = vld [vmem:[%s175 + $0x30] sm:$0xf]
          %v792 = vld [vmem:[%s175 + $0x34] sm:$0xf]
          %v793 = vld [vmem:[%s175 + $0x38] sm:$0xf]
          %v794 = vld [vmem:[%s175 + $0x3c] sm:$0xf]
          %v795 = vunpack.c.l.b16 %v552
          %v796 = vunpack.c.l.b16 %v566
          %v797 = vunpack.c.l.b16 %v580
          %v798 = vunpack.c.l.b16 %v594
          %v799 = vunpack.c.l.b16 %v608
          %v800 = vunpack.c.l.b16 %v622
          %v801 = vunpack.c.l.b16 %v636
          %v802 = vunpack.c.l.b16 %v650
          %v803 = vunpack.c.l.b16 %v664
          %v804 = vunpack.c.l.b16 %v678
          %v805 = vunpack.c.l.b16 %v692
          %v806 = vunpack.c.l.b16 %v706
          %v807 = vunpack.c.l.b16 %v720
          %v808 = vunpack.c.l.b16 %v734
          %v809 = vunpack.c.l.b16 %v748
          %v810 = vunpack.c.l.b16 %v762
          %v811 = vpack.c.b16 %v796, %v795
          %v812 = vpack.c.b16 %v798, %v797
          %v813 = vpack.c.b16 %v800, %v799
          %v814 = vpack.c.b16 %v802, %v801
          %v815 = vpack.c.b16 %v804, %v803
          %v816 = vpack.c.b16 %v806, %v805
          %v817 = vpack.c.b16 %v808, %v807
          %v818 = vpack.c.b16 %v810, %v809
          %v843 = vunpack.c.l.b16 %v779
          %v844 = vunpack.c.l.b16 %v780
          %v845 = vunpack.c.l.b16 %v781
          %v846 = vunpack.c.l.b16 %v782
          %v847 = vunpack.c.l.b16 %v783
          %v848 = vunpack.c.l.b16 %v784
          %v849 = vunpack.c.l.b16 %v785
          %v850 = vunpack.c.l.b16 %v786
          %v851 = vunpack.c.l.b16 %v787
          %v852 = vunpack.c.l.b16 %v788
          %v853 = vunpack.c.l.b16 %v789
          %v854 = vunpack.c.l.b16 %v790
          %v855 = vunpack.c.l.b16 %v791
          %v856 = vunpack.c.l.b16 %v792
          %v857 = vunpack.c.l.b16 %v793
          %v858 = vunpack.c.l.b16 %v794
          %v859 = vpack.c.b16 %v844, %v843
          %v860 = vpack.c.b16 %v846, %v845
          %v861 = vpack.c.b16 %v848, %v847
          %v862 = vpack.c.b16 %v850, %v849
          %v863 = vpack.c.b16 %v852, %v851
          %v864 = vpack.c.b16 %v854, %v853
          %v865 = vpack.c.b16 %v856, %v855
          %v866 = vpack.c.b16 %v858, %v857
          %875 = vmatprep.subr.bf16.mxu0 0
          %876 = vmatpush1.bf16.msra.mxu0 %v859
          %877 = vmatprep.subr.bf16.mxu0 0
          %878 = vmatpush1.bf16.msra.mxu0 %v860
          %879 = vmatprep.subr.bf16.mxu0 0
          %880 = vmatpush1.bf16.msra.mxu0 %v861
          %881 = vmatprep.subr.bf16.mxu0 0
          %882 = vmatpush1.bf16.msra.mxu0 %v862
          %883 = vmatprep.subr.bf16.mxu0 0
          %884 = vmatpush1.bf16.msra.mxu0 %v863
          %885 = vmatprep.subr.bf16.mxu0 0
          %886 = vmatpush1.bf16.msra.mxu0 %v864
          %887 = vmatprep.subr.bf16.mxu0 0
          %888 = vmatpush1.bf16.msra.mxu0 %v865
          %889 = vmatprep.subr.bf16.mxu0 0
          %890 = vmatpush1.bf16.msra.mxu0 %v866
          %891 = vmatprep.subr.bf16.mxu0 0
          %892 = vmatpush1.bf16.msra.mxu0 0
          %893 = vmatprep.subr.bf16.mxu0 0
          %894 = vmatpush1.bf16.msra.mxu0 0
          %895 = vmatprep.subr.bf16.mxu0 0
          %896 = vmatpush1.bf16.msra.mxu0 0
          %897 = vmatprep.subr.bf16.mxu0 0
          %898 = vmatpush1.bf16.msra.mxu0 0
          %899 = vmatprep.subr.bf16.mxu0 0
          %900 = vmatpush1.bf16.msra.mxu0 0
          %901 = vmatprep.subr.bf16.mxu0 0
          %902 = vmatpush1.bf16.msra.mxu0 0
          %903 = vmatprep.subr.bf16.mxu0 0
          %904 = vmatpush1.bf16.msra.mxu0 0
          %905 = vmatprep.subr.bf16.mxu0 0
          %906 = vmatpush1.bf16.msra.mxu0 0
          %907 = vmatprep.mubr.bf16.mxu0 0
          %908 = vmatmul.mubr.bf16.gmra.mrb[0].mxu0 %v811
          %v909 = vpop.f32.mrb[0].mxu0
          %v910 = vadd.f32 0.0, %v909
          %v911 = vpop.f32.mrb[0].mxu0
          %v912 = vpop.f32.mrb[0].mxu0
          %v913 = vadd.f32 0.0, %v912
          %v914 = vpop.f32.mrb[0].mxu0
          %915 = vmatprep.mubr.bf16.mxu0 0
          %916 = vmatmul.mubr.bf16.gmra.mrb[0].mxu0 %v812
          %v917 = vpop.f32.mrb[0].mxu0
          %v918 = vadd.f32 0.0, %v917
          %v919 = vpop.f32.mrb[0].mxu0
          %v920 = vpop.f32.mrb[0].mxu0
          %v921 = vadd.f32 0.0, %v920
          %v922 = vpop.f32.mrb[0].mxu0
          %923 = vmatprep.mubr.bf16.mxu0 0
          %924 = vmatmul.mubr.bf16.gmra.mrb[0].mxu0 %v813
          %v925 = vpop.f32.mrb[0].mxu0
          %v926 = vadd.f32 0.0, %v925
          %v927 = vpop.f32.mrb[0].mxu0
          %v928 = vpop.f32.mrb[0].mxu0
          %v929 = vadd.f32 0.0, %v928
          %v930 = vpop.f32.mrb[0].mxu0
          %931 = vmatprep.mubr.bf16.mxu0 0
          %932 = vmatmul.mubr.bf16.gmra.mrb[0].mxu0 %v814
          %v933 = vpop.f32.mrb[0].mxu0
          %v934 = vadd.f32 0.0, %v933
          %v935 = vpop.f32.mrb[0].mxu0
          %v936 = vpop.f32.mrb[0].mxu0
          %v937 = vadd.f32 0.0, %v936
          %v938 = vpop.f32.mrb[0].mxu0
          %939 = vmatprep.mubr.bf16.mxu0 0
          %940 = vmatmul.mubr.bf16.gmra.mrb[0].mxu0 %v815
          %v941 = vpop.f32.mrb[0].mxu0
          %v942 = vadd.f32 0.0, %v941
          %v943 = vpop.f32.mrb[0].mxu0
          %v944 = vpop.f32.mrb[0].mxu0
          %v945 = vadd.f32 0.0, %v944
          %v946 = vpop.f32.mrb[0].mxu0
          %947 = vmatprep.mubr.bf16.mxu0 0
          %948 = vmatmul.mubr.bf16.gmra.mrb[0].mxu0 %v816
          %v949 = vpop.f32.mrb[0].mxu0
          %v950 = vadd.f32 0.0, %v949
          %v951 = vpop.f32.mrb[0].mxu0
          %v952 = vpop.f32.mrb[0].mxu0
          %v953 = vadd.f32 0.0, %v952
          %v954 = vpop.f32.mrb[0].mxu0
          %955 = vmatprep.mubr.bf16.mxu0 0
          %956 = vmatmul.mubr.bf16.gmra.mrb[0].mxu0 %v817
          %v957 = vpop.f32.mrb[0].mxu0
          %v958 = vadd.f32 0.0, %v957
          %v959 = vpop.f32.mrb[0].mxu0
          %v960 = vpop.f32.mrb[0].mxu0
          %v961 = vadd.f32 0.0, %v960
          %v962 = vpop.f32.mrb[0].mxu0
          %963 = vmatprep.mubr.bf16.mxu0 0
          %964 = vmatmul.mubr.bf16.gmra.mrb[0].mxu0 %v818
          %v965 = vpop.f32.mrb[0].mxu0
          %v966 = vadd.f32 0.0, %v965
          %v967 = vpop.f32.mrb[0].mxu0
          %v968 = vpop.f32.mrb[0].mxu0
          %v969 = vadd.f32 0.0, %v968
          %v970 = vpop.f32.mrb[0].mxu0
          %971 = vdwg.mxu0
          %v972 = vadd.f32 %v763, %v910
          %v973 = vadd.f32 %v764, %v913
          %v974 = vadd.f32 %v765, %v918
          %v975 = vadd.f32 %v766, %v921
          %v976 = vadd.f32 %v767, %v926
          %v977 = vadd.f32 %v768, %v929
          %v978 = vadd.f32 %v769, %v934
          %v979 = vadd.f32 %v770, %v937
          %v980 = vadd.f32 %v771, %v942
          %v981 = vadd.f32 %v772, %v945
          %v982 = vadd.f32 %v773, %v950
          %v983 = vadd.f32 %v774, %v953
          %v984 = vadd.f32 %v775, %v958
          %v985 = vadd.f32 %v776, %v961
          %v986 = vadd.f32 %v777, %v966
          %v987 = vadd.f32 %v778, %v969
          %988 = vst [vmem:[#allocation2] sm:$0xff] %v972
          %989 = vst [vmem:[#allocation2 + $0x8] sm:$0xff] %v973
          %990 = vst [vmem:[#allocation2 + $0x10] sm:$0xff] %v974
          %991 = vst [vmem:[#allocation2 + $0x18] sm:$0xff] %v975
          %992 = vst [vmem:[#allocation2 + $0x20] sm:$0xff] %v976
          %993 = vst [vmem:[#allocation2 + $0x28] sm:$0xff] %v977
          %994 = vst [vmem:[#allocation2 + $0x30] sm:$0xff] %v978
          %995 = vst [vmem:[#allocation2 + $0x38] sm:$0xff] %v979
          %996 = vst [vmem:[#allocation2 + $0x40] sm:$0xff] %v980
          %997 = vst [vmem:[#allocation2 + $0x48] sm:$0xff] %v981
          %998 = vst [vmem:[#allocation2 + $0x50] sm:$0xff] %v982
          %999 = vst [vmem:[#allocation2 + $0x58] sm:$0xff] %v983
          %1000 = vst [vmem:[#allocation2 + $0x60] sm:$0xff] %v984
          %1001 = vst [vmem:[#allocation2 + $0x68] sm:$0xff] %v985
          %1002 = vst [vmem:[#allocation2 + $0x70] sm:$0xff] %v986
          %1003 = vst [vmem:[#allocation2 + $0x78] sm:$0xff] %v987
        $region40: #{tpu_custom_call.1} parent=27 // pred_fallthru
          _
        %p1004 = scmp.eq.s32.totalorder %s24, 2
        // Predicated region
        $region41: #{tpu_custom_call.1} parent=27 // pred_check
          %p1005 = pneg %p1004
        $region42: #{tpu_custom_call.1} parent=27 // pred_check_branch
          %1007 = sbr.rel (%p1005) target = $region44
        $region43: #{tpu_custom_call.1} parent=27 // pred_region
          %v1008 = vld [vmem:[%s202] sm:$0xe]
          %v1009 = vld [vmem:[%s202 + $0x4] sm:$0x1]
          %v1010 = vld [vmem:[%s202 + $0x8] sm:$0xe]
          %v1011 = vld [vmem:[%s202 + $0xc] sm:$0x1]
          %v1012 = vld [vmem:[%s202 + $0x10] sm:$0xe]
          %v1013 = vld [vmem:[%s202 + $0x14] sm:$0x1]
          %v1014 = vld [vmem:[%s202 + $0x18] sm:$0xe]
          %v1015 = vld [vmem:[%s202 + $0x1c] sm:$0x1]
          %v1016 = vld [vmem:[%s202 + $0x20] sm:$0xe]
          %v1017 = vld [vmem:[%s202 + $0x24] sm:$0x1]
          %v1018 = vld [vmem:[%s202 + $0x28] sm:$0xe]
          %v1019 = vld [vmem:[%s202 + $0x2c] sm:$0x1]
          %v1020 = vld [vmem:[%s202 + $0x30] sm:$0xe]
          %v1021 = vld [vmem:[%s202 + $0x34] sm:$0x1]
          %v1022 = vld [vmem:[%s202 + $0x38] sm:$0xe]
          %v1023 = vld [vmem:[%s202 + $0x3c] sm:$0x1]
          %v1024 = vld [vmem:[%s202 + $0x50] sm:$0xe]
          %v1025 = vld [vmem:[%s202 + $0x54] sm:$0x1]
          %v1026 = vld [vmem:[%s202 + $0x58] sm:$0xe]
          %v1027 = vld [vmem:[%s202 + $0x5c] sm:$0x1]
          %v1028 = vld [vmem:[%s202 + $0x60] sm:$0xe]
          %v1029 = vld [vmem:[%s202 + $0x64] sm:$0x1]
          %v1030 = vld [vmem:[%s202 + $0x68] sm:$0xe]
          %v1031 = vld [vmem:[%s202 + $0x6c] sm:$0x1]
          %v1032 = vld [vmem:[%s202 + $0x70] sm:$0xe]
          %v1033 = vld [vmem:[%s202 + $0x74] sm:$0x1]
          %v1034 = vld [vmem:[%s202 + $0x78] sm:$0xe]
          %v1035 = vld [vmem:[%s202 + $0x7c] sm:$0x1]
          %v1036 = vld [vmem:[%s202 + $0x80] sm:$0xe]
          %v1037 = vld [vmem:[%s202 + $0x84] sm:$0x1]
          %v1038 = vld [vmem:[%s202 + $0x88] sm:$0xe]
          %v1039 = vld [vmem:[%s202 + $0x8c] sm:$0x1]
          %vm1072 = vcmask 1042432
          %vm1073 = vcmask 1046532
          %vm1074 = vmor %vm1072, %vm1073
          %v1075 = vrot.slane %v1008, 5
          %v1076 = vrot.slane %v1075, 4
          %v1077 = vrot.slane %v1009, 5
          %v1078 = vsel %vm1074, %v1076, %v1077
          %v1079 = vrot.slane %v1010, 5
          %v1080 = vrot.slane %v1079, 4
          %v1081 = vrot.slane %v1011, 5
          %v1082 = vsel %vm1074, %v1080, %v1081
          %v1083 = vrot.slane %v1012, 5
          %v1084 = vrot.slane %v1083, 4
          %v1085 = vrot.slane %v1013, 5
          %v1086 = vsel %vm1074, %v1084, %v1085
          %v1087 = vrot.slane %v1014, 5
          %v1088 = vrot.slane %v1087, 4
          %v1089 = vrot.slane %v1015, 5
          %v1090 = vsel %vm1074, %v1088, %v1089
          %v1091 = vrot.slane %v1016, 5
          %v1092 = vrot.slane %v1091, 4
          %v1093 = vrot.slane %v1017, 5
          %v1094 = vsel %vm1074, %v1092, %v1093
          %v1095 = vrot.slane %v1018, 5
          %v1096 = vrot.slane %v1095, 4
          %v1097 = vrot.slane %v1019, 5
          %v1098 = vsel %vm1074, %v1096, %v1097
          %v1099 = vrot.slane %v1020, 5
          %v1100 = vrot.slane %v1099, 4
          %v1101 = vrot.slane %v1021, 5
          %v1102 = vsel %vm1074, %v1100, %v1101
          %v1103 = vrot.slane %v1022, 5
          %v1104 = vrot.slane %v1103, 4
          %v1105 = vrot.slane %v1023, 5
          %v1106 = vsel %vm1074, %v1104, %v1105
          %v1107 = vrot.slane %v1024, 5
          %v1108 = vrot.slane %v1107, 4
          %v1109 = vrot.slane %v1025, 5
          %v1110 = vsel %vm1074, %v1108, %v1109
          %v1111 = vrot.slane %v1026, 5
          %v1112 = vrot.slane %v1111, 4
          %v1113 = vrot.slane %v1027, 5
          %v1114 = vsel %vm1074, %v1112, %v1113
          %v1115 = vrot.slane %v1028, 5
          %v1116 = vrot.slane %v1115, 4
          %v1117 = vrot.slane %v1029, 5
          %v1118 = vsel %vm1074, %v1116, %v1117
          %v1119 = vrot.slane %v1030, 5
          %v1120 = vrot.slane %v1119, 4
          %v1121 = vrot.slane %v1031, 5
          %v1122 = vsel %vm1074, %v1120, %v1121
          %v1123 = vrot.slane %v1032, 5
          %v1124 = vrot.slane %v1123, 4
          %v1125 = vrot.slane %v1033, 5
          %v1126 = vsel %vm1074, %v1124, %v1125
          %v1127 = vrot.slane %v1034, 5
          %v1128 = vrot.slane %v1127, 4
          %v1129 = vrot.slane %v1035, 5
          %v1130 = vsel %vm1074, %v1128, %v1129
          %v1131 = vrot.slane %v1036, 5
          %v1132 = vrot.slane %v1131, 4
          %v1133 = vrot.slane %v1037, 5
          %v1134 = vsel %vm1074, %v1132, %v1133
          %v1135 = vrot.slane %v1038, 5
          %v1136 = vrot.slane %v1135, 4
          %v1137 = vrot.slane %v1039, 5
          %v1138 = vsel %vm1074, %v1136, %v1137
          %v1139 = vld [vmem:[#allocation2] sm:$0xff]
          %v1140 = vld [vmem:[#allocation2 + $0x8] sm:$0xff]
          %v1141 = vld [vmem:[#allocation2 + $0x10] sm:$0xff]
          %v1142 = vld [vmem:[#allocation2 + $0x18] sm:$0xff]
          %v1143 = vld [vmem:[#allocation2 + $0x20] sm:$0xff]
          %v1144 = vld [vmem:[#allocation2 + $0x28] sm:$0xff]
          %v1145 = vld [vmem:[#allocation2 + $0x30] sm:$0xff]
          %v1146 = vld [vmem:[#allocation2 + $0x38] sm:$0xff]
          %v1147 = vld [vmem:[#allocation2 + $0x40] sm:$0xff]
          %v1148 = vld [vmem:[#allocation2 + $0x48] sm:$0xff]
          %v1149 = vld [vmem:[#allocation2 + $0x50] sm:$0xff]
          %v1150 = vld [vmem:[#allocation2 + $0x58] sm:$0xff]
          %v1151 = vld [vmem:[#allocation2 + $0x60] sm:$0xff]
          %v1152 = vld [vmem:[#allocation2 + $0x68] sm:$0xff]
          %v1153 = vld [vmem:[#allocation2 + $0x70] sm:$0xff]
          %v1154 = vld [vmem:[#allocation2 + $0x78] sm:$0xff]
          %v1155 = vld [vmem:[%s175] sm:$0xf]
          %v1156 = vld [vmem:[%s175 + $0x4] sm:$0xf]
          %v1157 = vld [vmem:[%s175 + $0x8] sm:$0xf]
          %v1158 = vld [vmem:[%s175 + $0xc] sm:$0xf]
          %v1159 = vld [vmem:[%s175 + $0x10] sm:$0xf]
          %v1160 = vld [vmem:[%s175 + $0x14] sm:$0xf]
          %v1161 = vld [vmem:[%s175 + $0x18] sm:$0xf]
          %v1162 = vld [vmem:[%s175 + $0x1c] sm:$0xf]
          %v1163 = vld [vmem:[%s175 + $0x20] sm:$0xf]
          %v1164 = vld [vmem:[%s175 + $0x24] sm:$0xf]
          %v1165 = vld [vmem:[%s175 + $0x28] sm:$0xf]
          %v1166 = vld [vmem:[%s175 + $0x2c] sm:$0xf]
          %v1167 = vld [vmem:[%s175 + $0x30] sm:$0xf]
          %v1168 = vld [vmem:[%s175 + $0x34] sm:$0xf]
          %v1169 = vld [vmem:[%s175 + $0x38] sm:$0xf]
          %v1170 = vld [vmem:[%s175 + $0x3c] sm:$0xf]
          %v1171 = vunpack.c.l.b16 %v1078
          %v1172 = vunpack.c.l.b16 %v1082
          %v1173 = vunpack.c.l.b16 %v1086
          %v1174 = vunpack.c.l.b16 %v1090
          %v1175 = vunpack.c.l.b16 %v1094
          %v1176 = vunpack.c.l.b16 %v1098
          %v1177 = vunpack.c.l.b16 %v1102
          %v1178 = vunpack.c.l.b16 %v1106
          %v1179 = vunpack.c.l.b16 %v1110
          %v1180 = vunpack.c.l.b16 %v1114
          %v1181 = vunpack.c.l.b16 %v1118
          %v1182 = vunpack.c.l.b16 %v1122
          %v1183 = vunpack.c.l.b16 %v1126
          %v1184 = vunpack.c.l.b16 %v1130
          %v1185 = vunpack.c.l.b16 %v1134
          %v1186 = vunpack.c.l.b16 %v1138
          %v1187 = vpack.c.b16 %v1172, %v1171
          %v1188 = vpack.c.b16 %v1174, %v1173
          %v1189 = vpack.c.b16 %v1176, %v1175
          %v1190 = vpack.c.b16 %v1178, %v1177
          %v1191 = vpack.c.b16 %v1180, %v1179
          %v1192 = vpack.c.b16 %v1182, %v1181
          %v1193 = vpack.c.b16 %v1184, %v1183
          %v1194 = vpack.c.b16 %v1186, %v1185
          %v1219 = vunpack.c.l.b16 %v1155
          %v1220 = vunpack.c.l.b16 %v1156
          %v1221 = vunpack.c.l.b16 %v1157
          %v1222 = vunpack.c.l.b16 %v1158
          %v1223 = vunpack.c.l.b16 %v1159
          %v1224 = vunpack.c.l.b16 %v1160
          %v1225 = vunpack.c.l.b16 %v1161
          %v1226 = vunpack.c.l.b16 %v1162
          %v1227 = vunpack.c.l.b16 %v1163
          %v1228 = vunpack.c.l.b16 %v1164
          %v1229 = vunpack.c.l.b16 %v1165
          %v1230 = vunpack.c.l.b16 %v1166
          %v1231 = vunpack.c.l.b16 %v1167
          %v1232 = vunpack.c.l.b16 %v1168
          %v1233 = vunpack.c.l.b16 %v1169
          %v1234 = vunpack.c.l.b16 %v1170
          %v1235 = vpack.c.b16 %v1220, %v1219
          %v1236 = vpack.c.b16 %v1222, %v1221
          %v1237 = vpack.c.b16 %v1224, %v1223
          %v1238 = vpack.c.b16 %v1226, %v1225
          %v1239 = vpack.c.b16 %v1228, %v1227
          %v1240 = vpack.c.b16 %v1230, %v1229
          %v1241 = vpack.c.b16 %v1232, %v1231
          %v1242 = vpack.c.b16 %v1234, %v1233
          %1251 = vmatprep.subr.bf16.mxu0 0
          %1252 = vmatpush1.bf16.msra.mxu0 %v1235
          %1253 = vmatprep.subr.bf16.mxu0 0
          %1254 = vmatpush1.bf16.msra.mxu0 %v1236
          %1255 = vmatprep.subr.bf16.mxu0 0
          %1256 = vmatpush1.bf16.msra.mxu0 %v1237
          %1257 = vmatprep.subr.bf16.mxu0 0
          %1258 = vmatpush1.bf16.msra.mxu0 %v1238
          %1259 = vmatprep.subr.bf16.mxu0 0
          %1260 = vmatpush1.bf16.msra.mxu0 %v1239
          %1261 = vmatprep.subr.bf16.mxu0 0
          %1262 = vmatpush1.bf16.msra.mxu0 %v1240
          %1263 = vmatprep.subr.bf16.mxu0 0
          %1264 = vmatpush1.bf16.msra.mxu0 %v1241
          %1265 = vmatprep.subr.bf16.mxu0 0
          %1266 = vmatpush1.bf16.msra.mxu0 %v1242
          %1267 = vmatprep.subr.bf16.mxu0 0
          %1268 = vmatpush1.bf16.msra.mxu0 0
          %1269 = vmatprep.subr.bf16.mxu0 0
          %1270 = vmatpush1.bf16.msra.mxu0 0
          %1271 = vmatprep.subr.bf16.mxu0 0
          %1272 = vmatpush1.bf16.msra.mxu0 0
          %1273 = vmatprep.subr.bf16.mxu0 0
          %1274 = vmatpush1.bf16.msra.mxu0 0
          %1275 = vmatprep.subr.bf16.mxu0 0
          %1276 = vmatpush1.bf16.msra.mxu0 0
          %1277 = vmatprep.subr.bf16.mxu0 0
          %1278 = vmatpush1.bf16.msra.mxu0 0
          %1279 = vmatprep.subr.bf16.mxu0 0
          %1280 = vmatpush1.bf16.msra.mxu0 0
          %1281 = vmatprep.subr.bf16.mxu0 0
          %1282 = vmatpush1.bf16.msra.mxu0 0
          %1283 = vmatprep.mubr.bf16.mxu0 0
          %1284 = vmatmul.mubr.bf16.gmra.mrb[0].mxu0 %v1187
          %v1285 = vpop.f32.mrb[0].mxu0
          %v1286 = vadd.f32 0.0, %v1285
          %v1287 = vpop.f32.mrb[0].mxu0
          %v1288 = vpop.f32.mrb[0].mxu0
          %v1289 = vadd.f32 0.0, %v1288
          %v1290 = vpop.f32.mrb[0].mxu0
          %1291 = vmatprep.mubr.bf16.mxu0 0
          %1292 = vmatmul.mubr.bf16.gmra.mrb[0].mxu0 %v1188
          %v1293 = vpop.f32.mrb[0].mxu0
          %v1294 = vadd.f32 0.0, %v1293
          %v1295 = vpop.f32.mrb[0].mxu0
          %v1296 = vpop.f32.mrb[0].mxu0
          %v1297 = vadd.f32 0.0, %v1296
          %v1298 = vpop.f32.mrb[0].mxu0
          %1299 = vmatprep.mubr.bf16.mxu0 0
          %1300 = vmatmul.mubr.bf16.gmra.mrb[0].mxu0 %v1189
          %v1301 = vpop.f32.mrb[0].mxu0
          %v1302 = vadd.f32 0.0, %v1301
          %v1303 = vpop.f32.mrb[0].mxu0
          %v1304 = vpop.f32.mrb[0].mxu0
          %v1305 = vadd.f32 0.0, %v1304
          %v1306 = vpop.f32.mrb[0].mxu0
          %1307 = vmatprep.mubr.bf16.mxu0 0
          %1308 = vmatmul.mubr.bf16.gmra.mrb[0].mxu0 %v1190
          %v1309 = vpop.f32.mrb[0].mxu0
          %v1310 = vadd.f32 0.0, %v1309
          %v1311 = vpop.f32.mrb[0].mxu0
          %v1312 = vpop.f32.mrb[0].mxu0
          %v1313 = vadd.f32 0.0, %v1312
          %v1314 = vpop.f32.mrb[0].mxu0
          %1315 = vmatprep.mubr.bf16.mxu0 0
          %1316 = vmatmul.mubr.bf16.gmra.mrb[0].mxu0 %v1191
          %v1317 = vpop.f32.mrb[0].mxu0
          %v1318 = vadd.f32 0.0, %v1317
          %v1319 = vpop.f32.mrb[0].mxu0
          %v1320 = vpop.f32.mrb[0].mxu0
          %v1321 = vadd.f32 0.0, %v1320
          %v1322 = vpop.f32.mrb[0].mxu0
          %1323 = vmatprep.mubr.bf16.mxu0 0
          %1324 = vmatmul.mubr.bf16.gmra.mrb[0].mxu0 %v1192
          %v1325 = vpop.f32.mrb[0].mxu0
          %v1326 = vadd.f32 0.0, %v1325
          %v1327 = vpop.f32.mrb[0].mxu0
          %v1328 = vpop.f32.mrb[0].mxu0
          %v1329 = vadd.f32 0.0, %v1328
          %v1330 = vpop.f32.mrb[0].mxu0
          %1331 = vmatprep.mubr.bf16.mxu0 0
          %1332 = vmatmul.mubr.bf16.gmra.mrb[0].mxu0 %v1193
          %v1333 = vpop.f32.mrb[0].mxu0
          %v1334 = vadd.f32 0.0, %v1333
          %v1335 = vpop.f32.mrb[0].mxu0
          %v1336 = vpop.f32.mrb[0].mxu0
          %v1337 = vadd.f32 0.0, %v1336
          %v1338 = vpop.f32.mrb[0].mxu0
          %1339 = vmatprep.mubr.bf16.mxu0 0
          %1340 = vmatmul.mubr.bf16.gmra.mrb[0].mxu0 %v1194
          %v1341 = vpop.f32.mrb[0].mxu0
          %v1342 = vadd.f32 0.0, %v1341
          %v1343 = vpop.f32.mrb[0].mxu0
          %v1344 = vpop.f32.mrb[0].mxu0
          %v1345 = vadd.f32 0.0, %v1344
          %v1346 = vpop.f32.mrb[0].mxu0
          %1347 = vdwg.mxu0
          %v1348 = vadd.f32 %v1139, %v1286
          %v1349 = vadd.f32 %v1140, %v1289
          %v1350 = vadd.f32 %v1141, %v1294
          %v1351 = vadd.f32 %v1142, %v1297
          %v1352 = vadd.f32 %v1143, %v1302
          %v1353 = vadd.f32 %v1144, %v1305
          %v1354 = vadd.f32 %v1145, %v1310
          %v1355 = vadd.f32 %v1146, %v1313
          %v1356 = vadd.f32 %v1147, %v1318
          %v1357 = vadd.f32 %v1148, %v1321
          %v1358 = vadd.f32 %v1149, %v1326
          %v1359 = vadd.f32 %v1150, %v1329
          %v1360 = vadd.f32 %v1151, %v1334
          %v1361 = vadd.f32 %v1152, %v1337
          %v1362 = vadd.f32 %v1153, %v1342
          %v1363 = vadd.f32 %v1154, %v1345
          %1364 = vst [vmem:[#allocation2] sm:$0xff] %v1348
          %1365 = vst [vmem:[#allocation2 + $0x8] sm:$0xff] %v1349
          %1366 = vst [vmem:[#allocation2 + $0x10] sm:$0xff] %v1350
          %1367 = vst [vmem:[#allocation2 + $0x18] sm:$0xff] %v1351
          %1368 = vst [vmem:[#allocation2 + $0x20] sm:$0xff] %v1352
          %1369 = vst [vmem:[#allocation2 + $0x28] sm:$0xff] %v1353
          %1370 = vst [vmem:[#allocation2 + $0x30] sm:$0xff] %v1354
          %1371 = vst [vmem:[#allocation2 + $0x38] sm:$0xff] %v1355
          %1372 = vst [vmem:[#allocation2 + $0x40] sm:$0xff] %v1356
          %1373 = vst [vmem:[#allocation2 + $0x48] sm:$0xff] %v1357
          %1374 = vst [vmem:[#allocation2 + $0x50] sm:$0xff] %v1358
          %1375 = vst [vmem:[#allocation2 + $0x58] sm:$0xff] %v1359
          %1376 = vst [vmem:[#allocation2 + $0x60] sm:$0xff] %v1360
          %1377 = vst [vmem:[#allocation2 + $0x68] sm:$0xff] %v1361
          %1378 = vst [vmem:[#allocation2 + $0x70] sm:$0xff] %v1362
          %1379 = vst [vmem:[#allocation2 + $0x78] sm:$0xff] %v1363
        $region44: #{tpu_custom_call.1} parent=27 // pred_fallthru
          _
        %p1380 = scmp.eq.s32.totalorder %s24, 3
        // Predicated region
        $region45: #{tpu_custom_call.1} parent=27 // pred_check
          %p1381 = pneg %p1380
        $region46: #{tpu_custom_call.1} parent=27 // pred_check_branch
          %1383 = sbr.rel (%p1381) target = $region48
        $region47: #{tpu_custom_call.1} parent=27 // pred_region
          %s1384 = scalar_lea.vmem %s202, 8
          %v1385 = vld [vmem:[%s1384] sm:$0xf]
          %v1386 = vld [vmem:[%s1384 + $0x8] sm:$0xf]
          %v1387 = vld [vmem:[%s1384 + $0x10] sm:$0xf]
          %v1388 = vld [vmem:[%s1384 + $0x18] sm:$0xf]
          %v1389 = vld [vmem:[%s1384 + $0x20] sm:$0xf]
          %v1390 = vld [vmem:[%s1384 + $0x28] sm:$0xf]
          %v1391 = vld [vmem:[%s1384 + $0x30] sm:$0xf]
          %v1392 = vld [vmem:[%s1384 + $0x38] sm:$0xf]
          %v1393 = vld [vmem:[%s1384 + $0x50] sm:$0xf]
          %v1394 = vld [vmem:[%s1384 + $0x58] sm:$0xf]
          %v1395 = vld [vmem:[%s1384 + $0x60] sm:$0xf]
          %v1396 = vld [vmem:[%s1384 + $0x68] sm:$0xf]
          %v1397 = vld [vmem:[%s1384 + $0x70] sm:$0xf]
          %v1398 = vld [vmem:[%s1384 + $0x78] sm:$0xf]
          %v1399 = vld [vmem:[%s1384 + $0x80] sm:$0xf]
          %v1400 = vld [vmem:[%s1384 + $0x88] sm:$0xf]
          %v1401 = vld [vmem:[#allocation2] sm:$0xff]
          %v1402 = vld [vmem:[#allocation2 + $0x8] sm:$0xff]
          %v1403 = vld [vmem:[#allocation2 + $0x10] sm:$0xff]
          %v1404 = vld [vmem:[#allocation2 + $0x18] sm:$0xff]
          %v1405 = vld [vmem:[#allocation2 + $0x20] sm:$0xff]
          %v1406 = vld [vmem:[#allocation2 + $0x28] sm:$0xff]
          %v1407 = vld [vmem:[#allocation2 + $0x30] sm:$0xff]
          %v1408 = vld [vmem:[#allocation2 + $0x38] sm:$0xff]
          %v1409 = vld [vmem:[#allocation2 + $0x40] sm:$0xff]
          %v1410 = vld [vmem:[#allocation2 + $0x48] sm:$0xff]
          %v1411 = vld [vmem:[#allocation2 + $0x50] sm:$0xff]
          %v1412 = vld [vmem:[#allocation2 + $0x58] sm:$0xff]
          %v1413 = vld [vmem:[#allocation2 + $0x60] sm:$0xff]
          %v1414 = vld [vmem:[#allocation2 + $0x68] sm:$0xff]
          %v1415 = vld [vmem:[#allocation2 + $0x70] sm:$0xff]
          %v1416 = vld [vmem:[#allocation2 + $0x78] sm:$0xff]
          %v1417 = vld [vmem:[%s175] sm:$0xf]
          %v1418 = vld [vmem:[%s175 + $0x4] sm:$0xf]
          %v1419 = vld [vmem:[%s175 + $0x8] sm:$0xf]
          %v1420 = vld [vmem:[%s175 + $0xc] sm:$0xf]
          %v1421 = vld [vmem:[%s175 + $0x10] sm:$0xf]
          %v1422 = vld [vmem:[%s175 + $0x14] sm:$0xf]
          %v1423 = vld [vmem:[%s175 + $0x18] sm:$0xf]
          %v1424 = vld [vmem:[%s175 + $0x1c] sm:$0xf]
          %v1425 = vld [vmem:[%s175 + $0x20] sm:$0xf]
          %v1426 = vld [vmem:[%s175 + $0x24] sm:$0xf]
          %v1427 = vld [vmem:[%s175 + $0x28] sm:$0xf]
          %v1428 = vld [vmem:[%s175 + $0x2c] sm:$0xf]
          %v1429 = vld [vmem:[%s175 + $0x30] sm:$0xf]
          %v1430 = vld [vmem:[%s175 + $0x34] sm:$0xf]
          %v1431 = vld [vmem:[%s175 + $0x38] sm:$0xf]
          %v1432 = vld [vmem:[%s175 + $0x3c] sm:$0xf]
          %v1449 = vunpack.c.l.b16 %v1385
          %v1450 = vunpack.c.l.b16 %v1386
          %v1451 = vunpack.c.l.b16 %v1387
          %v1452 = vunpack.c.l.b16 %v1388
          %v1453 = vunpack.c.l.b16 %v1389
          %v1454 = vunpack.c.l.b16 %v1390
          %v1455 = vunpack.c.l.b16 %v1391
          %v1456 = vunpack.c.l.b16 %v1392
          %v1457 = vunpack.c.l.b16 %v1393
          %v1458 = vunpack.c.l.b16 %v1394
          %v1459 = vunpack.c.l.b16 %v1395
          %v1460 = vunpack.c.l.b16 %v1396
          %v1461 = vunpack.c.l.b16 %v1397
          %v1462 = vunpack.c.l.b16 %v1398
          %v1463 = vunpack.c.l.b16 %v1399
          %v1464 = vunpack.c.l.b16 %v1400
          %v1465 = vpack.c.b16 %v1450, %v1449
          %v1466 = vpack.c.b16 %v1452, %v1451
          %v1467 = vpack.c.b16 %v1454, %v1453
          %v1468 = vpack.c.b16 %v1456, %v1455
          %v1469 = vpack.c.b16 %v1458, %v1457
          %v1470 = vpack.c.b16 %v1460, %v1459
          %v1471 = vpack.c.b16 %v1462, %v1461
          %v1472 = vpack.c.b16 %v1464, %v1463
          %v1497 = vunpack.c.l.b16 %v1417
          %v1498 = vunpack.c.l.b16 %v1418
          %v1499 = vunpack.c.l.b16 %v1419
          %v1500 = vunpack.c.l.b16 %v1420
          %v1501 = vunpack.c.l.b16 %v1421
          %v1502 = vunpack.c.l.b16 %v1422
          %v1503 = vunpack.c.l.b16 %v1423
          %v1504 = vunpack.c.l.b16 %v1424
          %v1505 = vunpack.c.l.b16 %v1425
          %v1506 = vunpack.c.l.b16 %v1426
          %v1507 = vunpack.c.l.b16 %v1427
          %v1508 = vunpack.c.l.b16 %v1428
          %v1509 = vunpack.c.l.b16 %v1429
          %v1510 = vunpack.c.l.b16 %v1430
          %v1511 = vunpack.c.l.b16 %v1431
          %v1512 = vunpack.c.l.b16 %v1432
          %v1513 = vpack.c.b16 %v1498, %v1497
          %v1514 = vpack.c.b16 %v1500, %v1499
          %v1515 = vpack.c.b16 %v1502, %v1501
          %v1516 = vpack.c.b16 %v1504, %v1503
          %v1517 = vpack.c.b16 %v1506, %v1505
          %v1518 = vpack.c.b16 %v1508, %v1507
          %v1519 = vpack.c.b16 %v1510, %v1509
          %v1520 = vpack.c.b16 %v1512, %v1511
          %1529 = vmatprep.subr.bf16.mxu0 0
          %1530 = vmatpush1.bf16.msra.mxu0 %v1513
          %1531 = vmatprep.subr.bf16.mxu0 0
          %1532 = vmatpush1.bf16.msra.mxu0 %v1514
          %1533 = vmatprep.subr.bf16.mxu0 0
          %1534 = vmatpush1.bf16.msra.mxu0 %v1515
          %1535 = vmatprep.subr.bf16.mxu0 0
          %1536 = vmatpush1.bf16.msra.mxu0 %v1516
          %1537 = vmatprep.subr.bf16.mxu0 0
          %1538 = vmatpush1.bf16.msra.mxu0 %v1517
          %1539 = vmatprep.subr.bf16.mxu0 0
          %1540 = vmatpush1.bf16.msra.mxu0 %v1518
          %1541 = vmatprep.subr.bf16.mxu0 0
          %1542 = vmatpush1.bf16.msra.mxu0 %v1519
          %1543 = vmatprep.subr.bf16.mxu0 0
          %1544 = vmatpush1.bf16.msra.mxu0 %v1520
          %1545 = vmatprep.subr.bf16.mxu0 0
          %1546 = vmatpush1.bf16.msra.mxu0 0
          %1547 = vmatprep.subr.bf16.mxu0 0
          %1548 = vmatpush1.bf16.msra.mxu0 0
          %1549 = vmatprep.subr.bf16.mxu0 0
          %1550 = vmatpush1.bf16.msra.mxu0 0
          %1551 = vmatprep.subr.bf16.mxu0 0
          %1552 = vmatpush1.bf16.msra.mxu0 0
          %1553 = vmatprep.subr.bf16.mxu0 0
          %1554 = vmatpush1.bf16.msra.mxu0 0
          %1555 = vmatprep.subr.bf16.mxu0 0
          %1556 = vmatpush1.bf16.msra.mxu0 0
          %1557 = vmatprep.subr.bf16.mxu0 0
          %1558 = vmatpush1.bf16.msra.mxu0 0
          %1559 = vmatprep.subr.bf16.mxu0 0
          %1560 = vmatpush1.bf16.msra.mxu0 0
          %1561 = vmatprep.mubr.bf16.mxu0 0
          %1562 = vmatmul.mubr.bf16.gmra.mrb[0].mxu0 %v1465
          %v1563 = vpop.f32.mrb[0].mxu0
          %v1564 = vadd.f32 0.0, %v1563
          %v1565 = vpop.f32.mrb[0].mxu0
          %v1566 = vpop.f32.mrb[0].mxu0
          %v1567 = vadd.f32 0.0, %v1566
          %v1568 = vpop.f32.mrb[0].mxu0
          %1569 = vmatprep.mubr.bf16.mxu0 0
          %1570 = vmatmul.mubr.bf16.gmra.mrb[0].mxu0 %v1466
          %v1571 = vpop.f32.mrb[0].mxu0
          %v1572 = vadd.f32 0.0, %v1571
          %v1573 = vpop.f32.mrb[0].mxu0
          %v1574 = vpop.f32.mrb[0].mxu0
          %v1575 = vadd.f32 0.0, %v1574
          %v1576 = vpop.f32.mrb[0].mxu0
          %1577 = vmatprep.mubr.bf16.mxu0 0
          %1578 = vmatmul.mubr.bf16.gmra.mrb[0].mxu0 %v1467
          %v1579 = vpop.f32.mrb[0].mxu0
          %v1580 = vadd.f32 0.0, %v1579
          %v1581 = vpop.f32.mrb[0].mxu0
          %v1582 = vpop.f32.mrb[0].mxu0
          %v1583 = vadd.f32 0.0, %v1582
          %v1584 = vpop.f32.mrb[0].mxu0
          %1585 = vmatprep.mubr.bf16.mxu0 0
          %1586 = vmatmul.mubr.bf16.gmra.mrb[0].mxu0 %v1468
          %v1587 = vpop.f32.mrb[0].mxu0
          %v1588 = vadd.f32 0.0, %v1587
          %v1589 = vpop.f32.mrb[0].mxu0
          %v1590 = vpop.f32.mrb[0].mxu0
          %v1591 = vadd.f32 0.0, %v1590
          %v1592 = vpop.f32.mrb[0].mxu0
          %1593 = vmatprep.mubr.bf16.mxu0 0
          %1594 = vmatmul.mubr.bf16.gmra.mrb[0].mxu0 %v1469
          %v1595 = vpop.f32.mrb[0].mxu0
          %v1596 = vadd.f32 0.0, %v1595
          %v1597 = vpop.f32.mrb[0].mxu0
          %v1598 = vpop.f32.mrb[0].mxu0
          %v1599 = vadd.f32 0.0, %v1598
          %v1600 = vpop.f32.mrb[0].mxu0
          %1601 = vmatprep.mubr.bf16.mxu0 0
          %1602 = vmatmul.mubr.bf16.gmra.mrb[0].mxu0 %v1470
          %v1603 = vpop.f32.mrb[0].mxu0
          %v1604 = vadd.f32 0.0, %v1603
          %v1605 = vpop.f32.mrb[0].mxu0
          %v1606 = vpop.f32.mrb[0].mxu0
          %v1607 = vadd.f32 0.0, %v1606
          %v1608 = vpop.f32.mrb[0].mxu0
          %1609 = vmatprep.mubr.bf16.mxu0 0
          %1610 = vmatmul.mubr.bf16.gmra.mrb[0].mxu0 %v1471
          %v1611 = vpop.f32.mrb[0].mxu0
          %v1612 = vadd.f32 0.0, %v1611
          %v1613 = vpop.f32.mrb[0].mxu0
          %v1614 = vpop.f32.mrb[0].mxu0
          %v1615 = vadd.f32 0.0, %v1614
          %v1616 = vpop.f32.mrb[0].mxu0
          %1617 = vmatprep.mubr.bf16.mxu0 0
          %1618 = vmatmul.mubr.bf16.gmra.mrb[0].mxu0 %v1472
          %v1619 = vpop.f32.mrb[0].mxu0
          %v1620 = vadd.f32 0.0, %v1619
          %v1621 = vpop.f32.mrb[0].mxu0
          %v1622 = vpop.f32.mrb[0].mxu0
          %v1623 = vadd.f32 0.0, %v1622
          %v1624 = vpop.f32.mrb[0].mxu0
          %1625 = vdwg.mxu0
          %v1626 = vadd.f32 %v1401, %v1564
          %v1627 = vadd.f32 %v1402, %v1567
          %v1628 = vadd.f32 %v1403, %v1572
          %v1629 = vadd.f32 %v1404, %v1575
          %v1630 = vadd.f32 %v1405, %v1580
          %v1631 = vadd.f32 %v1406, %v1583
          %v1632 = vadd.f32 %v1407, %v1588
          %v1633 = vadd.f32 %v1408, %v1591
          %v1634 = vadd.f32 %v1409, %v1596
          %v1635 = vadd.f32 %v1410, %v1599
          %v1636 = vadd.f32 %v1411, %v1604
          %v1637 = vadd.f32 %v1412, %v1607
          %v1638 = vadd.f32 %v1413, %v1612
          %v1639 = vadd.f32 %v1414, %v1615
          %v1640 = vadd.f32 %v1415, %v1620
          %v1641 = vadd.f32 %v1416, %v1623
          %1642 = vst [vmem:[#allocation2] sm:$0xff] %v1626
          %1643 = vst [vmem:[#allocation2 + $0x8] sm:$0xff] %v1627
          %1644 = vst [vmem:[#allocation2 + $0x10] sm:$0xff] %v1628
          %1645 = vst [vmem:[#allocation2 + $0x18] sm:$0xff] %v1629
          %1646 = vst [vmem:[#allocation2 + $0x20] sm:$0xff] %v1630
          %1647 = vst [vmem:[#allocation2 + $0x28] sm:$0xff] %v1631
          %1648 = vst [vmem:[#allocation2 + $0x30] sm:$0xff] %v1632
          %1649 = vst [vmem:[#allocation2 + $0x38] sm:$0xff] %v1633
          %1650 = vst [vmem:[#allocation2 + $0x40] sm:$0xff] %v1634
          %1651 = vst [vmem:[#allocation2 + $0x48] sm:$0xff] %v1635
          %1652 = vst [vmem:[#allocation2 + $0x50] sm:$0xff] %v1636
          %1653 = vst [vmem:[#allocation2 + $0x58] sm:$0xff] %v1637
          %1654 = vst [vmem:[#allocation2 + $0x60] sm:$0xff] %v1638
          %1655 = vst [vmem:[#allocation2 + $0x68] sm:$0xff] %v1639
          %1656 = vst [vmem:[#allocation2 + $0x70] sm:$0xff] %v1640
          %1657 = vst [vmem:[#allocation2 + $0x78] sm:$0xff] %v1641
        $region48: #{tpu_custom_call.1} parent=27 // pred_fallthru
          _
        %p1658 = scmp.eq.s32.totalorder %s24, 4
        // Predicated region
        $region49: #{tpu_custom_call.1} parent=27 // pred_check
          %p1659 = pneg %p1658
        $region50: #{tpu_custom_call.1} parent=27 // pred_check_branch
          %1661 = sbr.rel (%p1659) target = $region52
        $region51: #{tpu_custom_call.1} parent=27 // pred_region
          %s1662 = scalar_lea.vmem %s202, 8
          %v1663 = vld [vmem:[%s1662] sm:$0xf]
          %v1664 = vld [vmem:[%s1662 + $0x4] sm:$0x1]
          %v1665 = vld [vmem:[%s1662 + $0x8] sm:$0xf]
          %v1666 = vld [vmem:[%s1662 + $0xc] sm:$0x1]
          %v1667 = vld [vmem:[%s1662 + $0x10] sm:$0xf]
          %v1668 = vld [vmem:[%s1662 + $0x14] sm:$0x1]
          %v1669 = vld [vmem:[%s1662 + $0x18] sm:$0xf]
          %v1670 = vld [vmem:[%s1662 + $0x1c] sm:$0x1]
          %v1671 = vld [vmem:[%s1662 + $0x20] sm:$0xf]
          %v1672 = vld [vmem:[%s1662 + $0x24] sm:$0x1]
          %v1673 = vld [vmem:[%s1662 + $0x28] sm:$0xf]
          %v1674 = vld [vmem:[%s1662 + $0x2c] sm:$0x1]
          %v1675 = vld [vmem:[%s1662 + $0x30] sm:$0xf]
          %v1676 = vld [vmem:[%s1662 + $0x34] sm:$0x1]
          %v1677 = vld [vmem:[%s1662 + $0x38] sm:$0xf]
          %v1678 = vld [vmem:[%s1662 + $0x3c] sm:$0x1]
          %v1679 = vld [vmem:[%s1662 + $0x50] sm:$0xf]
          %v1680 = vld [vmem:[%s1662 + $0x54] sm:$0x1]
          %v1681 = vld [vmem:[%s1662 + $0x58] sm:$0xf]
          %v1682 = vld [vmem:[%s1662 + $0x5c] sm:$0x1]
          %v1683 = vld [vmem:[%s1662 + $0x60] sm:$0xf]
          %v1684 = vld [vmem:[%s1662 + $0x64] sm:$0x1]
          %v1685 = vld [vmem:[%s1662 + $0x68] sm:$0xf]
          %v1686 = vld [vmem:[%s1662 + $0x6c] sm:$0x1]
          %v1687 = vld [vmem:[%s1662 + $0x70] sm:$0xf]
          %v1688 = vld [vmem:[%s1662 + $0x74] sm:$0x1]
          %v1689 = vld [vmem:[%s1662 + $0x78] sm:$0xf]
          %v1690 = vld [vmem:[%s1662 + $0x7c] sm:$0x1]
          %v1691 = vld [vmem:[%s1662 + $0x80] sm:$0xf]
          %v1692 = vld [vmem:[%s1662 + $0x84] sm:$0x1]
          %v1693 = vld [vmem:[%s1662 + $0x88] sm:$0xf]
          %v1694 = vld [vmem:[%s1662 + $0x8c] sm:$0x1]
          %vm1695 = vsmask.f32 3328
          %vm1696 = vsmask.f32 7440
          %vm1697 = vmor %vm1695, %vm1696
          %v1699 = vshrl.u32 %v1663, 16
          %v1701 = vrot.slane %v1699, 4
          %v1702 = vshll.u32 %v1663, 16
          %v1704 = vrot.slane %v1702, 5
          %v1705 = vor.u32 %v1701, %v1704
          %v1706 = vrot.slane %v1705, 4
          %v1708 = vshll.u32 %v1664, 16
          %v1710 = vrot.slane %v1708, 5
          %v1711 = vsel %vm1697, %v1706, %v1710
          %v1713 = vshrl.u32 %v1665, 16
          %v1715 = vrot.slane %v1713, 4
          %v1716 = vshll.u32 %v1665, 16
          %v1718 = vrot.slane %v1716, 5
          %v1719 = vor.u32 %v1715, %v1718
          %v1720 = vrot.slane %v1719, 4
          %v1722 = vshll.u32 %v1666, 16
          %v1724 = vrot.slane %v1722, 5
          %v1725 = vsel %vm1697, %v1720, %v1724
          %v1727 = vshrl.u32 %v1667, 16
          %v1729 = vrot.slane %v1727, 4
          %v1730 = vshll.u32 %v1667, 16
          %v1732 = vrot.slane %v1730, 5
          %v1733 = vor.u32 %v1729, %v1732
          %v1734 = vrot.slane %v1733, 4
          %v1736 = vshll.u32 %v1668, 16
          %v1738 = vrot.slane %v1736, 5
          %v1739 = vsel %vm1697, %v1734, %v1738
          %v1741 = vshrl.u32 %v1669, 16
          %v1743 = vrot.slane %v1741, 4
          %v1744 = vshll.u32 %v1669, 16
          %v1746 = vrot.slane %v1744, 5
          %v1747 = vor.u32 %v1743, %v1746
          %v1748 = vrot.slane %v1747, 4
          %v1750 = vshll.u32 %v1670, 16
          %v1752 = vrot.slane %v1750, 5
          %v1753 = vsel %vm1697, %v1748, %v1752
          %v1755 = vshrl.u32 %v1671, 16
          %v1757 = vrot.slane %v1755, 4
          %v1758 = vshll.u32 %v1671, 16
          %v1760 = vrot.slane %v1758, 5
          %v1761 = vor.u32 %v1757, %v1760
          %v1762 = vrot.slane %v1761, 4
          %v1764 = vshll.u32 %v1672, 16
          %v1766 = vrot.slane %v1764, 5
          %v1767 = vsel %vm1697, %v1762, %v1766
          %v1769 = vshrl.u32 %v1673, 16
          %v1771 = vrot.slane %v1769, 4
          %v1772 = vshll.u32 %v1673, 16
          %v1774 = vrot.slane %v1772, 5
          %v1775 = vor.u32 %v1771, %v1774
          %v1776 = vrot.slane %v1775, 4
          %v1778 = vshll.u32 %v1674, 16
          %v1780 = vrot.slane %v1778, 5
          %v1781 = vsel %vm1697, %v1776, %v1780
          %v1783 = vshrl.u32 %v1675, 16
          %v1785 = vrot.slane %v1783, 4
          %v1786 = vshll.u32 %v1675, 16
          %v1788 = vrot.slane %v1786, 5
          %v1789 = vor.u32 %v1785, %v1788
          %v1790 = vrot.slane %v1789, 4
          %v1792 = vshll.u32 %v1676, 16
          %v1794 = vrot.slane %v1792, 5
          %v1795 = vsel %vm1697, %v1790, %v1794
          %v1797 = vshrl.u32 %v1677, 16
          %v1799 = vrot.slane %v1797, 4
          %v1800 = vshll.u32 %v1677, 16
          %v1802 = vrot.slane %v1800, 5
          %v1803 = vor.u32 %v1799, %v1802
          %v1804 = vrot.slane %v1803, 4
          %v1806 = vshll.u32 %v1678, 16
          %v1808 = vrot.slane %v1806, 5
          %v1809 = vsel %vm1697, %v1804, %v1808
          %v1811 = vshrl.u32 %v1679, 16
          %v1813 = vrot.slane %v1811, 4
          %v1814 = vshll.u32 %v1679, 16
          %v1816 = vrot.slane %v1814, 5
          %v1817 = vor.u32 %v1813, %v1816
          %v1818 = vrot.slane %v1817, 4
          %v1820 = vshll.u32 %v1680, 16
          %v1822 = vrot.slane %v1820, 5
          %v1823 = vsel %vm1697, %v1818, %v1822
          %v1825 = vshrl.u32 %v1681, 16
          %v1827 = vrot.slane %v1825, 4
          %v1828 = vshll.u32 %v1681, 16
          %v1830 = vrot.slane %v1828, 5
          %v1831 = vor.u32 %v1827, %v1830
          %v1832 = vrot.slane %v1831, 4
          %v1834 = vshll.u32 %v1682, 16
          %v1836 = vrot.slane %v1834, 5
          %v1837 = vsel %vm1697, %v1832, %v1836
          %v1839 = vshrl.u32 %v1683, 16
          %v1841 = vrot.slane %v1839, 4
          %v1842 = vshll.u32 %v1683, 16
          %v1844 = vrot.slane %v1842, 5
          %v1845 = vor.u32 %v1841, %v1844
          %v1846 = vrot.slane %v1845, 4
          %v1848 = vshll.u32 %v1684, 16
          %v1850 = vrot.slane %v1848, 5
          %v1851 = vsel %vm1697, %v1846, %v1850
          %v1853 = vshrl.u32 %v1685, 16
          %v1855 = vrot.slane %v1853, 4
          %v1856 = vshll.u32 %v1685, 16
          %v1858 = vrot.slane %v1856, 5
          %v1859 = vor.u32 %v1855, %v1858
          %v1860 = vrot.slane %v1859, 4
          %v1862 = vshll.u32 %v1686, 16
          %v1864 = vrot.slane %v1862, 5
          %v1865 = vsel %vm1697, %v1860, %v1864
          %v1867 = vshrl.u32 %v1687, 16
          %v1869 = vrot.slane %v1867, 4
          %v1870 = vshll.u32 %v1687, 16
          %v1872 = vrot.slane %v1870, 5
          %v1873 = vor.u32 %v1869, %v1872
          %v1874 = vrot.slane %v1873, 4
          %v1876 = vshll.u32 %v1688, 16
          %v1878 = vrot.slane %v1876, 5
          %v1879 = vsel %vm1697, %v1874, %v1878
          %v1881 = vshrl.u32 %v1689, 16
          %v1883 = vrot.slane %v1881, 4
          %v1884 = vshll.u32 %v1689, 16
          %v1886 = vrot.slane %v1884, 5
          %v1887 = vor.u32 %v1883, %v1886
          %v1888 = vrot.slane %v1887, 4
          %v1890 = vshll.u32 %v1690, 16
          %v1892 = vrot.slane %v1890, 5
          %v1893 = vsel %vm1697, %v1888, %v1892
          %v1895 = vshrl.u32 %v1691, 16
          %v1897 = vrot.slane %v1895, 4
          %v1898 = vshll.u32 %v1691, 16
          %v1900 = vrot.slane %v1898, 5
          %v1901 = vor.u32 %v1897, %v1900
          %v1902 = vrot.slane %v1901, 4
          %v1904 = vshll.u32 %v1692, 16
          %v1906 = vrot.slane %v1904, 5
          %v1907 = vsel %vm1697, %v1902, %v1906
          %v1909 = vshrl.u32 %v1693, 16
          %v1911 = vrot.slane %v1909, 4
          %v1912 = vshll.u32 %v1693, 16
          %v1914 = vrot.slane %v1912, 5
          %v1915 = vor.u32 %v1911, %v1914
          %v1916 = vrot.slane %v1915, 4
          %v1918 = vshll.u32 %v1694, 16
          %v1920 = vrot.slane %v1918, 5
          %v1921 = vsel %vm1697, %v1916, %v1920
          %v1922 = vld [vmem:[#allocation2] sm:$0xff]
          %v1923 = vld [vmem:[#allocation2 + $0x8] sm:$0xff]
          %v1924 = vld [vmem:[#allocation2 + $0x10] sm:$0xff]
          %v1925 = vld [vmem:[#allocation2 + $0x18] sm:$0xff]
          %v1926 = vld [vmem:[#allocation2 + $0x20] sm:$0xff]
          %v1927 = vld [vmem:[#allocation2 + $0x28] sm:$0xff]
          %v1928 = vld [vmem:[#allocation2 + $0x30] sm:$0xff]
          %v1929 = vld [vmem:[#allocation2 + $0x38] sm:$0xff]
          %v1930 = vld [vmem:[#allocation2 + $0x40] sm:$0xff]
          %v1931 = vld [vmem:[#allocation2 + $0x48] sm:$0xff]
          %v1932 = vld [vmem:[#allocation2 + $0x50] sm:$0xff]
          %v1933 = vld [vmem:[#allocation2 + $0x58] sm:$0xff]
          %v1934 = vld [vmem:[#allocation2 + $0x60] sm:$0xff]
          %v1935 = vld [vmem:[#allocation2 + $0x68] sm:$0xff]
          %v1936 = vld [vmem:[#allocation2 + $0x70] sm:$0xff]
          %v1937 = vld [vmem:[#allocation2 + $0x78] sm:$0xff]
          %v1938 = vld [vmem:[%s175] sm:$0xf]
          %v1939 = vld [vmem:[%s175 + $0x4] sm:$0xf]
          %v1940 = vld [vmem:[%s175 + $0x8] sm:$0xf]
          %v1941 = vld [vmem:[%s175 + $0xc] sm:$0xf]
          %v1942 = vld [vmem:[%s175 + $0x10] sm:$0xf]
          %v1943 = vld [vmem:[%s175 + $0x14] sm:$0xf]
          %v1944 = vld [vmem:[%s175 + $0x18] sm:$0xf]
          %v1945 = vld [vmem:[%s175 + $0x1c] sm:$0xf]
          %v1946 = vld [vmem:[%s175 + $0x20] sm:$0xf]
          %v1947 = vld [vmem:[%s175 + $0x24] sm:$0xf]
          %v1948 = vld [vmem:[%s175 + $0x28] sm:$0xf]
          %v1949 = vld [vmem:[%s175 + $0x2c] sm:$0xf]
          %v1950 = vld [vmem:[%s175 + $0x30] sm:$0xf]
          %v1951 = vld [vmem:[%s175 + $0x34] sm:$0xf]
          %v1952 = vld [vmem:[%s175 + $0x38] sm:$0xf]
          %v1953 = vld [vmem:[%s175 + $0x3c] sm:$0xf]
          %v1954 = vunpack.c.l.b16 %v1711
          %v1955 = vunpack.c.l.b16 %v1725
          %v1956 = vunpack.c.l.b16 %v1739
          %v1957 = vunpack.c.l.b16 %v1753
          %v1958 = vunpack.c.l.b16 %v1767
          %v1959 = vunpack.c.l.b16 %v1781
          %v1960 = vunpack.c.l.b16 %v1795
          %v1961 = vunpack.c.l.b16 %v1809
          %v1962 = vunpack.c.l.b16 %v1823
          %v1963 = vunpack.c.l.b16 %v1837
          %v1964 = vunpack.c.l.b16 %v1851
          %v1965 = vunpack.c.l.b16 %v1865
          %v1966 = vunpack.c.l.b16 %v1879
          %v1967 = vunpack.c.l.b16 %v1893
          %v1968 = vunpack.c.l.b16 %v1907
          %v1969 = vunpack.c.l.b16 %v1921
          %v1970 = vpack.c.b16 %v1955, %v1954
          %v1971 = vpack.c.b16 %v1957, %v1956
          %v1972 = vpack.c.b16 %v1959, %v1958
          %v1973 = vpack.c.b16 %v1961, %v1960
          %v1974 = vpack.c.b16 %v1963, %v1962
          %v1975 = vpack.c.b16 %v1965, %v1964
          %v1976 = vpack.c.b16 %v1967, %v1966
          %v1977 = vpack.c.b16 %v1969, %v1968
          %v2002 = vunpack.c.l.b16 %v1938
          %v2003 = vunpack.c.l.b16 %v1939
          %v2004 = vunpack.c.l.b16 %v1940
          %v2005 = vunpack.c.l.b16 %v1941
          %v2006 = vunpack.c.l.b16 %v1942
          %v2007 = vunpack.c.l.b16 %v1943
          %v2008 = vunpack.c.l.b16 %v1944
          %v2009 = vunpack.c.l.b16 %v1945
          %v2010 = vunpack.c.l.b16 %v1946
          %v2011 = vunpack.c.l.b16 %v1947
          %v2012 = vunpack.c.l.b16 %v1948
          %v2013 = vunpack.c.l.b16 %v1949
          %v2014 = vunpack.c.l.b16 %v1950
          %v2015 = vunpack.c.l.b16 %v1951
          %v2016 = vunpack.c.l.b16 %v1952
          %v2017 = vunpack.c.l.b16 %v1953
          %v2018 = vpack.c.b16 %v2003, %v2002
          %v2019 = vpack.c.b16 %v2005, %v2004
          %v2020 = vpack.c.b16 %v2007, %v2006
          %v2021 = vpack.c.b16 %v2009, %v2008
          %v2022 = vpack.c.b16 %v2011, %v2010
          %v2023 = vpack.c.b16 %v2013, %v2012
          %v2024 = vpack.c.b16 %v2015, %v2014
          %v2025 = vpack.c.b16 %v2017, %v2016
          %2034 = vmatprep.subr.bf16.mxu0 0
          %2035 = vmatpush1.bf16.msra.mxu0 %v2018
          %2036 = vmatprep.subr.bf16.mxu0 0
          %2037 = vmatpush1.bf16.msra.mxu0 %v2019
          %2038 = vmatprep.subr.bf16.mxu0 0
          %2039 = vmatpush1.bf16.msra.mxu0 %v2020
          %2040 = vmatprep.subr.bf16.mxu0 0
          %2041 = vmatpush1.bf16.msra.mxu0 %v2021
          %2042 = vmatprep.subr.bf16.mxu0 0
          %2043 = vmatpush1.bf16.msra.mxu0 %v2022
          %2044 = vmatprep.subr.bf16.mxu0 0
          %2045 = vmatpush1.bf16.msra.mxu0 %v2023
          %2046 = vmatprep.subr.bf16.mxu0 0
          %2047 = vmatpush1.bf16.msra.mxu0 %v2024
          %2048 = vmatprep.subr.bf16.mxu0 0
          %2049 = vmatpush1.bf16.msra.mxu0 %v2025
          %2050 = vmatprep.subr.bf16.mxu0 0
          %2051 = vmatpush1.bf16.msra.mxu0 0
          %2052 = vmatprep.subr.bf16.mxu0 0
          %2053 = vmatpush1.bf16.msra.mxu0 0
          %2054 = vmatprep.subr.bf16.mxu0 0
          %2055 = vmatpush1.bf16.msra.mxu0 0
          %2056 = vmatprep.subr.bf16.mxu0 0
          %2057 = vmatpush1.bf16.msra.mxu0 0
          %2058 = vmatprep.subr.bf16.mxu0 0
          %2059 = vmatpush1.bf16.msra.mxu0 0
          %2060 = vmatprep.subr.bf16.mxu0 0
          %2061 = vmatpush1.bf16.msra.mxu0 0
          %2062 = vmatprep.subr.bf16.mxu0 0
          %2063 = vmatpush1.bf16.msra.mxu0 0
          %2064 = vmatprep.subr.bf16.mxu0 0
          %2065 = vmatpush1.bf16.msra.mxu0 0
          %2066 = vmatprep.mubr.bf16.mxu0 0
          %2067 = vmatmul.mubr.bf16.gmra.mrb[0].mxu0 %v1970
          %v2068 = vpop.f32.mrb[0].mxu0
          %v2069 = vadd.f32 0.0, %v2068
          %v2070 = vpop.f32.mrb[0].mxu0
          %v2071 = vpop.f32.mrb[0].mxu0
          %v2072 = vadd.f32 0.0, %v2071
          %v2073 = vpop.f32.mrb[0].mxu0
          %2074 = vmatprep.mubr.bf16.mxu0 0
          %2075 = vmatmul.mubr.bf16.gmra.mrb[0].mxu0 %v1971
          %v2076 = vpop.f32.mrb[0].mxu0
          %v2077 = vadd.f32 0.0, %v2076
          %v2078 = vpop.f32.mrb[0].mxu0
          %v2079 = vpop.f32.mrb[0].mxu0
          %v2080 = vadd.f32 0.0, %v2079
          %v2081 = vpop.f32.mrb[0].mxu0
          %2082 = vmatprep.mubr.bf16.mxu0 0
          %2083 = vmatmul.mubr.bf16.gmra.mrb[0].mxu0 %v1972
          %v2084 = vpop.f32.mrb[0].mxu0
          %v2085 = vadd.f32 0.0, %v2084
          %v2086 = vpop.f32.mrb[0].mxu0
          %v2087 = vpop.f32.mrb[0].mxu0
          %v2088 = vadd.f32 0.0, %v2087
          %v2089 = vpop.f32.mrb[0].mxu0
          %2090 = vmatprep.mubr.bf16.mxu0 0
          %2091 = vmatmul.mubr.bf16.gmra.mrb[0].mxu0 %v1973
          %v2092 = vpop.f32.mrb[0].mxu0
          %v2093 = vadd.f32 0.0, %v2092
          %v2094 = vpop.f32.mrb[0].mxu0
          %v2095 = vpop.f32.mrb[0].mxu0
          %v2096 = vadd.f32 0.0, %v2095
          %v2097 = vpop.f32.mrb[0].mxu0
          %2098 = vmatprep.mubr.bf16.mxu0 0
          %2099 = vmatmul.mubr.bf16.gmra.mrb[0].mxu0 %v1974
          %v2100 = vpop.f32.mrb[0].mxu0
          %v2101 = vadd.f32 0.0, %v2100
          %v2102 = vpop.f32.mrb[0].mxu0
          %v2103 = vpop.f32.mrb[0].mxu0
          %v2104 = vadd.f32 0.0, %v2103
          %v2105 = vpop.f32.mrb[0].mxu0
          %2106 = vmatprep.mubr.bf16.mxu0 0
          %2107 = vmatmul.mubr.bf16.gmra.mrb[0].mxu0 %v1975
          %v2108 = vpop.f32.mrb[0].mxu0
          %v2109 = vadd.f32 0.0, %v2108
          %v2110 = vpop.f32.mrb[0].mxu0
          %v2111 = vpop.f32.mrb[0].mxu0
          %v2112 = vadd.f32 0.0, %v2111
          %v2113 = vpop.f32.mrb[0].mxu0
          %2114 = vmatprep.mubr.bf16.mxu0 0
          %2115 = vmatmul.mubr.bf16.gmra.mrb[0].mxu0 %v1976
          %v2116 = vpop.f32.mrb[0].mxu0
          %v2117 = vadd.f32 0.0, %v2116
          %v2118 = vpop.f32.mrb[0].mxu0
          %v2119 = vpop.f32.mrb[0].mxu0
          %v2120 = vadd.f32 0.0, %v2119
          %v2121 = vpop.f32.mrb[0].mxu0
          %2122 = vmatprep.mubr.bf16.mxu0 0
          %2123 = vmatmul.mubr.bf16.gmra.mrb[0].mxu0 %v1977
          %v2124 = vpop.f32.mrb[0].mxu0
          %v2125 = vadd.f32 0.0, %v2124
          %v2126 = vpop.f32.mrb[0].mxu0
          %v2127 = vpop.f32.mrb[0].mxu0
          %v2128 = vadd.f32 0.0, %v2127
          %v2129 = vpop.f32.mrb[0].mxu0
          %2130 = vdwg.mxu0
          %v2131 = vadd.f32 %v1922, %v2069
          %v2132 = vadd.f32 %v1923, %v2072
          %v2133 = vadd.f32 %v1924, %v2077
          %v2134 = vadd.f32 %v1925, %v2080
          %v2135 = vadd.f32 %v1926, %v2085
          %v2136 = vadd.f32 %v1927, %v2088
          %v2137 = vadd.f32 %v1928, %v2093
          %v2138 = vadd.f32 %v1929, %v2096
          %v2139 = vadd.f32 %v1930, %v2101
          %v2140 = vadd.f32 %v1931, %v2104
          %v2141 = vadd.f32 %v1932, %v2109
          %v2142 = vadd.f32 %v1933, %v2112
          %v2143 = vadd.f32 %v1934, %v2117
          %v2144 = vadd.f32 %v1935, %v2120
          %v2145 = vadd.f32 %v1936, %v2125
          %v2146 = vadd.f32 %v1937, %v2128
          %2147 = vst [vmem:[#allocation2] sm:$0xff] %v2131
          %2148 = vst [vmem:[#allocation2 + $0x8] sm:$0xff] %v2132
          %2149 = vst [vmem:[#allocation2 + $0x10] sm:$0xff] %v2133
          %2150 = vst [vmem:[#allocation2 + $0x18] sm:$0xff] %v2134
          %2151 = vst [vmem:[#allocation2 + $0x20] sm:$0xff] %v2135
          %2152 = vst [vmem:[#allocation2 + $0x28] sm:$0xff] %v2136
          %2153 = vst [vmem:[#allocation2 + $0x30] sm:$0xff] %v2137
          %2154 = vst [vmem:[#allocation2 + $0x38] sm:$0xff] %v2138
          %2155 = vst [vmem:[#allocation2 + $0x40] sm:$0xff] %v2139
          %2156 = vst [vmem:[#allocation2 + $0x48] sm:$0xff] %v2140
          %2157 = vst [vmem:[#allocation2 + $0x50] sm:$0xff] %v2141
          %2158 = vst [vmem:[#allocation2 + $0x58] sm:$0xff] %v2142
          %2159 = vst [vmem:[#allocation2 + $0x60] sm:$0xff] %v2143
          %2160 = vst [vmem:[#allocation2 + $0x68] sm:$0xff] %v2144
          %2161 = vst [vmem:[#allocation2 + $0x70] sm:$0xff] %v2145
          %2162 = vst [vmem:[#allocation2 + $0x78] sm:$0xff] %v2146
        $region52: #{tpu_custom_call.1} parent=27 // pred_fallthru
          _
        %p2163 = scmp.eq.s32.totalorder %s24, 5
        // Predicated region
        $region53: #{tpu_custom_call.1} parent=27 // pred_check
          %p2164 = pneg %p2163
        $region54: #{tpu_custom_call.1} parent=27 // pred_check_branch
          %2166 = sbr.rel (%p2164) target = $region56
        $region55: #{tpu_custom_call.1} parent=27 // pred_region
          %s2167 = scalar_lea.vmem %s202, 8
          %v2168 = vld [vmem:[%s2167] sm:$0xe]
          %v2169 = vld [vmem:[%s2167 + $0x4] sm:$0x1]
          %v2170 = vld [vmem:[%s2167 + $0x8] sm:$0xe]
          %v2171 = vld [vmem:[%s2167 + $0xc] sm:$0x1]
          %v2172 = vld [vmem:[%s2167 + $0x10] sm:$0xe]
          %v2173 = vld [vmem:[%s2167 + $0x14] sm:$0x1]
          %v2174 = vld [vmem:[%s2167 + $0x18] sm:$0xe]
          %v2175 = vld [vmem:[%s2167 + $0x1c] sm:$0x1]
          %v2176 = vld [vmem:[%s2167 + $0x20] sm:$0xe]
          %v2177 = vld [vmem:[%s2167 + $0x24] sm:$0x1]
          %v2178 = vld [vmem:[%s2167 + $0x28] sm:$0xe]
          %v2179 = vld [vmem:[%s2167 + $0x2c] sm:$0x1]
          %v2180 = vld [vmem:[%s2167 + $0x30] sm:$0xe]
          %v2181 = vld [vmem:[%s2167 + $0x34] sm:$0x1]
          %v2182 = vld [vmem:[%s2167 + $0x38] sm:$0xe]
          %v2183 = vld [vmem:[%s2167 + $0x3c] sm:$0x1]
          %v2184 = vld [vmem:[%s2167 + $0x50] sm:$0xe]
          %v2185 = vld [vmem:[%s2167 + $0x54] sm:$0x1]
          %v2186 = vld [vmem:[%s2167 + $0x58] sm:$0xe]
          %v2187 = vld [vmem:[%s2167 + $0x5c] sm:$0x1]
          %v2188 = vld [vmem:[%s2167 + $0x60] sm:$0xe]
          %v2189 = vld [vmem:[%s2167 + $0x64] sm:$0x1]
          %v2190 = vld [vmem:[%s2167 + $0x68] sm:$0xe]
          %v2191 = vld [vmem:[%s2167 + $0x6c] sm:$0x1]
          %v2192 = vld [vmem:[%s2167 + $0x70] sm:$0xe]
          %v2193 = vld [vmem:[%s2167 + $0x74] sm:$0x1]
          %v2194 = vld [vmem:[%s2167 + $0x78] sm:$0xe]
          %v2195 = vld [vmem:[%s2167 + $0x7c] sm:$0x1]
          %v2196 = vld [vmem:[%s2167 + $0x80] sm:$0xe]
          %v2197 = vld [vmem:[%s2167 + $0x84] sm:$0x1]
          %v2198 = vld [vmem:[%s2167 + $0x88] sm:$0xe]
          %v2199 = vld [vmem:[%s2167 + $0x8c] sm:$0x1]
          %vm2232 = vcmask 1042432
          %vm2233 = vcmask 1046532
          %vm2234 = vmor %vm2232, %vm2233
          %v2235 = vrot.slane %v2168, 5
          %v2236 = vrot.slane %v2235, 4
          %v2237 = vrot.slane %v2169, 5
          %v2238 = vsel %vm2234, %v2236, %v2237
          %v2239 = vrot.slane %v2170, 5
          %v2240 = vrot.slane %v2239, 4
          %v2241 = vrot.slane %v2171, 5
          %v2242 = vsel %vm2234, %v2240, %v2241
          %v2243 = vrot.slane %v2172, 5
          %v2244 = vrot.slane %v2243, 4
          %v2245 = vrot.slane %v2173, 5
          %v2246 = vsel %vm2234, %v2244, %v2245
          %v2247 = vrot.slane %v2174, 5
          %v2248 = vrot.slane %v2247, 4
          %v2249 = vrot.slane %v2175, 5
          %v2250 = vsel %vm2234, %v2248, %v2249
          %v2251 = vrot.slane %v2176, 5
          %v2252 = vrot.slane %v2251, 4
          %v2253 = vrot.slane %v2177, 5
          %v2254 = vsel %vm2234, %v2252, %v2253
          %v2255 = vrot.slane %v2178, 5
          %v2256 = vrot.slane %v2255, 4
          %v2257 = vrot.slane %v2179, 5
          %v2258 = vsel %vm2234, %v2256, %v2257
          %v2259 = vrot.slane %v2180, 5
          %v2260 = vrot.slane %v2259, 4
          %v2261 = vrot.slane %v2181, 5
          %v2262 = vsel %vm2234, %v2260, %v2261
          %v2263 = vrot.slane %v2182, 5
          %v2264 = vrot.slane %v2263, 4
          %v2265 = vrot.slane %v2183, 5
          %v2266 = vsel %vm2234, %v2264, %v2265
          %v2267 = vrot.slane %v2184, 5
          %v2268 = vrot.slane %v2267, 4
          %v2269 = vrot.slane %v2185, 5
          %v2270 = vsel %vm2234, %v2268, %v2269
          %v2271 = vrot.slane %v2186, 5
          %v2272 = vrot.slane %v2271, 4
          %v2273 = vrot.slane %v2187, 5
          %v2274 = vsel %vm2234, %v2272, %v2273
          %v2275 = vrot.slane %v2188, 5
          %v2276 = vrot.slane %v2275, 4
          %v2277 = vrot.slane %v2189, 5
          %v2278 = vsel %vm2234, %v2276, %v2277
          %v2279 = vrot.slane %v2190, 5
          %v2280 = vrot.slane %v2279, 4
          %v2281 = vrot.slane %v2191, 5
          %v2282 = vsel %vm2234, %v2280, %v2281
          %v2283 = vrot.slane %v2192, 5
          %v2284 = vrot.slane %v2283, 4
          %v2285 = vrot.slane %v2193, 5
          %v2286 = vsel %vm2234, %v2284, %v2285
          %v2287 = vrot.slane %v2194, 5
          %v2288 = vrot.slane %v2287, 4
          %v2289 = vrot.slane %v2195, 5
          %v2290 = vsel %vm2234, %v2288, %v2289
          %v2291 = vrot.slane %v2196, 5
          %v2292 = vrot.slane %v2291, 4
          %v2293 = vrot.slane %v2197, 5
          %v2294 = vsel %vm2234, %v2292, %v2293
          %v2295 = vrot.slane %v2198, 5
          %v2296 = vrot.slane %v2295, 4
          %v2297 = vrot.slane %v2199, 5
          %v2298 = vsel %vm2234, %v2296, %v2297
          %v2299 = vld [vmem:[#allocation2] sm:$0xff]
          %v2300 = vld [vmem:[#allocation2 + $0x8] sm:$0xff]
          %v2301 = vld [vmem:[#allocation2 + $0x10] sm:$0xff]
          %v2302 = vld [vmem:[#allocation2 + $0x18] sm:$0xff]
          %v2303 = vld [vmem:[#allocation2 + $0x20] sm:$0xff]
          %v2304 = vld [vmem:[#allocation2 + $0x28] sm:$0xff]
          %v2305 = vld [vmem:[#allocation2 + $0x30] sm:$0xff]
          %v2306 = vld [vmem:[#allocation2 + $0x38] sm:$0xff]
          %v2307 = vld [vmem:[#allocation2 + $0x40] sm:$0xff]
          %v2308 = vld [vmem:[#allocation2 + $0x48] sm:$0xff]
          %v2309 = vld [vmem:[#allocation2 + $0x50] sm:$0xff]
          %v2310 = vld [vmem:[#allocation2 + $0x58] sm:$0xff]
          %v2311 = vld [vmem:[#allocation2 + $0x60] sm:$0xff]
          %v2312 = vld [vmem:[#allocation2 + $0x68] sm:$0xff]
          %v2313 = vld [vmem:[#allocation2 + $0x70] sm:$0xff]
          %v2314 = vld [vmem:[#allocation2 + $0x78] sm:$0xff]
          %v2315 = vld [vmem:[%s175] sm:$0xf]
          %v2316 = vld [vmem:[%s175 + $0x4] sm:$0xf]
          %v2317 = vld [vmem:[%s175 + $0x8] sm:$0xf]
          %v2318 = vld [vmem:[%s175 + $0xc] sm:$0xf]
          %v2319 = vld [vmem:[%s175 + $0x10] sm:$0xf]
          %v2320 = vld [vmem:[%s175 + $0x14] sm:$0xf]
          %v2321 = vld [vmem:[%s175 + $0x18] sm:$0xf]
          %v2322 = vld [vmem:[%s175 + $0x1c] sm:$0xf]
          %v2323 = vld [vmem:[%s175 + $0x20] sm:$0xf]
          %v2324 = vld [vmem:[%s175 + $0x24] sm:$0xf]
          %v2325 = vld [vmem:[%s175 + $0x28] sm:$0xf]
          %v2326 = vld [vmem:[%s175 + $0x2c] sm:$0xf]
          %v2327 = vld [vmem:[%s175 + $0x30] sm:$0xf]
          %v2328 = vld [vmem:[%s175 + $0x34] sm:$0xf]
          %v2329 = vld [vmem:[%s175 + $0x38] sm:$0xf]
          %v2330 = vld [vmem:[%s175 + $0x3c] sm:$0xf]
          %v2331 = vunpack.c.l.b16 %v2238
          %v2332 = vunpack.c.l.b16 %v2242
          %v2333 = vunpack.c.l.b16 %v2246
          %v2334 = vunpack.c.l.b16 %v2250
          %v2335 = vunpack.c.l.b16 %v2254
          %v2336 = vunpack.c.l.b16 %v2258
          %v2337 = vunpack.c.l.b16 %v2262
          %v2338 = vunpack.c.l.b16 %v2266
          %v2339 = vunpack.c.l.b16 %v2270
          %v2340 = vunpack.c.l.b16 %v2274
          %v2341 = vunpack.c.l.b16 %v2278
          %v2342 = vunpack.c.l.b16 %v2282
          %v2343 = vunpack.c.l.b16 %v2286
          %v2344 = vunpack.c.l.b16 %v2290
          %v2345 = vunpack.c.l.b16 %v2294
          %v2346 = vunpack.c.l.b16 %v2298
          %v2347 = vpack.c.b16 %v2332, %v2331
          %v2348 = vpack.c.b16 %v2334, %v2333
          %v2349 = vpack.c.b16 %v2336, %v2335
          %v2350 = vpack.c.b16 %v2338, %v2337
          %v2351 = vpack.c.b16 %v2340, %v2339
          %v2352 = vpack.c.b16 %v2342, %v2341
          %v2353 = vpack.c.b16 %v2344, %v2343
          %v2354 = vpack.c.b16 %v2346, %v2345
          %v2379 = vunpack.c.l.b16 %v2315
          %v2380 = vunpack.c.l.b16 %v2316
          %v2381 = vunpack.c.l.b16 %v2317
          %v2382 = vunpack.c.l.b16 %v2318
          %v2383 = vunpack.c.l.b16 %v2319
          %v2384 = vunpack.c.l.b16 %v2320
          %v2385 = vunpack.c.l.b16 %v2321
          %v2386 = vunpack.c.l.b16 %v2322
          %v2387 = vunpack.c.l.b16 %v2323
          %v2388 = vunpack.c.l.b16 %v2324
          %v2389 = vunpack.c.l.b16 %v2325
          %v2390 = vunpack.c.l.b16 %v2326
          %v2391 = vunpack.c.l.b16 %v2327
          %v2392 = vunpack.c.l.b16 %v2328
          %v2393 = vunpack.c.l.b16 %v2329
          %v2394 = vunpack.c.l.b16 %v2330
          %v2395 = vpack.c.b16 %v2380, %v2379
          %v2396 = vpack.c.b16 %v2382, %v2381
          %v2397 = vpack.c.b16 %v2384, %v2383
          %v2398 = vpack.c.b16 %v2386, %v2385
          %v2399 = vpack.c.b16 %v2388, %v2387
          %v2400 = vpack.c.b16 %v2390, %v2389
          %v2401 = vpack.c.b16 %v2392, %v2391
          %v2402 = vpack.c.b16 %v2394, %v2393
          %2411 = vmatprep.subr.bf16.mxu0 0
          %2412 = vmatpush1.bf16.msra.mxu0 %v2395
          %2413 = vmatprep.subr.bf16.mxu0 0
          %2414 = vmatpush1.bf16.msra.mxu0 %v2396
          %2415 = vmatprep.subr.bf16.mxu0 0
          %2416 = vmatpush1.bf16.msra.mxu0 %v2397
          %2417 = vmatprep.subr.bf16.mxu0 0
          %2418 = vmatpush1.bf16.msra.mxu0 %v2398
          %2419 = vmatprep.subr.bf16.mxu0 0
          %2420 = vmatpush1.bf16.msra.mxu0 %v2399
          %2421 = vmatprep.subr.bf16.mxu0 0
          %2422 = vmatpush1.bf16.msra.mxu0 %v2400
          %2423 = vmatprep.subr.bf16.mxu0 0
          %2424 = vmatpush1.bf16.msra.mxu0 %v2401
          %2425 = vmatprep.subr.bf16.mxu0 0
          %2426 = vmatpush1.bf16.msra.mxu0 %v2402
          %2427 = vmatprep.subr.bf16.mxu0 0
          %2428 = vmatpush1.bf16.msra.mxu0 0
          %2429 = vmatprep.subr.bf16.mxu0 0
          %2430 = vmatpush1.bf16.msra.mxu0 0
          %2431 = vmatprep.subr.bf16.mxu0 0
          %2432 = vmatpush1.bf16.msra.mxu0 0
          %2433 = vmatprep.subr.bf16.mxu0 0
          %2434 = vmatpush1.bf16.msra.mxu0 0
          %2435 = vmatprep.subr.bf16.mxu0 0
          %2436 = vmatpush1.bf16.msra.mxu0 0
          %2437 = vmatprep.subr.bf16.mxu0 0
          %2438 = vmatpush1.bf16.msra.mxu0 0
          %2439 = vmatprep.subr.bf16.mxu0 0
          %2440 = vmatpush1.bf16.msra.mxu0 0
          %2441 = vmatprep.subr.bf16.mxu0 0
          %2442 = vmatpush1.bf16.msra.mxu0 0
          %2443 = vmatprep.mubr.bf16.mxu0 0
          %2444 = vmatmul.mubr.bf16.gmra.mrb[0].mxu0 %v2347
          %v2445 = vpop.f32.mrb[0].mxu0
          %v2446 = vadd.f32 0.0, %v2445
          %v2447 = vpop.f32.mrb[0].mxu0
          %v2448 = vpop.f32.mrb[0].mxu0
          %v2449 = vadd.f32 0.0, %v2448
          %v2450 = vpop.f32.mrb[0].mxu0
          %2451 = vmatprep.mubr.bf16.mxu0 0
          %2452 = vmatmul.mubr.bf16.gmra.mrb[0].mxu0 %v2348
          %v2453 = vpop.f32.mrb[0].mxu0
          %v2454 = vadd.f32 0.0, %v2453
          %v2455 = vpop.f32.mrb[0].mxu0
          %v2456 = vpop.f32.mrb[0].mxu0
          %v2457 = vadd.f32 0.0, %v2456
          %v2458 = vpop.f32.mrb[0].mxu0
          %2459 = vmatprep.mubr.bf16.mxu0 0
          %2460 = vmatmul.mubr.bf16.gmra.mrb[0].mxu0 %v2349
          %v2461 = vpop.f32.mrb[0].mxu0
          %v2462 = vadd.f32 0.0, %v2461
          %v2463 = vpop.f32.mrb[0].mxu0
          %v2464 = vpop.f32.mrb[0].mxu0
          %v2465 = vadd.f32 0.0, %v2464
          %v2466 = vpop.f32.mrb[0].mxu0
          %2467 = vmatprep.mubr.bf16.mxu0 0
          %2468 = vmatmul.mubr.bf16.gmra.mrb[0].mxu0 %v2350
          %v2469 = vpop.f32.mrb[0].mxu0
          %v2470 = vadd.f32 0.0, %v2469
          %v2471 = vpop.f32.mrb[0].mxu0
          %v2472 = vpop.f32.mrb[0].mxu0
          %v2473 = vadd.f32 0.0, %v2472
          %v2474 = vpop.f32.mrb[0].mxu0
          %2475 = vmatprep.mubr.bf16.mxu0 0
          %2476 = vmatmul.mubr.bf16.gmra.mrb[0].mxu0 %v2351
          %v2477 = vpop.f32.mrb[0].mxu0
          %v2478 = vadd.f32 0.0, %v2477
          %v2479 = vpop.f32.mrb[0].mxu0
          %v2480 = vpop.f32.mrb[0].mxu0
          %v2481 = vadd.f32 0.0, %v2480
          %v2482 = vpop.f32.mrb[0].mxu0
          %2483 = vmatprep.mubr.bf16.mxu0 0
          %2484 = vmatmul.mubr.bf16.gmra.mrb[0].mxu0 %v2352
          %v2485 = vpop.f32.mrb[0].mxu0
          %v2486 = vadd.f32 0.0, %v2485
          %v2487 = vpop.f32.mrb[0].mxu0
          %v2488 = vpop.f32.mrb[0].mxu0
          %v2489 = vadd.f32 0.0, %v2488
          %v2490 = vpop.f32.mrb[0].mxu0
          %2491 = vmatprep.mubr.bf16.mxu0 0
          %2492 = vmatmul.mubr.bf16.gmra.mrb[0].mxu0 %v2353
          %v2493 = vpop.f32.mrb[0].mxu0
          %v2494 = vadd.f32 0.0, %v2493
          %v2495 = vpop.f32.mrb[0].mxu0
          %v2496 = vpop.f32.mrb[0].mxu0
          %v2497 = vadd.f32 0.0, %v2496
          %v2498 = vpop.f32.mrb[0].mxu0
          %2499 = vmatprep.mubr.bf16.mxu0 0
          %2500 = vmatmul.mubr.bf16.gmra.mrb[0].mxu0 %v2354
          %v2501 = vpop.f32.mrb[0].mxu0
          %v2502 = vadd.f32 0.0, %v2501
          %v2503 = vpop.f32.mrb[0].mxu0
          %v2504 = vpop.f32.mrb[0].mxu0
          %v2505 = vadd.f32 0.0, %v2504
          %v2506 = vpop.f32.mrb[0].mxu0
          %2507 = vdwg.mxu0
          %v2508 = vadd.f32 %v2299, %v2446
          %v2509 = vadd.f32 %v2300, %v2449
          %v2510 = vadd.f32 %v2301, %v2454
          %v2511 = vadd.f32 %v2302, %v2457
          %v2512 = vadd.f32 %v2303, %v2462
          %v2513 = vadd.f32 %v2304, %v2465
          %v2514 = vadd.f32 %v2305, %v2470
          %v2515 = vadd.f32 %v2306, %v2473
          %v2516 = vadd.f32 %v2307, %v2478
          %v2517 = vadd.f32 %v2308, %v2481
          %v2518 = vadd.f32 %v2309, %v2486
          %v2519 = vadd.f32 %v2310, %v2489
          %v2520 = vadd.f32 %v2311, %v2494
          %v2521 = vadd.f32 %v2312, %v2497
          %v2522 = vadd.f32 %v2313, %v2502
          %v2523 = vadd.f32 %v2314, %v2505
          %2524 = vst [vmem:[#allocation2] sm:$0xff] %v2508
          %2525 = vst [vmem:[#allocation2 + $0x8] sm:$0xff] %v2509
          %2526 = vst [vmem:[#allocation2 + $0x10] sm:$0xff] %v2510
          %2527 = vst [vmem:[#allocation2 + $0x18] sm:$0xff] %v2511
          %2528 = vst [vmem:[#allocation2 + $0x20] sm:$0xff] %v2512
          %2529 = vst [vmem:[#allocation2 + $0x28] sm:$0xff] %v2513
          %2530 = vst [vmem:[#allocation2 + $0x30] sm:$0xff] %v2514
          %2531 = vst [vmem:[#allocation2 + $0x38] sm:$0xff] %v2515
          %2532 = vst [vmem:[#allocation2 + $0x40] sm:$0xff] %v2516
          %2533 = vst [vmem:[#allocation2 + $0x48] sm:$0xff] %v2517
          %2534 = vst [vmem:[#allocation2 + $0x50] sm:$0xff] %v2518
          %2535 = vst [vmem:[#allocation2 + $0x58] sm:$0xff] %v2519
          %2536 = vst [vmem:[#allocation2 + $0x60] sm:$0xff] %v2520
          %2537 = vst [vmem:[#allocation2 + $0x68] sm:$0xff] %v2521
          %2538 = vst [vmem:[#allocation2 + $0x70] sm:$0xff] %v2522
          %2539 = vst [vmem:[#allocation2 + $0x78] sm:$0xff] %v2523
        $region56: #{tpu_custom_call.1} parent=27 // pred_fallthru
          _
        %p2540 = scmp.eq.s32.totalorder %s24, 6
        // Predicated region
        $region57: #{tpu_custom_call.1} parent=27 // pred_check
          %p2541 = pneg %p2540
        $region58: #{tpu_custom_call.1} parent=27 // pred_check_branch
          %2543 = sbr.rel (%p2541) target = $region60
        $region59: #{tpu_custom_call.1} parent=27 // pred_region
          %s2544 = scalar_lea.vmem %s202, 16
          %v2545 = vld [vmem:[%s2544] sm:$0xf]
          %v2546 = vld [vmem:[%s2544 + $0x8] sm:$0xf]
          %v2547 = vld [vmem:[%s2544 + $0x10] sm:$0xf]
          %v2548 = vld [vmem:[%s2544 + $0x18] sm:$0xf]
          %v2549 = vld [vmem:[%s2544 + $0x20] sm:$0xf]
          %v2550 = vld [vmem:[%s2544 + $0x28] sm:$0xf]
          %v2551 = vld [vmem:[%s2544 + $0x30] sm:$0xf]
          %v2552 = vld [vmem:[%s2544 + $0x38] sm:$0xf]
          %v2553 = vld [vmem:[%s2544 + $0x50] sm:$0xf]
          %v2554 = vld [vmem:[%s2544 + $0x58] sm:$0xf]
          %v2555 = vld [vmem:[%s2544 + $0x60] sm:$0xf]
          %v2556 = vld [vmem:[%s2544 + $0x68] sm:$0xf]
          %v2557 = vld [vmem:[%s2544 + $0x70] sm:$0xf]
          %v2558 = vld [vmem:[%s2544 + $0x78] sm:$0xf]
          %v2559 = vld [vmem:[%s2544 + $0x80] sm:$0xf]
          %v2560 = vld [vmem:[%s2544 + $0x88] sm:$0xf]
          %v2561 = vld [vmem:[#allocation2] sm:$0xff]
          %v2562 = vld [vmem:[#allocation2 + $0x8] sm:$0xff]
          %v2563 = vld [vmem:[#allocation2 + $0x10] sm:$0xff]
          %v2564 = vld [vmem:[#allocation2 + $0x18] sm:$0xff]
          %v2565 = vld [vmem:[#allocation2 + $0x20] sm:$0xff]
          %v2566 = vld [vmem:[#allocation2 + $0x28] sm:$0xff]
          %v2567 = vld [vmem:[#allocation2 + $0x30] sm:$0xff]
          %v2568 = vld [vmem:[#allocation2 + $0x38] sm:$0xff]
          %v2569 = vld [vmem:[#allocation2 + $0x40] sm:$0xff]
          %v2570 = vld [vmem:[#allocation2 + $0x48] sm:$0xff]
          %v2571 = vld [vmem:[#allocation2 + $0x50] sm:$0xff]
          %v2572 = vld [vmem:[#allocation2 + $0x58] sm:$0xff]
          %v2573 = vld [vmem:[#allocation2 + $0x60] sm:$0xff]
          %v2574 = vld [vmem:[#allocation2 + $0x68] sm:$0xff]
          %v2575 = vld [vmem:[#allocation2 + $0x70] sm:$0xff]
          %v2576 = vld [vmem:[#allocation2 + $0x78] sm:$0xff]
          %v2577 = vld [vmem:[%s175] sm:$0xf]
          %v2578 = vld [vmem:[%s175 + $0x4] sm:$0xf]
          %v2579 = vld [vmem:[%s175 + $0x8] sm:$0xf]
          %v2580 = vld [vmem:[%s175 + $0xc] sm:$0xf]
          %v2581 = vld [vmem:[%s175 + $0x10] sm:$0xf]
          %v2582 = vld [vmem:[%s175 + $0x14] sm:$0xf]
          %v2583 = vld [vmem:[%s175 + $0x18] sm:$0xf]
          %v2584 = vld [vmem:[%s175 + $0x1c] sm:$0xf]
          %v2585 = vld [vmem:[%s175 + $0x20] sm:$0xf]
          %v2586 = vld [vmem:[%s175 + $0x24] sm:$0xf]
          %v2587 = vld [vmem:[%s175 + $0x28] sm:$0xf]
          %v2588 = vld [vmem:[%s175 + $0x2c] sm:$0xf]
          %v2589 = vld [vmem:[%s175 + $0x30] sm:$0xf]
          %v2590 = vld [vmem:[%s175 + $0x34] sm:$0xf]
          %v2591 = vld [vmem:[%s175 + $0x38] sm:$0xf]
          %v2592 = vld [vmem:[%s175 + $0x3c] sm:$0xf]
          %v2609 = vunpack.c.l.b16 %v2545
          %v2610 = vunpack.c.l.b16 %v2546
          %v2611 = vunpack.c.l.b16 %v2547
          %v2612 = vunpack.c.l.b16 %v2548
          %v2613 = vunpack.c.l.b16 %v2549
          %v2614 = vunpack.c.l.b16 %v2550
          %v2615 = vunpack.c.l.b16 %v2551
          %v2616 = vunpack.c.l.b16 %v2552
          %v2617 = vunpack.c.l.b16 %v2553
          %v2618 = vunpack.c.l.b16 %v2554
          %v2619 = vunpack.c.l.b16 %v2555
          %v2620 = vunpack.c.l.b16 %v2556
          %v2621 = vunpack.c.l.b16 %v2557
          %v2622 = vunpack.c.l.b16 %v2558
          %v2623 = vunpack.c.l.b16 %v2559
          %v2624 = vunpack.c.l.b16 %v2560
          %v2625 = vpack.c.b16 %v2610, %v2609
          %v2626 = vpack.c.b16 %v2612, %v2611
          %v2627 = vpack.c.b16 %v2614, %v2613
          %v2628 = vpack.c.b16 %v2616, %v2615
          %v2629 = vpack.c.b16 %v2618, %v2617
          %v2630 = vpack.c.b16 %v2620, %v2619
          %v2631 = vpack.c.b16 %v2622, %v2621
          %v2632 = vpack.c.b16 %v2624, %v2623
          %v2657 = vunpack.c.l.b16 %v2577
          %v2658 = vunpack.c.l.b16 %v2578
          %v2659 = vunpack.c.l.b16 %v2579
          %v2660 = vunpack.c.l.b16 %v2580
          %v2661 = vunpack.c.l.b16 %v2581
          %v2662 = vunpack.c.l.b16 %v2582
          %v2663 = vunpack.c.l.b16 %v2583
          %v2664 = vunpack.c.l.b16 %v2584
          %v2665 = vunpack.c.l.b16 %v2585
          %v2666 = vunpack.c.l.b16 %v2586
          %v2667 = vunpack.c.l.b16 %v2587
          %v2668 = vunpack.c.l.b16 %v2588
          %v2669 = vunpack.c.l.b16 %v2589
          %v2670 = vunpack.c.l.b16 %v2590
          %v2671 = vunpack.c.l.b16 %v2591
          %v2672 = vunpack.c.l.b16 %v2592
          %v2673 = vpack.c.b16 %v2658, %v2657
          %v2674 = vpack.c.b16 %v2660, %v2659
          %v2675 = vpack.c.b16 %v2662, %v2661
          %v2676 = vpack.c.b16 %v2664, %v2663
          %v2677 = vpack.c.b16 %v2666, %v2665
          %v2678 = vpack.c.b16 %v2668, %v2667
          %v2679 = vpack.c.b16 %v2670, %v2669
          %v2680 = vpack.c.b16 %v2672, %v2671
          %2689 = vmatprep.subr.bf16.mxu0 0
          %2690 = vmatpush1.bf16.msra.mxu0 %v2673
          %2691 = vmatprep.subr.bf16.mxu0 0
          %2692 = vmatpush1.bf16.msra.mxu0 %v2674
          %2693 = vmatprep.subr.bf16.mxu0 0
          %2694 = vmatpush1.bf16.msra.mxu0 %v2675
          %2695 = vmatprep.subr.bf16.mxu0 0
          %2696 = vmatpush1.bf16.msra.mxu0 %v2676
          %2697 = vmatprep.subr.bf16.mxu0 0
          %2698 = vmatpush1.bf16.msra.mxu0 %v2677
          %2699 = vmatprep.subr.bf16.mxu0 0
          %2700 = vmatpush1.bf16.msra.mxu0 %v2678
          %2701 = vmatprep.subr.bf16.mxu0 0
          %2702 = vmatpush1.bf16.msra.mxu0 %v2679
          %2703 = vmatprep.subr.bf16.mxu0 0
          %2704 = vmatpush1.bf16.msra.mxu0 %v2680
          %2705 = vmatprep.subr.bf16.mxu0 0
          %2706 = vmatpush1.bf16.msra.mxu0 0
          %2707 = vmatprep.subr.bf16.mxu0 0
          %2708 = vmatpush1.bf16.msra.mxu0 0
          %2709 = vmatprep.subr.bf16.mxu0 0
          %2710 = vmatpush1.bf16.msra.mxu0 0
          %2711 = vmatprep.subr.bf16.mxu0 0
          %2712 = vmatpush1.bf16.msra.mxu0 0
          %2713 = vmatprep.subr.bf16.mxu0 0
          %2714 = vmatpush1.bf16.msra.mxu0 0
          %2715 = vmatprep.subr.bf16.mxu0 0
          %2716 = vmatpush1.bf16.msra.mxu0 0
          %2717 = vmatprep.subr.bf16.mxu0 0
          %2718 = vmatpush1.bf16.msra.mxu0 0
          %2719 = vmatprep.subr.bf16.mxu0 0
          %2720 = vmatpush1.bf16.msra.mxu0 0
          %2721 = vmatprep.mubr.bf16.mxu0 0
          %2722 = vmatmul.mubr.bf16.gmra.mrb[0].mxu0 %v2625
          %v2723 = vpop.f32.mrb[0].mxu0
          %v2724 = vadd.f32 0.0, %v2723
          %v2725 = vpop.f32.mrb[0].mxu0
          %v2726 = vpop.f32.mrb[0].mxu0
          %v2727 = vadd.f32 0.0, %v2726
          %v2728 = vpop.f32.mrb[0].mxu0
          %2729 = vmatprep.mubr.bf16.mxu0 0
          %2730 = vmatmul.mubr.bf16.gmra.mrb[0].mxu0 %v2626
          %v2731 = vpop.f32.mrb[0].mxu0
          %v2732 = vadd.f32 0.0, %v2731
          %v2733 = vpop.f32.mrb[0].mxu0
          %v2734 = vpop.f32.mrb[0].mxu0
          %v2735 = vadd.f32 0.0, %v2734
          %v2736 = vpop.f32.mrb[0].mxu0
          %2737 = vmatprep.mubr.bf16.mxu0 0
          %2738 = vmatmul.mubr.bf16.gmra.mrb[0].mxu0 %v2627
          %v2739 = vpop.f32.mrb[0].mxu0
          %v2740 = vadd.f32 0.0, %v2739
          %v2741 = vpop.f32.mrb[0].mxu0
          %v2742 = vpop.f32.mrb[0].mxu0
          %v2743 = vadd.f32 0.0, %v2742
          %v2744 = vpop.f32.mrb[0].mxu0
          %2745 = vmatprep.mubr.bf16.mxu0 0
          %2746 = vmatmul.mubr.bf16.gmra.mrb[0].mxu0 %v2628
          %v2747 = vpop.f32.mrb[0].mxu0
          %v2748 = vadd.f32 0.0, %v2747
          %v2749 = vpop.f32.mrb[0].mxu0
          %v2750 = vpop.f32.mrb[0].mxu0
          %v2751 = vadd.f32 0.0, %v2750
          %v2752 = vpop.f32.mrb[0].mxu0
          %2753 = vmatprep.mubr.bf16.mxu0 0
          %2754 = vmatmul.mubr.bf16.gmra.mrb[0].mxu0 %v2629
          %v2755 = vpop.f32.mrb[0].mxu0
          %v2756 = vadd.f32 0.0, %v2755
          %v2757 = vpop.f32.mrb[0].mxu0
          %v2758 = vpop.f32.mrb[0].mxu0
          %v2759 = vadd.f32 0.0, %v2758
          %v2760 = vpop.f32.mrb[0].mxu0
          %2761 = vmatprep.mubr.bf16.mxu0 0
          %2762 = vmatmul.mubr.bf16.gmra.mrb[0].mxu0 %v2630
          %v2763 = vpop.f32.mrb[0].mxu0
          %v2764 = vadd.f32 0.0, %v2763
          %v2765 = vpop.f32.mrb[0].mxu0
          %v2766 = vpop.f32.mrb[0].mxu0
          %v2767 = vadd.f32 0.0, %v2766
          %v2768 = vpop.f32.mrb[0].mxu0
          %2769 = vmatprep.mubr.bf16.mxu0 0
          %2770 = vmatmul.mubr.bf16.gmra.mrb[0].mxu0 %v2631
          %v2771 = vpop.f32.mrb[0].mxu0
          %v2772 = vadd.f32 0.0, %v2771
          %v2773 = vpop.f32.mrb[0].mxu0
          %v2774 = vpop.f32.mrb[0].mxu0
          %v2775 = vadd.f32 0.0, %v2774
          %v2776 = vpop.f32.mrb[0].mxu0
          %2777 = vmatprep.mubr.bf16.mxu0 0
          %2778 = vmatmul.mubr.bf16.gmra.mrb[0].mxu0 %v2632
          %v2779 = vpop.f32.mrb[0].mxu0
          %v2780 = vadd.f32 0.0, %v2779
          %v2781 = vpop.f32.mrb[0].mxu0
          %v2782 = vpop.f32.mrb[0].mxu0
          %v2783 = vadd.f32 0.0, %v2782
          %v2784 = vpop.f32.mrb[0].mxu0
          %2785 = vdwg.mxu0
          %v2786 = vadd.f32 %v2561, %v2724
          %v2787 = vadd.f32 %v2562, %v2727
          %v2788 = vadd.f32 %v2563, %v2732
          %v2789 = vadd.f32 %v2564, %v2735
          %v2790 = vadd.f32 %v2565, %v2740
          %v2791 = vadd.f32 %v2566, %v2743
          %v2792 = vadd.f32 %v2567, %v2748
          %v2793 = vadd.f32 %v2568, %v2751
          %v2794 = vadd.f32 %v2569, %v2756
          %v2795 = vadd.f32 %v2570, %v2759
          %v2796 = vadd.f32 %v2571, %v2764
          %v2797 = vadd.f32 %v2572, %v2767
          %v2798 = vadd.f32 %v2573, %v2772
          %v2799 = vadd.f32 %v2574, %v2775
          %v2800 = vadd.f32 %v2575, %v2780
          %v2801 = vadd.f32 %v2576, %v2783
          %2802 = vst [vmem:[#allocation2] sm:$0xff] %v2786
          %2803 = vst [vmem:[#allocation2 + $0x8] sm:$0xff] %v2787
          %2804 = vst [vmem:[#allocation2 + $0x10] sm:$0xff] %v2788
          %2805 = vst [vmem:[#allocation2 + $0x18] sm:$0xff] %v2789
          %2806 = vst [vmem:[#allocation2 + $0x20] sm:$0xff] %v2790
          %2807 = vst [vmem:[#allocation2 + $0x28] sm:$0xff] %v2791
          %2808 = vst [vmem:[#allocation2 + $0x30] sm:$0xff] %v2792
          %2809 = vst [vmem:[#allocation2 + $0x38] sm:$0xff] %v2793
          %2810 = vst [vmem:[#allocation2 + $0x40] sm:$0xff] %v2794
          %2811 = vst [vmem:[#allocation2 + $0x48] sm:$0xff] %v2795
          %2812 = vst [vmem:[#allocation2 + $0x50] sm:$0xff] %v2796
          %2813 = vst [vmem:[#allocation2 + $0x58] sm:$0xff] %v2797
          %2814 = vst [vmem:[#allocation2 + $0x60] sm:$0xff] %v2798
          %2815 = vst [vmem:[#allocation2 + $0x68] sm:$0xff] %v2799
          %2816 = vst [vmem:[#allocation2 + $0x70] sm:$0xff] %v2800
          %2817 = vst [vmem:[#allocation2 + $0x78] sm:$0xff] %v2801
        $region60: #{tpu_custom_call.1} parent=27 // pred_fallthru
          _
        %p2818 = scmp.eq.s32.totalorder %s24, 7
        // Predicated region
        $region61: #{tpu_custom_call.1} parent=27 // pred_check
          %p2819 = pneg %p2818
        $region62: #{tpu_custom_call.1} parent=27 // pred_check_branch
          %2821 = sbr.rel (%p2819) target = $region64
        $region63: #{tpu_custom_call.1} parent=27 // pred_region
          %s2822 = scalar_lea.vmem %s202, 16
          %v2823 = vld [vmem:[%s2822] sm:$0xf]
          %v2824 = vld [vmem:[%s2822 + $0x4] sm:$0x1]
          %v2825 = vld [vmem:[%s2822 + $0x8] sm:$0xf]
          %v2826 = vld [vmem:[%s2822 + $0xc] sm:$0x1]
          %v2827 = vld [vmem:[%s2822 + $0x10] sm:$0xf]
          %v2828 = vld [vmem:[%s2822 + $0x14] sm:$0x1]
          %v2829 = vld [vmem:[%s2822 + $0x18] sm:$0xf]
          %v2830 = vld [vmem:[%s2822 + $0x1c] sm:$0x1]
          %v2831 = vld [vmem:[%s2822 + $0x20] sm:$0xf]
          %v2832 = vld [vmem:[%s2822 + $0x24] sm:$0x1]
          %v2833 = vld [vmem:[%s2822 + $0x28] sm:$0xf]
          %v2834 = vld [vmem:[%s2822 + $0x2c] sm:$0x1]
          %v2835 = vld [vmem:[%s2822 + $0x30] sm:$0xf]
          %v2836 = vld [vmem:[%s2822 + $0x34] sm:$0x1]
          %v2837 = vld [vmem:[%s2822 + $0x38] sm:$0xf]
          %v2838 = vld [vmem:[%s2822 + $0x3c] sm:$0x1]
          %v2839 = vld [vmem:[%s2822 + $0x50] sm:$0xf]
          %v2840 = vld [vmem:[%s2822 + $0x54] sm:$0x1]
          %v2841 = vld [vmem:[%s2822 + $0x58] sm:$0xf]
          %v2842 = vld [vmem:[%s2822 + $0x5c] sm:$0x1]
          %v2843 = vld [vmem:[%s2822 + $0x60] sm:$0xf]
          %v2844 = vld [vmem:[%s2822 + $0x64] sm:$0x1]
          %v2845 = vld [vmem:[%s2822 + $0x68] sm:$0xf]
          %v2846 = vld [vmem:[%s2822 + $0x6c] sm:$0x1]
          %v2847 = vld [vmem:[%s2822 + $0x70] sm:$0xf]
          %v2848 = vld [vmem:[%s2822 + $0x74] sm:$0x1]
          %v2849 = vld [vmem:[%s2822 + $0x78] sm:$0xf]
          %v2850 = vld [vmem:[%s2822 + $0x7c] sm:$0x1]
          %v2851 = vld [vmem:[%s2822 + $0x80] sm:$0xf]
          %v2852 = vld [vmem:[%s2822 + $0x84] sm:$0x1]
          %v2853 = vld [vmem:[%s2822 + $0x88] sm:$0xf]
          %v2854 = vld [vmem:[%s2822 + $0x8c] sm:$0x1]
          %vm2855 = vsmask.f32 3328
          %vm2856 = vsmask.f32 7440
          %vm2857 = vmor %vm2855, %vm2856
          %v2859 = vshrl.u32 %v2823, 16
          %v2861 = vrot.slane %v2859, 4
          %v2862 = vshll.u32 %v2823, 16
          %v2864 = vrot.slane %v2862, 5
          %v2865 = vor.u32 %v2861, %v2864
          %v2866 = vrot.slane %v2865, 4
          %v2868 = vshll.u32 %v2824, 16
          %v2870 = vrot.slane %v2868, 5
          %v2871 = vsel %vm2857, %v2866, %v2870
          %v2873 = vshrl.u32 %v2825, 16
          %v2875 = vrot.slane %v2873, 4
          %v2876 = vshll.u32 %v2825, 16
          %v2878 = vrot.slane %v2876, 5
          %v2879 = vor.u32 %v2875, %v2878
          %v2880 = vrot.slane %v2879, 4
          %v2882 = vshll.u32 %v2826, 16
          %v2884 = vrot.slane %v2882, 5
          %v2885 = vsel %vm2857, %v2880, %v2884
          %v2887 = vshrl.u32 %v2827, 16
          %v2889 = vrot.slane %v2887, 4
          %v2890 = vshll.u32 %v2827, 16
          %v2892 = vrot.slane %v2890, 5
          %v2893 = vor.u32 %v2889, %v2892
          %v2894 = vrot.slane %v2893, 4
          %v2896 = vshll.u32 %v2828, 16
          %v2898 = vrot.slane %v2896, 5
          %v2899 = vsel %vm2857, %v2894, %v2898
          %v2901 = vshrl.u32 %v2829, 16
          %v2903 = vrot.slane %v2901, 4
          %v2904 = vshll.u32 %v2829, 16
          %v2906 = vrot.slane %v2904, 5
          %v2907 = vor.u32 %v2903, %v2906
          %v2908 = vrot.slane %v2907, 4
          %v2910 = vshll.u32 %v2830, 16
          %v2912 = vrot.slane %v2910, 5
          %v2913 = vsel %vm2857, %v2908, %v2912
          %v2915 = vshrl.u32 %v2831, 16
          %v2917 = vrot.slane %v2915, 4
          %v2918 = vshll.u32 %v2831, 16
          %v2920 = vrot.slane %v2918, 5
          %v2921 = vor.u32 %v2917, %v2920
          %v2922 = vrot.slane %v2921, 4
          %v2924 = vshll.u32 %v2832, 16
          %v2926 = vrot.slane %v2924, 5
          %v2927 = vsel %vm2857, %v2922, %v2926
          %v2929 = vshrl.u32 %v2833, 16
          %v2931 = vrot.slane %v2929, 4
          %v2932 = vshll.u32 %v2833, 16
          %v2934 = vrot.slane %v2932, 5
          %v2935 = vor.u32 %v2931, %v2934
          %v2936 = vrot.slane %v2935, 4
          %v2938 = vshll.u32 %v2834, 16
          %v2940 = vrot.slane %v2938, 5
          %v2941 = vsel %vm2857, %v2936, %v2940
          %v2943 = vshrl.u32 %v2835, 16
          %v2945 = vrot.slane %v2943, 4
          %v2946 = vshll.u32 %v2835, 16
          %v2948 = vrot.slane %v2946, 5
          %v2949 = vor.u32 %v2945, %v2948
          %v2950 = vrot.slane %v2949, 4
          %v2952 = vshll.u32 %v2836, 16
          %v2954 = vrot.slane %v2952, 5
          %v2955 = vsel %vm2857, %v2950, %v2954
          %v2957 = vshrl.u32 %v2837, 16
          %v2959 = vrot.slane %v2957, 4
          %v2960 = vshll.u32 %v2837, 16
          %v2962 = vrot.slane %v2960, 5
          %v2963 = vor.u32 %v2959, %v2962
          %v2964 = vrot.slane %v2963, 4
          %v2966 = vshll.u32 %v2838, 16
          %v2968 = vrot.slane %v2966, 5
          %v2969 = vsel %vm2857, %v2964, %v2968
          %v2971 = vshrl.u32 %v2839, 16
          %v2973 = vrot.slane %v2971, 4
          %v2974 = vshll.u32 %v2839, 16
          %v2976 = vrot.slane %v2974, 5
          %v2977 = vor.u32 %v2973, %v2976
          %v2978 = vrot.slane %v2977, 4
          %v2980 = vshll.u32 %v2840, 16
          %v2982 = vrot.slane %v2980, 5
          %v2983 = vsel %vm2857, %v2978, %v2982
          %v2985 = vshrl.u32 %v2841, 16
          %v2987 = vrot.slane %v2985, 4
          %v2988 = vshll.u32 %v2841, 16
          %v2990 = vrot.slane %v2988, 5
          %v2991 = vor.u32 %v2987, %v2990
          %v2992 = vrot.slane %v2991, 4
          %v2994 = vshll.u32 %v2842, 16
          %v2996 = vrot.slane %v2994, 5
          %v2997 = vsel %vm2857, %v2992, %v2996
          %v2999 = vshrl.u32 %v2843, 16
          %v3001 = vrot.slane %v2999, 4
          %v3002 = vshll.u32 %v2843, 16
          %v3004 = vrot.slane %v3002, 5
          %v3005 = vor.u32 %v3001, %v3004
          %v3006 = vrot.slane %v3005, 4
          %v3008 = vshll.u32 %v2844, 16
          %v3010 = vrot.slane %v3008, 5
          %v3011 = vsel %vm2857, %v3006, %v3010
          %v3013 = vshrl.u32 %v2845, 16
          %v3015 = vrot.slane %v3013, 4
          %v3016 = vshll.u32 %v2845, 16
          %v3018 = vrot.slane %v3016, 5
          %v3019 = vor.u32 %v3015, %v3018
          %v3020 = vrot.slane %v3019, 4
          %v3022 = vshll.u32 %v2846, 16
          %v3024 = vrot.slane %v3022, 5
          %v3025 = vsel %vm2857, %v3020, %v3024
          %v3027 = vshrl.u32 %v2847, 16
          %v3029 = vrot.slane %v3027, 4
          %v3030 = vshll.u32 %v2847, 16
          %v3032 = vrot.slane %v3030, 5
          %v3033 = vor.u32 %v3029, %v3032
          %v3034 = vrot.slane %v3033, 4
          %v3036 = vshll.u32 %v2848, 16
          %v3038 = vrot.slane %v3036, 5
          %v3039 = vsel %vm2857, %v3034, %v3038
          %v3041 = vshrl.u32 %v2849, 16
          %v3043 = vrot.slane %v3041, 4
          %v3044 = vshll.u32 %v2849, 16
          %v3046 = vrot.slane %v3044, 5
          %v3047 = vor.u32 %v3043, %v3046
          %v3048 = vrot.slane %v3047, 4
          %v3050 = vshll.u32 %v2850, 16
          %v3052 = vrot.slane %v3050, 5
          %v3053 = vsel %vm2857, %v3048, %v3052
          %v3055 = vshrl.u32 %v2851, 16
          %v3057 = vrot.slane %v3055, 4
          %v3058 = vshll.u32 %v2851, 16
          %v3060 = vrot.slane %v3058, 5
          %v3061 = vor.u32 %v3057, %v3060
          %v3062 = vrot.slane %v3061, 4
          %v3064 = vshll.u32 %v2852, 16
          %v3066 = vrot.slane %v3064, 5
          %v3067 = vsel %vm2857, %v3062, %v3066
          %v3069 = vshrl.u32 %v2853, 16
          %v3071 = vrot.slane %v3069, 4
          %v3072 = vshll.u32 %v2853, 16
          %v3074 = vrot.slane %v3072, 5
          %v3075 = vor.u32 %v3071, %v3074
          %v3076 = vrot.slane %v3075, 4
          %v3078 = vshll.u32 %v2854, 16
          %v3080 = vrot.slane %v3078, 5
          %v3081 = vsel %vm2857, %v3076, %v3080
          %v3082 = vld [vmem:[#allocation2] sm:$0xff]
          %v3083 = vld [vmem:[#allocation2 + $0x8] sm:$0xff]
          %v3084 = vld [vmem:[#allocation2 + $0x10] sm:$0xff]
          %v3085 = vld [vmem:[#allocation2 + $0x18] sm:$0xff]
          %v3086 = vld [vmem:[#allocation2 + $0x20] sm:$0xff]
          %v3087 = vld [vmem:[#allocation2 + $0x28] sm:$0xff]
          %v3088 = vld [vmem:[#allocation2 + $0x30] sm:$0xff]
          %v3089 = vld [vmem:[#allocation2 + $0x38] sm:$0xff]
          %v3090 = vld [vmem:[#allocation2 + $0x40] sm:$0xff]
          %v3091 = vld [vmem:[#allocation2 + $0x48] sm:$0xff]
          %v3092 = vld [vmem:[#allocation2 + $0x50] sm:$0xff]
          %v3093 = vld [vmem:[#allocation2 + $0x58] sm:$0xff]
          %v3094 = vld [vmem:[#allocation2 + $0x60] sm:$0xff]
          %v3095 = vld [vmem:[#allocation2 + $0x68] sm:$0xff]
          %v3096 = vld [vmem:[#allocation2 + $0x70] sm:$0xff]
          %v3097 = vld [vmem:[#allocation2 + $0x78] sm:$0xff]
          %v3098 = vld [vmem:[%s175] sm:$0xf]
          %v3099 = vld [vmem:[%s175 + $0x4] sm:$0xf]
          %v3100 = vld [vmem:[%s175 + $0x8] sm:$0xf]
          %v3101 = vld [vmem:[%s175 + $0xc] sm:$0xf]
          %v3102 = vld [vmem:[%s175 + $0x10] sm:$0xf]
          %v3103 = vld [vmem:[%s175 + $0x14] sm:$0xf]
          %v3104 = vld [vmem:[%s175 + $0x18] sm:$0xf]
          %v3105 = vld [vmem:[%s175 + $0x1c] sm:$0xf]
          %v3106 = vld [vmem:[%s175 + $0x20] sm:$0xf]
          %v3107 = vld [vmem:[%s175 + $0x24] sm:$0xf]
          %v3108 = vld [vmem:[%s175 + $0x28] sm:$0xf]
          %v3109 = vld [vmem:[%s175 + $0x2c] sm:$0xf]
          %v3110 = vld [vmem:[%s175 + $0x30] sm:$0xf]
          %v3111 = vld [vmem:[%s175 + $0x34] sm:$0xf]
          %v3112 = vld [vmem:[%s175 + $0x38] sm:$0xf]
          %v3113 = vld [vmem:[%s175 + $0x3c] sm:$0xf]
          %v3114 = vunpack.c.l.b16 %v2871
          %v3115 = vunpack.c.l.b16 %v2885
          %v3116 = vunpack.c.l.b16 %v2899
          %v3117 = vunpack.c.l.b16 %v2913
          %v3118 = vunpack.c.l.b16 %v2927
          %v3119 = vunpack.c.l.b16 %v2941
          %v3120 = vunpack.c.l.b16 %v2955
          %v3121 = vunpack.c.l.b16 %v2969
          %v3122 = vunpack.c.l.b16 %v2983
          %v3123 = vunpack.c.l.b16 %v2997
          %v3124 = vunpack.c.l.b16 %v3011
          %v3125 = vunpack.c.l.b16 %v3025
          %v3126 = vunpack.c.l.b16 %v3039
          %v3127 = vunpack.c.l.b16 %v3053
          %v3128 = vunpack.c.l.b16 %v3067
          %v3129 = vunpack.c.l.b16 %v3081
          %v3130 = vpack.c.b16 %v3115, %v3114
          %v3131 = vpack.c.b16 %v3117, %v3116
          %v3132 = vpack.c.b16 %v3119, %v3118
          %v3133 = vpack.c.b16 %v3121, %v3120
          %v3134 = vpack.c.b16 %v3123, %v3122
          %v3135 = vpack.c.b16 %v3125, %v3124
          %v3136 = vpack.c.b16 %v3127, %v3126
          %v3137 = vpack.c.b16 %v3129, %v3128
          %v3162 = vunpack.c.l.b16 %v3098
          %v3163 = vunpack.c.l.b16 %v3099
          %v3164 = vunpack.c.l.b16 %v3100
          %v3165 = vunpack.c.l.b16 %v3101
          %v3166 = vunpack.c.l.b16 %v3102
          %v3167 = vunpack.c.l.b16 %v3103
          %v3168 = vunpack.c.l.b16 %v3104
          %v3169 = vunpack.c.l.b16 %v3105
          %v3170 = vunpack.c.l.b16 %v3106
          %v3171 = vunpack.c.l.b16 %v3107
          %v3172 = vunpack.c.l.b16 %v3108
          %v3173 = vunpack.c.l.b16 %v3109
          %v3174 = vunpack.c.l.b16 %v3110
          %v3175 = vunpack.c.l.b16 %v3111
          %v3176 = vunpack.c.l.b16 %v3112
          %v3177 = vunpack.c.l.b16 %v3113
          %v3178 = vpack.c.b16 %v3163, %v3162
          %v3179 = vpack.c.b16 %v3165, %v3164
          %v3180 = vpack.c.b16 %v3167, %v3166
          %v3181 = vpack.c.b16 %v3169, %v3168
          %v3182 = vpack.c.b16 %v3171, %v3170
          %v3183 = vpack.c.b16 %v3173, %v3172
          %v3184 = vpack.c.b16 %v3175, %v3174
          %v3185 = vpack.c.b16 %v3177, %v3176
          %3194 = vmatprep.subr.bf16.mxu0 0
          %3195 = vmatpush1.bf16.msra.mxu0 %v3178
          %3196 = vmatprep.subr.bf16.mxu0 0
          %3197 = vmatpush1.bf16.msra.mxu0 %v3179
          %3198 = vmatprep.subr.bf16.mxu0 0
          %3199 = vmatpush1.bf16.msra.mxu0 %v3180
          %3200 = vmatprep.subr.bf16.mxu0 0
          %3201 = vmatpush1.bf16.msra.mxu0 %v3181
          %3202 = vmatprep.subr.bf16.mxu0 0
          %3203 = vmatpush1.bf16.msra.mxu0 %v3182
          %3204 = vmatprep.subr.bf16.mxu0 0
          %3205 = vmatpush1.bf16.msra.mxu0 %v3183
          %3206 = vmatprep.subr.bf16.mxu0 0
          %3207 = vmatpush1.bf16.msra.mxu0 %v3184
          %3208 = vmatprep.subr.bf16.mxu0 0
          %3209 = vmatpush1.bf16.msra.mxu0 %v3185
          %3210 = vmatprep.subr.bf16.mxu0 0
          %3211 = vmatpush1.bf16.msra.mxu0 0
          %3212 = vmatprep.subr.bf16.mxu0 0
          %3213 = vmatpush1.bf16.msra.mxu0 0
          %3214 = vmatprep.subr.bf16.mxu0 0
          %3215 = vmatpush1.bf16.msra.mxu0 0
          %3216 = vmatprep.subr.bf16.mxu0 0
          %3217 = vmatpush1.bf16.msra.mxu0 0
          %3218 = vmatprep.subr.bf16.mxu0 0
          %3219 = vmatpush1.bf16.msra.mxu0 0
          %3220 = vmatprep.subr.bf16.mxu0 0
          %3221 = vmatpush1.bf16.msra.mxu0 0
          %3222 = vmatprep.subr.bf16.mxu0 0
          %3223 = vmatpush1.bf16.msra.mxu0 0
          %3224 = vmatprep.subr.bf16.mxu0 0
          %3225 = vmatpush1.bf16.msra.mxu0 0
          %3226 = vmatprep.mubr.bf16.mxu0 0
          %3227 = vmatmul.mubr.bf16.gmra.mrb[0].mxu0 %v3130
          %v3228 = vpop.f32.mrb[0].mxu0
          %v3229 = vadd.f32 0.0, %v3228
          %v3230 = vpop.f32.mrb[0].mxu0
          %v3231 = vpop.f32.mrb[0].mxu0
          %v3232 = vadd.f32 0.0, %v3231
          %v3233 = vpop.f32.mrb[0].mxu0
          %3234 = vmatprep.mubr.bf16.mxu0 0
          %3235 = vmatmul.mubr.bf16.gmra.mrb[0].mxu0 %v3131
          %v3236 = vpop.f32.mrb[0].mxu0
          %v3237 = vadd.f32 0.0, %v3236
          %v3238 = vpop.f32.mrb[0].mxu0
          %v3239 = vpop.f32.mrb[0].mxu0
          %v3240 = vadd.f32 0.0, %v3239
          %v3241 = vpop.f32.mrb[0].mxu0
          %3242 = vmatprep.mubr.bf16.mxu0 0
          %3243 = vmatmul.mubr.bf16.gmra.mrb[0].mxu0 %v3132
          %v3244 = vpop.f32.mrb[0].mxu0
          %v3245 = vadd.f32 0.0, %v3244
          %v3246 = vpop.f32.mrb[0].mxu0
          %v3247 = vpop.f32.mrb[0].mxu0
          %v3248 = vadd.f32 0.0, %v3247
          %v3249 = vpop.f32.mrb[0].mxu0
          %3250 = vmatprep.mubr.bf16.mxu0 0
          %3251 = vmatmul.mubr.bf16.gmra.mrb[0].mxu0 %v3133
          %v3252 = vpop.f32.mrb[0].mxu0
          %v3253 = vadd.f32 0.0, %v3252
          %v3254 = vpop.f32.mrb[0].mxu0
          %v3255 = vpop.f32.mrb[0].mxu0
          %v3256 = vadd.f32 0.0, %v3255
          %v3257 = vpop.f32.mrb[0].mxu0
          %3258 = vmatprep.mubr.bf16.mxu0 0
          %3259 = vmatmul.mubr.bf16.gmra.mrb[0].mxu0 %v3134
          %v3260 = vpop.f32.mrb[0].mxu0
          %v3261 = vadd.f32 0.0, %v3260
          %v3262 = vpop.f32.mrb[0].mxu0
          %v3263 = vpop.f32.mrb[0].mxu0
          %v3264 = vadd.f32 0.0, %v3263
          %v3265 = vpop.f32.mrb[0].mxu0
          %3266 = vmatprep.mubr.bf16.mxu0 0
          %3267 = vmatmul.mubr.bf16.gmra.mrb[0].mxu0 %v3135
          %v3268 = vpop.f32.mrb[0].mxu0
          %v3269 = vadd.f32 0.0, %v3268
          %v3270 = vpop.f32.mrb[0].mxu0
          %v3271 = vpop.f32.mrb[0].mxu0
          %v3272 = vadd.f32 0.0, %v3271
          %v3273 = vpop.f32.mrb[0].mxu0
          %3274 = vmatprep.mubr.bf16.mxu0 0
          %3275 = vmatmul.mubr.bf16.gmra.mrb[0].mxu0 %v3136
          %v3276 = vpop.f32.mrb[0].mxu0
          %v3277 = vadd.f32 0.0, %v3276
          %v3278 = vpop.f32.mrb[0].mxu0
          %v3279 = vpop.f32.mrb[0].mxu0
          %v3280 = vadd.f32 0.0, %v3279
          %v3281 = vpop.f32.mrb[0].mxu0
          %3282 = vmatprep.mubr.bf16.mxu0 0
          %3283 = vmatmul.mubr.bf16.gmra.mrb[0].mxu0 %v3137
          %v3284 = vpop.f32.mrb[0].mxu0
          %v3285 = vadd.f32 0.0, %v3284
          %v3286 = vpop.f32.mrb[0].mxu0
          %v3287 = vpop.f32.mrb[0].mxu0
          %v3288 = vadd.f32 0.0, %v3287
          %v3289 = vpop.f32.mrb[0].mxu0
          %3290 = vdwg.mxu0
          %v3291 = vadd.f32 %v3082, %v3229
          %v3292 = vadd.f32 %v3083, %v3232
          %v3293 = vadd.f32 %v3084, %v3237
          %v3294 = vadd.f32 %v3085, %v3240
          %v3295 = vadd.f32 %v3086, %v3245
          %v3296 = vadd.f32 %v3087, %v3248
          %v3297 = vadd.f32 %v3088, %v3253
          %v3298 = vadd.f32 %v3089, %v3256
          %v3299 = vadd.f32 %v3090, %v3261
          %v3300 = vadd.f32 %v3091, %v3264
          %v3301 = vadd.f32 %v3092, %v3269
          %v3302 = vadd.f32 %v3093, %v3272
          %v3303 = vadd.f32 %v3094, %v3277
          %v3304 = vadd.f32 %v3095, %v3280
          %v3305 = vadd.f32 %v3096, %v3285
          %v3306 = vadd.f32 %v3097, %v3288
          %3307 = vst [vmem:[#allocation2] sm:$0xff] %v3291
          %3308 = vst [vmem:[#allocation2 + $0x8] sm:$0xff] %v3292
          %3309 = vst [vmem:[#allocation2 + $0x10] sm:$0xff] %v3293
          %3310 = vst [vmem:[#allocation2 + $0x18] sm:$0xff] %v3294
          %3311 = vst [vmem:[#allocation2 + $0x20] sm:$0xff] %v3295
          %3312 = vst [vmem:[#allocation2 + $0x28] sm:$0xff] %v3296
          %3313 = vst [vmem:[#allocation2 + $0x30] sm:$0xff] %v3297
          %3314 = vst [vmem:[#allocation2 + $0x38] sm:$0xff] %v3298
          %3315 = vst [vmem:[#allocation2 + $0x40] sm:$0xff] %v3299
          %3316 = vst [vmem:[#allocation2 + $0x48] sm:$0xff] %v3300
          %3317 = vst [vmem:[#allocation2 + $0x50] sm:$0xff] %v3301
          %3318 = vst [vmem:[#allocation2 + $0x58] sm:$0xff] %v3302
          %3319 = vst [vmem:[#allocation2 + $0x60] sm:$0xff] %v3303
          %3320 = vst [vmem:[#allocation2 + $0x68] sm:$0xff] %v3304
          %3321 = vst [vmem:[#allocation2 + $0x70] sm:$0xff] %v3305
          %3322 = vst [vmem:[#allocation2 + $0x78] sm:$0xff] %v3306
        $region64: #{tpu_custom_call.1} parent=27 // pred_fallthru
          _
        %p3323 = scmp.eq.s32.totalorder %s24, 8
        // Predicated region
        $region65: #{tpu_custom_call.1} parent=27 // pred_check
          %p3324 = pneg %p3323
        $region66: #{tpu_custom_call.1} parent=27 // pred_check_branch
          %3326 = sbr.rel (%p3324) target = $region68
        $region67: #{tpu_custom_call.1} parent=27 // pred_region
          %s3327 = scalar_lea.vmem %s202, 16
          %v3328 = vld [vmem:[%s3327] sm:$0xe]
          %v3329 = vld [vmem:[%s3327 + $0x4] sm:$0x1]
          %v3330 = vld [vmem:[%s3327 + $0x8] sm:$0xe]
          %v3331 = vld [vmem:[%s3327 + $0xc] sm:$0x1]
          %v3332 = vld [vmem:[%s3327 + $0x10] sm:$0xe]
          %v3333 = vld [vmem:[%s3327 + $0x14] sm:$0x1]
          %v3334 = vld [vmem:[%s3327 + $0x18] sm:$0xe]
          %v3335 = vld [vmem:[%s3327 + $0x1c] sm:$0x1]
          %v3336 = vld [vmem:[%s3327 + $0x20] sm:$0xe]
          %v3337 = vld [vmem:[%s3327 + $0x24] sm:$0x1]
          %v3338 = vld [vmem:[%s3327 + $0x28] sm:$0xe]
          %v3339 = vld [vmem:[%s3327 + $0x2c] sm:$0x1]
          %v3340 = vld [vmem:[%s3327 + $0x30] sm:$0xe]
          %v3341 = vld [vmem:[%s3327 + $0x34] sm:$0x1]
          %v3342 = vld [vmem:[%s3327 + $0x38] sm:$0xe]
          %v3343 = vld [vmem:[%s3327 + $0x3c] sm:$0x1]
          %v3344 = vld [vmem:[%s3327 + $0x50] sm:$0xe]
          %v3345 = vld [vmem:[%s3327 + $0x54] sm:$0x1]
          %v3346 = vld [vmem:[%s3327 + $0x58] sm:$0xe]
          %v3347 = vld [vmem:[%s3327 + $0x5c] sm:$0x1]
          %v3348 = vld [vmem:[%s3327 + $0x60] sm:$0xe]
          %v3349 = vld [vmem:[%s3327 + $0x64] sm:$0x1]
          %v3350 = vld [vmem:[%s3327 + $0x68] sm:$0xe]
          %v3351 = vld [vmem:[%s3327 + $0x6c] sm:$0x1]
          %v3352 = vld [vmem:[%s3327 + $0x70] sm:$0xe]
          %v3353 = vld [vmem:[%s3327 + $0x74] sm:$0x1]
          %v3354 = vld [vmem:[%s3327 + $0x78] sm:$0xe]
          %v3355 = vld [vmem:[%s3327 + $0x7c] sm:$0x1]
          %v3356 = vld [vmem:[%s3327 + $0x80] sm:$0xe]
          %v3357 = vld [vmem:[%s3327 + $0x84] sm:$0x1]
          %v3358 = vld [vmem:[%s3327 + $0x88] sm:$0xe]
          %v3359 = vld [vmem:[%s3327 + $0x8c] sm:$0x1]
          %vm3392 = vcmask 1042432
          %vm3393 = vcmask 1046532
          %vm3394 = vmor %vm3392, %vm3393
          %v3395 = vrot.slane %v3328, 5
          %v3396 = vrot.slane %v3395, 4
          %v3397 = vrot.slane %v3329, 5
          %v3398 = vsel %vm3394, %v3396, %v3397
          %v3399 = vrot.slane %v3330, 5
          %v3400 = vrot.slane %v3399, 4
          %v3401 = vrot.slane %v3331, 5
          %v3402 = vsel %vm3394, %v3400, %v3401
          %v3403 = vrot.slane %v3332, 5
          %v3404 = vrot.slane %v3403, 4
          %v3405 = vrot.slane %v3333, 5
          %v3406 = vsel %vm3394, %v3404, %v3405
          %v3407 = vrot.slane %v3334, 5
          %v3408 = vrot.slane %v3407, 4
          %v3409 = vrot.slane %v3335, 5
          %v3410 = vsel %vm3394, %v3408, %v3409
          %v3411 = vrot.slane %v3336, 5
          %v3412 = vrot.slane %v3411, 4
          %v3413 = vrot.slane %v3337, 5
          %v3414 = vsel %vm3394, %v3412, %v3413
          %v3415 = vrot.slane %v3338, 5
          %v3416 = vrot.slane %v3415, 4
          %v3417 = vrot.slane %v3339, 5
          %v3418 = vsel %vm3394, %v3416, %v3417
          %v3419 = vrot.slane %v3340, 5
          %v3420 = vrot.slane %v3419, 4
          %v3421 = vrot.slane %v3341, 5
          %v3422 = vsel %vm3394, %v3420, %v3421
          %v3423 = vrot.slane %v3342, 5
          %v3424 = vrot.slane %v3423, 4
          %v3425 = vrot.slane %v3343, 5
          %v3426 = vsel %vm3394, %v3424, %v3425
          %v3427 = vrot.slane %v3344, 5
          %v3428 = vrot.slane %v3427, 4
          %v3429 = vrot.slane %v3345, 5
          %v3430 = vsel %vm3394, %v3428, %v3429
          %v3431 = vrot.slane %v3346, 5
          %v3432 = vrot.slane %v3431, 4
          %v3433 = vrot.slane %v3347, 5
          %v3434 = vsel %vm3394, %v3432, %v3433
          %v3435 = vrot.slane %v3348, 5
          %v3436 = vrot.slane %v3435, 4
          %v3437 = vrot.slane %v3349, 5
          %v3438 = vsel %vm3394, %v3436, %v3437
          %v3439 = vrot.slane %v3350, 5
          %v3440 = vrot.slane %v3439, 4
          %v3441 = vrot.slane %v3351, 5
          %v3442 = vsel %vm3394, %v3440, %v3441
          %v3443 = vrot.slane %v3352, 5
          %v3444 = vrot.slane %v3443, 4
          %v3445 = vrot.slane %v3353, 5
          %v3446 = vsel %vm3394, %v3444, %v3445
          %v3447 = vrot.slane %v3354, 5
          %v3448 = vrot.slane %v3447, 4
          %v3449 = vrot.slane %v3355, 5
          %v3450 = vsel %vm3394, %v3448, %v3449
          %v3451 = vrot.slane %v3356, 5
          %v3452 = vrot.slane %v3451, 4
          %v3453 = vrot.slane %v3357, 5
          %v3454 = vsel %vm3394, %v3452, %v3453
          %v3455 = vrot.slane %v3358, 5
          %v3456 = vrot.slane %v3455, 4
          %v3457 = vrot.slane %v3359, 5
          %v3458 = vsel %vm3394, %v3456, %v3457
          %v3459 = vld [vmem:[#allocation2] sm:$0xff]
          %v3460 = vld [vmem:[#allocation2 + $0x8] sm:$0xff]
          %v3461 = vld [vmem:[#allocation2 + $0x10] sm:$0xff]
          %v3462 = vld [vmem:[#allocation2 + $0x18] sm:$0xff]
          %v3463 = vld [vmem:[#allocation2 + $0x20] sm:$0xff]
          %v3464 = vld [vmem:[#allocation2 + $0x28] sm:$0xff]
          %v3465 = vld [vmem:[#allocation2 + $0x30] sm:$0xff]
          %v3466 = vld [vmem:[#allocation2 + $0x38] sm:$0xff]
          %v3467 = vld [vmem:[#allocation2 + $0x40] sm:$0xff]
          %v3468 = vld [vmem:[#allocation2 + $0x48] sm:$0xff]
          %v3469 = vld [vmem:[#allocation2 + $0x50] sm:$0xff]
          %v3470 = vld [vmem:[#allocation2 + $0x58] sm:$0xff]
          %v3471 = vld [vmem:[#allocation2 + $0x60] sm:$0xff]
          %v3472 = vld [vmem:[#allocation2 + $0x68] sm:$0xff]
          %v3473 = vld [vmem:[#allocation2 + $0x70] sm:$0xff]
          %v3474 = vld [vmem:[#allocation2 + $0x78] sm:$0xff]
          %v3475 = vld [vmem:[%s175] sm:$0xf]
          %v3476 = vld [vmem:[%s175 + $0x4] sm:$0xf]
          %v3477 = vld [vmem:[%s175 + $0x8] sm:$0xf]
          %v3478 = vld [vmem:[%s175 + $0xc] sm:$0xf]
          %v3479 = vld [vmem:[%s175 + $0x10] sm:$0xf]
          %v3480 = vld [vmem:[%s175 + $0x14] sm:$0xf]
          %v3481 = vld [vmem:[%s175 + $0x18] sm:$0xf]
          %v3482 = vld [vmem:[%s175 + $0x1c] sm:$0xf]
          %v3483 = vld [vmem:[%s175 + $0x20] sm:$0xf]
          %v3484 = vld [vmem:[%s175 + $0x24] sm:$0xf]
          %v3485 = vld [vmem:[%s175 + $0x28] sm:$0xf]
          %v3486 = vld [vmem:[%s175 + $0x2c] sm:$0xf]
          %v3487 = vld [vmem:[%s175 + $0x30] sm:$0xf]
          %v3488 = vld [vmem:[%s175 + $0x34] sm:$0xf]
          %v3489 = vld [vmem:[%s175 + $0x38] sm:$0xf]
          %v3490 = vld [vmem:[%s175 + $0x3c] sm:$0xf]
          %v3491 = vunpack.c.l.b16 %v3398
          %v3492 = vunpack.c.l.b16 %v3402
          %v3493 = vunpack.c.l.b16 %v3406
          %v3494 = vunpack.c.l.b16 %v3410
          %v3495 = vunpack.c.l.b16 %v3414
          %v3496 = vunpack.c.l.b16 %v3418
          %v3497 = vunpack.c.l.b16 %v3422
          %v3498 = vunpack.c.l.b16 %v3426
          %v3499 = vunpack.c.l.b16 %v3430
          %v3500 = vunpack.c.l.b16 %v3434
          %v3501 = vunpack.c.l.b16 %v3438
          %v3502 = vunpack.c.l.b16 %v3442
          %v3503 = vunpack.c.l.b16 %v3446
          %v3504 = vunpack.c.l.b16 %v3450
          %v3505 = vunpack.c.l.b16 %v3454
          %v3506 = vunpack.c.l.b16 %v3458
          %v3507 = vpack.c.b16 %v3492, %v3491
          %v3508 = vpack.c.b16 %v3494, %v3493
          %v3509 = vpack.c.b16 %v3496, %v3495
          %v3510 = vpack.c.b16 %v3498, %v3497
          %v3511 = vpack.c.b16 %v3500, %v3499
          %v3512 = vpack.c.b16 %v3502, %v3501
          %v3513 = vpack.c.b16 %v3504, %v3503
          %v3514 = vpack.c.b16 %v3506, %v3505
          %v3539 = vunpack.c.l.b16 %v3475
          %v3540 = vunpack.c.l.b16 %v3476
          %v3541 = vunpack.c.l.b16 %v3477
          %v3542 = vunpack.c.l.b16 %v3478
          %v3543 = vunpack.c.l.b16 %v3479
          %v3544 = vunpack.c.l.b16 %v3480
          %v3545 = vunpack.c.l.b16 %v3481
          %v3546 = vunpack.c.l.b16 %v3482
          %v3547 = vunpack.c.l.b16 %v3483
          %v3548 = vunpack.c.l.b16 %v3484
          %v3549 = vunpack.c.l.b16 %v3485
          %v3550 = vunpack.c.l.b16 %v3486
          %v3551 = vunpack.c.l.b16 %v3487
          %v3552 = vunpack.c.l.b16 %v3488
          %v3553 = vunpack.c.l.b16 %v3489
          %v3554 = vunpack.c.l.b16 %v3490
          %v3555 = vpack.c.b16 %v3540, %v3539
          %v3556 = vpack.c.b16 %v3542, %v3541
          %v3557 = vpack.c.b16 %v3544, %v3543
          %v3558 = vpack.c.b16 %v3546, %v3545
          %v3559 = vpack.c.b16 %v3548, %v3547
          %v3560 = vpack.c.b16 %v3550, %v3549
          %v3561 = vpack.c.b16 %v3552, %v3551
          %v3562 = vpack.c.b16 %v3554, %v3553
          %3571 = vmatprep.subr.bf16.mxu0 0
          %3572 = vmatpush1.bf16.msra.mxu0 %v3555
          %3573 = vmatprep.subr.bf16.mxu0 0
          %3574 = vmatpush1.bf16.msra.mxu0 %v3556
          %3575 = vmatprep.subr.bf16.mxu0 0
          %3576 = vmatpush1.bf16.msra.mxu0 %v3557
          %3577 = vmatprep.subr.bf16.mxu0 0
          %3578 = vmatpush1.bf16.msra.mxu0 %v3558
          %3579 = vmatprep.subr.bf16.mxu0 0
          %3580 = vmatpush1.bf16.msra.mxu0 %v3559
          %3581 = vmatprep.subr.bf16.mxu0 0
          %3582 = vmatpush1.bf16.msra.mxu0 %v3560
          %3583 = vmatprep.subr.bf16.mxu0 0
          %3584 = vmatpush1.bf16.msra.mxu0 %v3561
          %3585 = vmatprep.subr.bf16.mxu0 0
          %3586 = vmatpush1.bf16.msra.mxu0 %v3562
          %3587 = vmatprep.subr.bf16.mxu0 0
          %3588 = vmatpush1.bf16.msra.mxu0 0
          %3589 = vmatprep.subr.bf16.mxu0 0
          %3590 = vmatpush1.bf16.msra.mxu0 0
          %3591 = vmatprep.subr.bf16.mxu0 0
          %3592 = vmatpush1.bf16.msra.mxu0 0
          %3593 = vmatprep.subr.bf16.mxu0 0
          %3594 = vmatpush1.bf16.msra.mxu0 0
          %3595 = vmatprep.subr.bf16.mxu0 0
          %3596 = vmatpush1.bf16.msra.mxu0 0
          %3597 = vmatprep.subr.bf16.mxu0 0
          %3598 = vmatpush1.bf16.msra.mxu0 0
          %3599 = vmatprep.subr.bf16.mxu0 0
          %3600 = vmatpush1.bf16.msra.mxu0 0
          %3601 = vmatprep.subr.bf16.mxu0 0
          %3602 = vmatpush1.bf16.msra.mxu0 0
          %3603 = vmatprep.mubr.bf16.mxu0 0
          %3604 = vmatmul.mubr.bf16.gmra.mrb[0].mxu0 %v3507
          %v3605 = vpop.f32.mrb[0].mxu0
          %v3606 = vadd.f32 0.0, %v3605
          %v3607 = vpop.f32.mrb[0].mxu0
          %v3608 = vpop.f32.mrb[0].mxu0
          %v3609 = vadd.f32 0.0, %v3608
          %v3610 = vpop.f32.mrb[0].mxu0
          %3611 = vmatprep.mubr.bf16.mxu0 0
          %3612 = vmatmul.mubr.bf16.gmra.mrb[0].mxu0 %v3508
          %v3613 = vpop.f32.mrb[0].mxu0
          %v3614 = vadd.f32 0.0, %v3613
          %v3615 = vpop.f32.mrb[0].mxu0
          %v3616 = vpop.f32.mrb[0].mxu0
          %v3617 = vadd.f32 0.0, %v3616
          %v3618 = vpop.f32.mrb[0].mxu0
          %3619 = vmatprep.mubr.bf16.mxu0 0
          %3620 = vmatmul.mubr.bf16.gmra.mrb[0].mxu0 %v3509
          %v3621 = vpop.f32.mrb[0].mxu0
          %v3622 = vadd.f32 0.0, %v3621
          %v3623 = vpop.f32.mrb[0].mxu0
          %v3624 = vpop.f32.mrb[0].mxu0
          %v3625 = vadd.f32 0.0, %v3624
          %v3626 = vpop.f32.mrb[0].mxu0
          %3627 = vmatprep.mubr.bf16.mxu0 0
          %3628 = vmatmul.mubr.bf16.gmra.mrb[0].mxu0 %v3510
          %v3629 = vpop.f32.mrb[0].mxu0
          %v3630 = vadd.f32 0.0, %v3629
          %v3631 = vpop.f32.mrb[0].mxu0
          %v3632 = vpop.f32.mrb[0].mxu0
          %v3633 = vadd.f32 0.0, %v3632
          %v3634 = vpop.f32.mrb[0].mxu0
          %3635 = vmatprep.mubr.bf16.mxu0 0
          %3636 = vmatmul.mubr.bf16.gmra.mrb[0].mxu0 %v3511
          %v3637 = vpop.f32.mrb[0].mxu0
          %v3638 = vadd.f32 0.0, %v3637
          %v3639 = vpop.f32.mrb[0].mxu0
          %v3640 = vpop.f32.mrb[0].mxu0
          %v3641 = vadd.f32 0.0, %v3640
          %v3642 = vpop.f32.mrb[0].mxu0
          %3643 = vmatprep.mubr.bf16.mxu0 0
          %3644 = vmatmul.mubr.bf16.gmra.mrb[0].mxu0 %v3512
          %v3645 = vpop.f32.mrb[0].mxu0
          %v3646 = vadd.f32 0.0, %v3645
          %v3647 = vpop.f32.mrb[0].mxu0
          %v3648 = vpop.f32.mrb[0].mxu0
          %v3649 = vadd.f32 0.0, %v3648
          %v3650 = vpop.f32.mrb[0].mxu0
          %3651 = vmatprep.mubr.bf16.mxu0 0
          %3652 = vmatmul.mubr.bf16.gmra.mrb[0].mxu0 %v3513
          %v3653 = vpop.f32.mrb[0].mxu0
          %v3654 = vadd.f32 0.0, %v3653
          %v3655 = vpop.f32.mrb[0].mxu0
          %v3656 = vpop.f32.mrb[0].mxu0
          %v3657 = vadd.f32 0.0, %v3656
          %v3658 = vpop.f32.mrb[0].mxu0
          %3659 = vmatprep.mubr.bf16.mxu0 0
          %3660 = vmatmul.mubr.bf16.gmra.mrb[0].mxu0 %v3514
          %v3661 = vpop.f32.mrb[0].mxu0
          %v3662 = vadd.f32 0.0, %v3661
          %v3663 = vpop.f32.mrb[0].mxu0
          %v3664 = vpop.f32.mrb[0].mxu0
          %v3665 = vadd.f32 0.0, %v3664
          %v3666 = vpop.f32.mrb[0].mxu0
          %3667 = vdwg.mxu0
          %v3668 = vadd.f32 %v3459, %v3606
          %v3669 = vadd.f32 %v3460, %v3609
          %v3670 = vadd.f32 %v3461, %v3614
          %v3671 = vadd.f32 %v3462, %v3617
          %v3672 = vadd.f32 %v3463, %v3622
          %v3673 = vadd.f32 %v3464, %v3625
          %v3674 = vadd.f32 %v3465, %v3630
          %v3675 = vadd.f32 %v3466, %v3633
          %v3676 = vadd.f32 %v3467, %v3638
          %v3677 = vadd.f32 %v3468, %v3641
          %v3678 = vadd.f32 %v3469, %v3646
          %v3679 = vadd.f32 %v3470, %v3649
          %v3680 = vadd.f32 %v3471, %v3654
          %v3681 = vadd.f32 %v3472, %v3657
          %v3682 = vadd.f32 %v3473, %v3662
          %v3683 = vadd.f32 %v3474, %v3665
          %3684 = vst [vmem:[#allocation2] sm:$0xff] %v3668
          %3685 = vst [vmem:[#allocation2 + $0x8] sm:$0xff] %v3669
          %3686 = vst [vmem:[#allocation2 + $0x10] sm:$0xff] %v3670
          %3687 = vst [vmem:[#allocation2 + $0x18] sm:$0xff] %v3671
          %3688 = vst [vmem:[#allocation2 + $0x20] sm:$0xff] %v3672
          %3689 = vst [vmem:[#allocation2 + $0x28] sm:$0xff] %v3673
          %3690 = vst [vmem:[#allocation2 + $0x30] sm:$0xff] %v3674
          %3691 = vst [vmem:[#allocation2 + $0x38] sm:$0xff] %v3675
          %3692 = vst [vmem:[#allocation2 + $0x40] sm:$0xff] %v3676
          %3693 = vst [vmem:[#allocation2 + $0x48] sm:$0xff] %v3677
          %3694 = vst [vmem:[#allocation2 + $0x50] sm:$0xff] %v3678
          %3695 = vst [vmem:[#allocation2 + $0x58] sm:$0xff] %v3679
          %3696 = vst [vmem:[#allocation2 + $0x60] sm:$0xff] %v3680
          %3697 = vst [vmem:[#allocation2 + $0x68] sm:$0xff] %v3681
          %3698 = vst [vmem:[#allocation2 + $0x70] sm:$0xff] %v3682
          %3699 = vst [vmem:[#allocation2 + $0x78] sm:$0xff] %v3683
          %v3700 = vld [vmem:[#allocation2] sm:$0xff]
          %v3701 = vld [vmem:[#allocation2 + $0x8] sm:$0xff]
          %v3702 = vld [vmem:[#allocation2 + $0x10] sm:$0xff]
          %v3703 = vld [vmem:[#allocation2 + $0x18] sm:$0xff]
          %v3704 = vld [vmem:[#allocation2 + $0x20] sm:$0xff]
          %v3705 = vld [vmem:[#allocation2 + $0x28] sm:$0xff]
          %v3706 = vld [vmem:[#allocation2 + $0x30] sm:$0xff]
          %v3707 = vld [vmem:[#allocation2 + $0x38] sm:$0xff]
          %v3708 = vld [vmem:[#allocation2 + $0x40] sm:$0xff]
          %v3709 = vld [vmem:[#allocation2 + $0x48] sm:$0xff]
          %v3710 = vld [vmem:[#allocation2 + $0x50] sm:$0xff]
          %v3711 = vld [vmem:[#allocation2 + $0x58] sm:$0xff]
          %v3712 = vld [vmem:[#allocation2 + $0x60] sm:$0xff]
          %v3713 = vld [vmem:[#allocation2 + $0x68] sm:$0xff]
          %v3714 = vld [vmem:[#allocation2 + $0x70] sm:$0xff]
          %v3715 = vld [vmem:[#allocation2 + $0x78] sm:$0xff]
          %v3716 = vpack.c.bf16 %v3701, %v3700
          %v3717 = vpack.c.bf16 %v3703, %v3702
          %v3718 = vpack.c.bf16 %v3705, %v3704
          %v3719 = vpack.c.bf16 %v3707, %v3706
          %v3720 = vpack.c.bf16 %v3709, %v3708
          %v3721 = vpack.c.bf16 %v3711, %v3710
          %v3722 = vpack.c.bf16 %v3713, %v3712
          %v3723 = vpack.c.bf16 %v3715, %v3714
          %v3732 = vunpack.c.l.b16 %v3716
          %v3733 = vunpack.c.h.b16 %v3716
          %v3734 = vunpack.c.l.b16 %v3717
          %v3735 = vunpack.c.h.b16 %v3717
          %v3736 = vunpack.c.l.b16 %v3718
          %v3737 = vunpack.c.h.b16 %v3718
          %v3738 = vunpack.c.l.b16 %v3719
          %v3739 = vunpack.c.h.b16 %v3719
          %v3740 = vunpack.c.l.b16 %v3720
          %v3741 = vunpack.c.h.b16 %v3720
          %v3742 = vunpack.c.l.b16 %v3721
          %v3743 = vunpack.c.h.b16 %v3721
          %v3744 = vunpack.c.l.b16 %v3722
          %v3745 = vunpack.c.h.b16 %v3722
          %v3746 = vunpack.c.l.b16 %v3723
          %v3747 = vunpack.c.h.b16 %v3723
          %v3748 = vpack.c.b16 %v3732, %v3732
          %v3749 = vpack.c.b16 %v3733, %v3733
          %v3750 = vpack.c.b16 %v3734, %v3734
          %v3751 = vpack.c.b16 %v3735, %v3735
          %v3752 = vpack.c.b16 %v3736, %v3736
          %v3753 = vpack.c.b16 %v3737, %v3737
          %v3754 = vpack.c.b16 %v3738, %v3738
          %v3755 = vpack.c.b16 %v3739, %v3739
          %v3756 = vpack.c.b16 %v3740, %v3740
          %v3757 = vpack.c.b16 %v3741, %v3741
          %v3758 = vpack.c.b16 %v3742, %v3742
          %v3759 = vpack.c.b16 %v3743, %v3743
          %v3760 = vpack.c.b16 %v3744, %v3744
          %v3761 = vpack.c.b16 %v3745, %v3745
          %v3762 = vpack.c.b16 %v3746, %v3746
          %v3763 = vpack.c.b16 %v3747, %v3747
          %3780 = vst [vmem:[#allocation6] sm:$0xf] %v3748
          %3781 = vst [vmem:[#allocation6 + $0x4] sm:$0xf] %v3749
          %3782 = vst [vmem:[#allocation6 + $0x8] sm:$0xf] %v3750
          %3783 = vst [vmem:[#allocation6 + $0xc] sm:$0xf] %v3751
          %3784 = vst [vmem:[#allocation6 + $0x10] sm:$0xf] %v3752
          %3785 = vst [vmem:[#allocation6 + $0x14] sm:$0xf] %v3753
          %3786 = vst [vmem:[#allocation6 + $0x18] sm:$0xf] %v3754
          %3787 = vst [vmem:[#allocation6 + $0x1c] sm:$0xf] %v3755
          %3788 = vst [vmem:[#allocation6 + $0x20] sm:$0xf] %v3756
          %3789 = vst [vmem:[#allocation6 + $0x24] sm:$0xf] %v3757
          %3790 = vst [vmem:[#allocation6 + $0x28] sm:$0xf] %v3758
          %3791 = vst [vmem:[#allocation6 + $0x2c] sm:$0xf] %v3759
          %3792 = vst [vmem:[#allocation6 + $0x30] sm:$0xf] %v3760
          %3793 = vst [vmem:[#allocation6 + $0x34] sm:$0xf] %v3761
          %3794 = vst [vmem:[#allocation6 + $0x38] sm:$0xf] %v3762
          %3795 = vst [vmem:[#allocation6 + $0x3c] sm:$0xf] %v3763
        $region68: #{tpu_custom_call.1} parent=27 // pred_fallthru
          _
        // Predicated region
        $region69: #{tpu_custom_call.1} parent=27 // pred_check
          %p3796 = pneg %p110
        $region70: #{tpu_custom_call.1} parent=27 // pred_check_branch
          %3798 = sbr.rel (%p3796) target = $region72
        $region71: #{tpu_custom_call.1} parent=27 // pred_region
          %s3799 = smul.u32 16, %s22
          %s3801 = ssub.s32 1024, 1024
          %3802 = vsyncadd [#allocation5], %s3801
          %s3803 = sadd.s32 %s23, %s3799
          %s3804 = smul.addr %s3803, 64
          %s3805 = scalar_lea.hbm %s2, %s3804
          %s3806 = sshll.u32 [#allocation6], 4
          %s3807 = int_to_ptr.vmem [resolvable:$true] %s3806
          %3812 = dma.vmem_to_hbm [thread:$0]  %s3807, 1024, %s3805, [#allocation5], 64, 64, 4
        $region72: #{tpu_custom_call.1} parent=27 // pred_fallthru
          _
        // Predicated region
        $region73: #{tpu_custom_call.1} parent=27 // pred_check
          %p3813 = pneg %p110
        $region74: #{tpu_custom_call.1} parent=27 // pred_check_branch
          %3815 = sbr.rel (%p3813) target = $region76
        $region75: #{tpu_custom_call.1} parent=27 // pred_region
          %3816 = dma.done [#allocation5], 1024
        $region76: #{tpu_custom_call.1} parent=27 // pred_fallthru
          _
      $region28: #{tpu_custom_call.1} parent=5 // pred_fallthru
        _
      %p3817 = scmp.le.s32.totalorder 2, %s12
      // Predicated region
      $region77: #{tpu_custom_call.1} parent=5 // pred_check
        %p3818 = pneg %p3817
      $region78: #{tpu_custom_call.1} parent=5 // pred_check_branch
        %3820 = sbr.rel (%p3818) target = $region80
      $region79: #{tpu_custom_call.1} parent=5 // pred_region
        %s3821 = ssub.s32 %s12, 2
      $region80: #{tpu_custom_call.1} parent=5 // pred_fallthru
        _
    $region6: #{tpu_custom_call.1} parent=1 // loop_footer
      %s16 = sadd.s32 1, %s12
    $region7: #{tpu_custom_call.1} parent=1 // loop_footer_branch
      %11 = sbr.rel target = $region3
    $region8: #{tpu_custom_call.1} parent=1 // loop_exit
      _
    %3822 = vsyncpa [#allocation4], 1
    %s3823 = scalar_lea.sflag [#allocation4], 1
    %3824 = vsyncpa %s3823, 1
    %3825 = vsyncpa [#allocation5], 1
    %s3826 = scalar_lea.sflag [#allocation5], 1
    %3827 = vsyncpa %s3826, 1

</llo_original>
